<compile_context>
chip_gen: v7x
topology: tpu7x:2x2x1
jax: 0.10.0
libtpu: 0.0.40
codegen_flags: <defaults>
</compile_context>

<pallas_src>
import jax
import jax.numpy as jnp
from jax.experimental import pallas as pl
from jax.experimental.pallas import tpu as pltpu


# ---------------------------------------------------------------------------
# Fused Pallas kernel (built per static shape configuration)
# ---------------------------------------------------------------------------
def _make_fused_kernel(Ho, Wo, Cinp, Coutp):
    S = Ho * Wo

    def kernel(x_ref, w1_ref, w2a_ref, w2b_ref, w2c_ref, w2d_ref,
               b2_ref, b13_ref, w3_ref, o_ref, ypad_ref):
        f32 = jnp.float32
        bf16 = jnp.bfloat16

        # ---- zero ONLY the 1-element halo border of the y scratch ----------
        # (interior is fully overwritten below; every step re-zeroes so this is
        #  safe under megacore grid sharding)
        zrow = jnp.zeros((1, Wo + 2, Coutp), f32)
        ypad_ref[0:1, :, :] = zrow
        ypad_ref[Ho + 1:Ho + 2, :, :] = zrow
        zcol = jnp.zeros((Ho, 1, Coutp), f32)
        ypad_ref[1:1 + Ho, 0:1, :] = zcol
        ypad_ref[1:1 + Ho, Wo + 1:Wo + 2, :] = zcol

        # ---- conv2: 3x3 stride-2 pad-1, taps grouped by spatial shift ------
        # shift (0,0): taps (0,0),(0,1),(1,0),(1,1) == phases 0..3, K=4*Cinp
        xa = x_ref[0, 0:Ho, 0:Wo, :].reshape(S, 4 * Cinp)
        acc2 = jnp.dot(xa, w2a_ref[...], preferred_element_type=f32)
        # shift (1,0): taps (2,0),(2,1) == phases 0..1, K=2*Cinp
        xb = x_ref[0, 1:1 + Ho, 0:Wo, 0:2 * Cinp].reshape(S, 2 * Cinp)
        acc2 = acc2 + jnp.dot(xb, w2b_ref[...], preferred_element_type=f32)
        # shift (0,1): taps (0,2),(1,2) == phases 0 and 2 (non-contiguous)
        xc0 = x_ref[0, 0:Ho, 1:1 + Wo, 0:Cinp].reshape(S, Cinp)
        acc2 = acc2 + jnp.dot(xc0, w2c_ref[0], preferred_element_type=f32)
        xc2 = x_ref[0, 0:Ho, 1:1 + Wo, 2 * Cinp:3 * Cinp].reshape(S, Cinp)
        acc2 = acc2 + jnp.dot(xc2, w2c_ref[1], preferred_element_type=f32)
        # shift (1,1): tap (2,2) == phase 0, K=Cinp
        xd = x_ref[0, 1:1 + Ho, 1:1 + Wo, 0:Cinp].reshape(S, Cinp)
        acc2 = acc2 + jnp.dot(xd, w2d_ref[...], preferred_element_type=f32)

        y = jnp.maximum(acc2 + b2_ref[...], 0.0)
        ypad_ref[1:1 + Ho, 1:1 + Wo, :] = y.reshape(Ho, Wo, Coutp)

        # ---- shortcut folded into the conv3 accumulator init ---------------
        # conv1 (1x1 stride-2) == phase 3 at shift (0,0); b13 = b1 + b3.
        x11 = x_ref[0, 0:Ho, 0:Wo, 3 * Cinp:4 * Cinp].reshape(S, Cinp)
        acc3 = jnp.dot(x11, w1_ref[...], preferred_element_type=f32) + b13_ref[...]

        # ---- conv3: 3x3 stride-1 pad-1 as 9 shifted bf16 matmuls -----------
        for ki in range(3):
            for kj in range(3):
                patch = ypad_ref[ki:ki + Ho, kj:kj + Wo, :]
                patch = patch.reshape(S, Coutp).astype(bf16)
                acc3 = acc3 + jnp.dot(patch, w3_ref[ki * 3 + kj],
                                      preferred_element_type=f32)

        # ---- final ReLU, lane-dense bf16 store ------------------------------
        o_ref[0] = jnp.maximum(acc3, 0.0).astype(o_ref.dtype)

    return kernel


def _round_up(x, m):
    return ((x + m - 1) // m) * m


# ---------------------------------------------------------------------------
# Forward pass (NCHW in / NCHW out, like the PyTorch module; bf16 output)
# ---------------------------------------------------------------------------
def basic_block2_forward(x_nchw, params):
    w1, b1 = params["w1"], params["b1"]
    w2, b2 = params["w2"], params["b2"]
    w3, b3 = params["w3"], params["b3"]
    Cout, Cin = w1.shape[0], w1.shape[1]

    # NHWC bf16 activations (f32 accumulation happens on the MXU in-kernel).
    x = jnp.transpose(x_nchw, (0, 2, 3, 1)).astype(jnp.bfloat16)
    N, H, W, _ = x.shape
    Ho = (H - 1) // 2 + 1
    Wo = (W - 1) // 2 + 1
    S = Ho * Wo

    LANE = 128
    Cinp = _round_up(Cin, LANE)
    Coutp = _round_up(Cout, LANE)
    # NOTE: for tiny channel counts most padded lanes are zeros; this kernel
    # targets ResNet-scale widths (>=64 channels).

    # ---- layout glue (bf16): pad-1, channel pad, space-to-depth ------------
    Hh, Wh = Ho + 1, Wo + 1
    xp = jnp.zeros((N, 2 * Hh, 2 * Wh, Cinp), jnp.bfloat16)
    xp = xp.at[:, 1:1 + H, 1:1 + W, :Cin].set(x)
    xq = xp.reshape(N, Hh, 2, Wh, 2, Cinp).transpose(0, 1, 3, 2, 4, 5)
    xq = xq.reshape(N, Hh, Wh, 4 * Cinp)

    # ---- weights as per-tap [K, Coutp] matmul operands, grouped by shift ---
    # (zero-filled pad rows/cols keep padded output channels exactly zero)
    def taps(w, Kp):
        co, ci, kh, kw = w.shape
        wt = jnp.transpose(w, (2, 3, 1, 0)).reshape(kh * kw, ci, co)
        out = jnp.zeros((kh * kw, Kp, Coutp), jnp.float32)
        return out.at[:, :ci, :co].set(wt.astype(jnp.float32))

    bf16 = jnp.bfloat16
    w1m = taps(w1, Cinp)[0].astype(bf16)                       # (Cinp, Coutp)
    t2 = taps(w2, Cinp)                                        # (9, Cinp, Coutp)
    # group order == phase order (p = 2a+b) inside each shared-shift group
    w2a = jnp.concatenate([t2[0], t2[1], t2[3], t2[4]], 0).astype(bf16)  # (4C, Co)
    w2b = jnp.concatenate([t2[6], t2[7]], 0).astype(bf16)                # (2C, Co)
    w2c = jnp.stack([t2[2], t2[5]], 0).astype(bf16)                      # (2, C, Co)
    w2d = t2[8].astype(bf16)                                             # (C, Co)
    w3m = taps(w3, Coutp).astype(bf16)                                   # (9, Co, Co)

    def pad_bias(b):
        return jnp.zeros((1, Coutp), jnp.float32).at[0, :Cout].set(b)

    b2m = pad_bias(b2)
    b13m = pad_bias(b1 + b3)          # conv1 + conv3 biases folded together

    kernel = _make_fused_kernel(Ho, Wo, Cinp, Coutp)
    c2 = lambda n: (0, 0)
    c3 = lambda n: (0, 0, 0)

    out = pl.pallas_call(
        kernel,
        out_shape=jax.ShapeDtypeStruct((N, S, Coutp), jnp.bfloat16),
        grid=(N,),
        in_specs=[
            pl.BlockSpec((1, Hh, Wh, 4 * Cinp), lambda n: (n, 0, 0, 0)),
            pl.BlockSpec((Cinp, Coutp), c2),          # w1
            pl.BlockSpec((4 * Cinp, Coutp), c2),      # w2 group (0,0)
            pl.BlockSpec((2 * Cinp, Coutp), c2),      # w2 group (1,0)
            pl.BlockSpec((2, Cinp, Coutp), c3),       # w2 group (0,1)
            pl.BlockSpec((Cinp, Coutp), c2),          # w2 group (1,1)
            pl.BlockSpec((1, Coutp), c2),             # b2
            pl.BlockSpec((1, Coutp), c2),             # b1 + b3
            pl.BlockSpec((9, Coutp, Coutp), c3),      # w3 taps
        ],
        out_specs=pl.BlockSpec((1, S, Coutp), lambda n: (n, 0, 0)),
        scratch_shapes=[pltpu.VMEM((Ho + 2, Wo + 2, Coutp), jnp.float32)],
        compiler_params=pltpu.CompilerParams(
            dimension_semantics=("parallel",),
            vmem_limit_bytes=32 * 1024 * 1024),
    )(xq, w1m, w2a, w2b, w2c, w2d, b2m, b13m, w3m)

    # TODO(synk): skip this transpose if the consumer accepts NHWC/bf16.
    out = out.reshape(N, Ho, Wo, Coutp)[:, :, :, :Cout]
    return jnp.transpose(out, (0, 3, 1, 2))           # NCHW, bf16


# ---------------------------------------------------------------------------
# Deterministic parameter init (PyTorch-like uniform, synthetic weights)
# ---------------------------------------------------------------------------
def init_params(key, in_channels, out_channels):
    ks = jax.random.split(key, 6)

    def u(k, shape, fan_in):
        bound = 1.0 / jnp.sqrt(float(fan_in))
        return jax.random.uniform(k, shape, jnp.float32, -bound, bound)

    return {
        "w1": u(ks[0], (out_channels, in_channels, 1, 1), in_channels * 1),
        "b1": u(ks[1], (out_channels,), in_channels * 1),
        "w2": u(ks[2], (out_channels, in_channels, 3, 3), in_channels * 9),
        "b2": u(ks[3], (out_channels,), in_channels * 9),
        "w3": u(ks[4], (out_channels, out_channels, 3, 3), out_channels * 9),
        "b3": u(ks[5], (out_channels,), out_channels * 9),
    }


# ---------------------------------------------------------------------------
# Pure-JAX f32 reference (sanity check; kernel is intentionally bf16)
# ---------------------------------------------------------------------------
def reference_forward(x_nchw, p):
    dn = ("NCHW", "OIHW", "NCHW")

    def conv(x, w, b, stride, pad):
        y = jax.lax.conv_general_dilated(
            x, w, window_strides=(stride, stride),
            padding=((pad, pad), (pad, pad)), dimension_numbers=dn,
            precision=jax.lax.Precision.HIGHEST)
        return y + b[None, :, None, None]

    z = conv(x_nchw, p["w1"], p["b1"], 2, 0)
    y = jax.nn.relu(conv(x_nchw, p["w2"], p["b2"], 2, 1))
    y = conv(y, p["w3"], p["b3"], 1, 1)
    return jax.nn.relu(y + z)


if __name__ == "__main__":
    key = jax.random.PRNGKey(0)
    kx, kp = jax.random.split(key)

    N, Cin, H, W = 2, 4, 16, 16
    Cout = 8

    x = jax.random.normal(kx, (N, Cin, H, W), jnp.float32)
    params = init_params(kp, Cin, Cout)

    fwd = jax.jit(basic_block2_forward)
    out = jax.block_until_ready(fwd(x, params))

    assert out.shape == (N, Cout, H // 2, W // 2), out.shape

    ref = reference_forward(x, params)
    out_f32 = out.astype(jnp.float32)
    # bf16 activations/weights/output are intentional; tolerance reflects that.
    assert bool(jnp.allclose(out_f32, ref, atol=5e-2, rtol=5e-2)), (
        f"max abs err {float(jnp.max(jnp.abs(out_f32 - ref)))}")

    print("KERNEL_OK")
</pallas_src>

<mosaic_0001>
module attributes {stable_mosaic.version = 11 : i64} {
  func.func @kernel(%arg0: i32, %arg1: memref<1x9x9x512xbf16, #tpu.memory_space<vmem>>, %arg2: memref<128x128xbf16, #tpu.memory_space<vmem>>, %arg3: memref<512x128xbf16, #tpu.memory_space<vmem>>, %arg4: memref<256x128xbf16, #tpu.memory_space<vmem>>, %arg5: memref<2x128x128xbf16, #tpu.memory_space<vmem>>, %arg6: memref<128x128xbf16, #tpu.memory_space<vmem>>, %arg7: memref<1x128xf32, #tpu.memory_space<vmem>>, %arg8: memref<1x128xf32, #tpu.memory_space<vmem>>, %arg9: memref<9x128x128xbf16, #tpu.memory_space<vmem>>, %arg10: memref<1x64x128xbf16, #tpu.memory_space<vmem>>, %arg11: memref<10x10x128xf32, #tpu.memory_space<vmem>>) attributes {dimension_semantics = [#tpu.dimension_semantics<parallel>], iteration_bounds = array<i64: 2>, scalar_prefetch = 0 : i64, scratch_operands = 1 : i64, tpu.core_type = #tpu.core_type<tc>, window_params = [{transform_indices = @transform_0, window_bounds = array<i64: 1, 9, 9, 512>}, {pipeline_mode = #tpu.pipeline_mode<synchronous>, transform_indices = @transform_1, window_bounds = array<i64: 128, 128>}, {pipeline_mode = #tpu.pipeline_mode<synchronous>, transform_indices = @transform_2, window_bounds = array<i64: 512, 128>}, {pipeline_mode = #tpu.pipeline_mode<synchronous>, transform_indices = @transform_3, window_bounds = array<i64: 256, 128>}, {pipeline_mode = #tpu.pipeline_mode<synchronous>, transform_indices = @transform_4, window_bounds = array<i64: 2, 128, 128>}, {pipeline_mode = #tpu.pipeline_mode<synchronous>, transform_indices = @transform_5, window_bounds = array<i64: 128, 128>}, {pipeline_mode = #tpu.pipeline_mode<synchronous>, transform_indices = @transform_6, window_bounds = array<i64: 1, 128>}, {pipeline_mode = #tpu.pipeline_mode<synchronous>, transform_indices = @transform_7, window_bounds = array<i64: 1, 128>}, {pipeline_mode = #tpu.pipeline_mode<synchronous>, transform_indices = @transform_8, window_bounds = array<i64: 9, 128, 128>}, {transform_indices = @transform_9, window_bounds = array<i64: 1, 64, 128>}]} {
    %cst = arith.constant 0.000000e+00 : f32
    %0 = vector.broadcast %cst : f32 to vector<1x10x128xf32>
    %c0 = arith.constant 0 : index
    %c0_0 = arith.constant 0 : index
    %c0_1 = arith.constant 0 : index
    %1 = vector.load %arg11[%c0, %c0_0, %c0_1] : memref<10x10x128xf32, #tpu.memory_space<vmem>>, vector<1x10x128xf32>
    tpu.vector_store %arg11[%c0, %c0_0, %c0_1], %0 {strides = array<i32>} : memref<10x10x128xf32, #tpu.memory_space<vmem>>, vector<1x10x128xf32>,
    %c9 = arith.constant 9 : index
    %c0_2 = arith.constant 0 : index
    %c0_3 = arith.constant 0 : index
    %2 = vector.load %arg11[%c9, %c0_2, %c0_3] : memref<10x10x128xf32, #tpu.memory_space<vmem>>, vector<1x10x128xf32>
    tpu.vector_store %arg11[%c9, %c0_2, %c0_3], %0 {strides = array<i32>} : memref<10x10x128xf32, #tpu.memory_space<vmem>>, vector<1x10x128xf32>,
    %cst_4 = arith.constant 0.000000e+00 : f32
    %3 = vector.broadcast %cst_4 : f32 to vector<8x1x128xf32>
    %c1 = arith.constant 1 : index
    %c0_5 = arith.constant 0 : index
    %c0_6 = arith.constant 0 : index
    %4 = vector.load %arg11[%c1, %c0_5, %c0_6] : memref<10x10x128xf32, #tpu.memory_space<vmem>>, vector<8x1x128xf32>
    tpu.vector_store %arg11[%c1, %c0_5, %c0_6], %3 {strides = array<i32>} : memref<10x10x128xf32, #tpu.memory_space<vmem>>, vector<8x1x128xf32>,
    %c1_7 = arith.constant 1 : index
    %c9_8 = arith.constant 9 : index
    %c0_9 = arith.constant 0 : index
    %5 = vector.load %arg11[%c1_7, %c9_8, %c0_9] : memref<10x10x128xf32, #tpu.memory_space<vmem>>, vector<8x1x128xf32>
    tpu.vector_store %arg11[%c1_7, %c9_8, %c0_9], %3 {strides = array<i32>} : memref<10x10x128xf32, #tpu.memory_space<vmem>>, vector<8x1x128xf32>,
    %c0_10 = arith.constant 0 : index
    %c0_11 = arith.constant 0 : index
    %c0_12 = arith.constant 0 : index
    %c0_13 = arith.constant 0 : index
    %6 = vector.load %arg1[%c0_10, %c0_11, %c0_12, %c0_13] : memref<1x9x9x512xbf16, #tpu.memory_space<vmem>>, vector<1x8x8x512xbf16>
    %7 = vector.shape_cast %6 : vector<1x8x8x512xbf16> to vector<8x8x512xbf16>
    %8 = vector.shape_cast %7 : vector<8x8x512xbf16> to vector<64x512xbf16>
    %c0_14 = arith.constant 0 : index
    %c0_15 = arith.constant 0 : index
    %9 = vector.load %arg3[%c0_14, %c0_15] : memref<512x128xbf16, #tpu.memory_space<vmem>>, vector<512x128xbf16>
    %cst_16 = arith.constant dense<0.000000e+00> : vector<64x128xf32>
    %10 = tpu.matmul %8, %9, %cst_16 {dimension_numbers = #tpu.dot_dimension_numbers<[1], [0], [0], [1], [0, 0, 1, 1], [], []>} : vector<64x512xbf16>, vector<512x128xbf16>, vector<64x128xf32> -> vector<64x128xf32>
    %c0_17 = arith.constant 0 : index
    %c1_18 = arith.constant 1 : index
    %c0_19 = arith.constant 0 : index
    %c0_20 = arith.constant 0 : index
    %11 = vector.load %arg1[%c0_17, %c1_18, %c0_19, %c0_20] : memref<1x9x9x512xbf16, #tpu.memory_space<vmem>>, vector<1x8x8x256xbf16>
    %12 = vector.shape_cast %11 : vector<1x8x8x256xbf16> to vector<8x8x256xbf16>
    %13 = vector.shape_cast %12 : vector<8x8x256xbf16> to vector<64x256xbf16>
    %c0_21 = arith.constant 0 : index
    %c0_22 = arith.constant 0 : index
    %14 = vector.load %arg4[%c0_21, %c0_22] : memref<256x128xbf16, #tpu.memory_space<vmem>>, vector<256x128xbf16>
    %cst_23 = arith.constant dense<0.000000e+00> : vector<64x128xf32>
    %15 = tpu.matmul %13, %14, %cst_23 {dimension_numbers = #tpu.dot_dimension_numbers<[1], [0], [0], [1], [0, 0, 1, 1], [], []>} : vector<64x256xbf16>, vector<256x128xbf16>, vector<64x128xf32> -> vector<64x128xf32>
    %16 = arith.addf %10, %15 : vector<64x128xf32>
    %c0_24 = arith.constant 0 : index
    %c0_25 = arith.constant 0 : index
    %c1_26 = arith.constant 1 : index
    %c0_27 = arith.constant 0 : index
    %17 = vector.load %arg1[%c0_24, %c0_25, %c1_26, %c0_27] : memref<1x9x9x512xbf16, #tpu.memory_space<vmem>>, vector<1x8x8x128xbf16>
    %18 = vector.shape_cast %17 : vector<1x8x8x128xbf16> to vector<8x8x128xbf16>
    %19 = vector.shape_cast %18 : vector<8x8x128xbf16> to vector<64x128xbf16>
    %c0_28 = arith.constant 0 : index
    %c0_29 = arith.constant 0 : index
    %c0_30 = arith.constant 0 : index
    %20 = vector.load %arg5[%c0_28, %c0_29, %c0_30] : memref<2x128x128xbf16, #tpu.memory_space<vmem>>, vector<1x128x128xbf16>
    %21 = vector.shape_cast %20 : vector<1x128x128xbf16> to vector<128x128xbf16>
    %cst_31 = arith.constant dense<0.000000e+00> : vector<64x128xf32>
    %22 = tpu.matmul %19, %21, %cst_31 {dimension_numbers = #tpu.dot_dimension_numbers<[1], [0], [0], [1], [0, 0, 1, 1], [], []>} : vector<64x128xbf16>, vector<128x128xbf16>, vector<64x128xf32> -> vector<64x128xf32>
    %23 = arith.addf %16, %22 : vector<64x128xf32>
    %c0_32 = arith.constant 0 : index
    %c0_33 = arith.constant 0 : index
    %c1_34 = arith.constant 1 : index
    %c256 = arith.constant 256 : index
    %24 = vector.load %arg1[%c0_32, %c0_33, %c1_34, %c256] : memref<1x9x9x512xbf16, #tpu.memory_space<vmem>>, vector<1x8x8x128xbf16>
    %25 = vector.shape_cast %24 : vector<1x8x8x128xbf16> to vector<8x8x128xbf16>
    %26 = vector.shape_cast %25 : vector<8x8x128xbf16> to vector<64x128xbf16>
    %c1_35 = arith.constant 1 : index
    %c0_36 = arith.constant 0 : index
    %c0_37 = arith.constant 0 : index
    %27 = vector.load %arg5[%c1_35, %c0_36, %c0_37] : memref<2x128x128xbf16, #tpu.memory_space<vmem>>, vector<1x128x128xbf16>
    %28 = vector.shape_cast %27 : vector<1x128x128xbf16> to vector<128x128xbf16>
    %cst_38 = arith.constant dense<0.000000e+00> : vector<64x128xf32>
    %29 = tpu.matmul %26, %28, %cst_38 {dimension_numbers = #tpu.dot_dimension_numbers<[1], [0], [0], [1], [0, 0, 1, 1], [], []>} : vector<64x128xbf16>, vector<128x128xbf16>, vector<64x128xf32> -> vector<64x128xf32>
    %30 = arith.addf %23, %29 : vector<64x128xf32>
    %c0_39 = arith.constant 0 : index
    %c1_40 = arith.constant 1 : index
    %c1_41 = arith.constant 1 : index
    %c0_42 = arith.constant 0 : index
    %31 = vector.load %arg1[%c0_39, %c1_40, %c1_41, %c0_42] : memref<1x9x9x512xbf16, #tpu.memory_space<vmem>>, vector<1x8x8x128xbf16>
    %32 = vector.shape_cast %31 : vector<1x8x8x128xbf16> to vector<8x8x128xbf16>
    %33 = vector.shape_cast %32 : vector<8x8x128xbf16> to vector<64x128xbf16>
    %c0_43 = arith.constant 0 : index
    %c0_44 = arith.constant 0 : index
    %34 = vector.load %arg6[%c0_43, %c0_44] : memref<128x128xbf16, #tpu.memory_space<vmem>>, vector<128x128xbf16>
    %cst_45 = arith.constant dense<0.000000e+00> : vector<64x128xf32>
    %35 = tpu.matmul %33, %34, %cst_45 {dimension_numbers = #tpu.dot_dimension_numbers<[1], [0], [0], [1], [0, 0, 1, 1], [], []>} : vector<64x128xbf16>, vector<128x128xbf16>, vector<64x128xf32> -> vector<64x128xf32>
    %36 = arith.addf %30, %35 : vector<64x128xf32>
    %c0_46 = arith.constant 0 : index
    %c0_47 = arith.constant 0 : index
    %37 = vector.load %arg7[%c0_46, %c0_47] : memref<1x128xf32, #tpu.memory_space<vmem>>, vector<1x128xf32>
    %38 = vector.broadcast %37 : vector<1x128xf32> to vector<64x128xf32>
    %39 = arith.addf %36, %38 : vector<64x128xf32>
    %cst_48 = arith.constant 0.000000e+00 : f32
    %40 = vector.broadcast %cst_48 : f32 to vector<64x128xf32>
    %41 = arith.maximumf %39, %40 : vector<64x128xf32>
    %42 = vector.shape_cast %41 : vector<64x128xf32> to vector<8x8x128xf32>
    %c1_49 = arith.constant 1 : index
    %c1_50 = arith.constant 1 : index
    %c0_51 = arith.constant 0 : index
    %43 = vector.load %arg11[%c1_49, %c1_50, %c0_51] : memref<10x10x128xf32, #tpu.memory_space<vmem>>, vector<8x8x128xf32>
    tpu.vector_store %arg11[%c1_49, %c1_50, %c0_51], %42 {strides = array<i32>} : memref<10x10x128xf32, #tpu.memory_space<vmem>>, vector<8x8x128xf32>,
    %c0_52 = arith.constant 0 : index
    %c0_53 = arith.constant 0 : index
    %c0_54 = arith.constant 0 : index
    %c384 = arith.constant 384 : index
    %44 = vector.load %arg1[%c0_52, %c0_53, %c0_54, %c384] : memref<1x9x9x512xbf16, #tpu.memory_space<vmem>>, vector<1x8x8x128xbf16>
    %45 = vector.shape_cast %44 : vector<1x8x8x128xbf16> to vector<8x8x128xbf16>
    %46 = vector.shape_cast %45 : vector<8x8x128xbf16> to vector<64x128xbf16>
    %c0_55 = arith.constant 0 : index
    %c0_56 = arith.constant 0 : index
    %47 = vector.load %arg2[%c0_55, %c0_56] : memref<128x128xbf16, #tpu.memory_space<vmem>>, vector<128x128xbf16>
    %cst_57 = arith.constant dense<0.000000e+00> : vector<64x128xf32>
    %48 = tpu.matmul %46, %47, %cst_57 {dimension_numbers = #tpu.dot_dimension_numbers<[1], [0], [0], [1], [0, 0, 1, 1], [], []>} : vector<64x128xbf16>, vector<128x128xbf16>, vector<64x128xf32> -> vector<64x128xf32>
    %c0_58 = arith.constant 0 : index
    %c0_59 = arith.constant 0 : index
    %49 = vector.load %arg8[%c0_58, %c0_59] : memref<1x128xf32, #tpu.memory_space<vmem>>, vector<1x128xf32>
    %50 = vector.broadcast %49 : vector<1x128xf32> to vector<64x128xf32>
    %51 = arith.addf %48, %50 : vector<64x128xf32>
    %c0_60 = arith.constant 0 : index
    %c0_61 = arith.constant 0 : index
    %c0_62 = arith.constant 0 : index
    %52 = vector.load %arg11[%c0_60, %c0_61, %c0_62] : memref<10x10x128xf32, #tpu.memory_space<vmem>>, vector<8x8x128xf32>
    %53 = vector.shape_cast %52 : vector<8x8x128xf32> to vector<64x128xf32>
    %54 = arith.truncf %53 : vector<64x128xf32> to vector<64x128xbf16>
    %c0_63 = arith.constant 0 : index
    %c0_64 = arith.constant 0 : index
    %c0_65 = arith.constant 0 : index
    %55 = vector.load %arg9[%c0_63, %c0_64, %c0_65] : memref<9x128x128xbf16, #tpu.memory_space<vmem>>, vector<1x128x128xbf16>
    %56 = vector.shape_cast %55 : vector<1x128x128xbf16> to vector<128x128xbf16>
    %cst_66 = arith.constant dense<0.000000e+00> : vector<64x128xf32>
    %57 = tpu.matmul %54, %56, %cst_66 {dimension_numbers = #tpu.dot_dimension_numbers<[1], [0], [0], [1], [0, 0, 1, 1], [], []>} : vector<64x128xbf16>, vector<128x128xbf16>, vector<64x128xf32> -> vector<64x128xf32>
    %58 = arith.addf %51, %57 : vector<64x128xf32>
    %c0_67 = arith.constant 0 : index
    %c1_68 = arith.constant 1 : index
    %c0_69 = arith.constant 0 : index
    %59 = vector.load %arg11[%c0_67, %c1_68, %c0_69] : memref<10x10x128xf32, #tpu.memory_space<vmem>>, vector<8x8x128xf32>
    %60 = vector.shape_cast %59 : vector<8x8x128xf32> to vector<64x128xf32>
    %61 = arith.truncf %60 : vector<64x128xf32> to vector<64x128xbf16>
    %c1_70 = arith.constant 1 : index
    %c0_71 = arith.constant 0 : index
    %c0_72 = arith.constant 0 : index
    %62 = vector.load %arg9[%c1_70, %c0_71, %c0_72] : memref<9x128x128xbf16, #tpu.memory_space<vmem>>, vector<1x128x128xbf16>
    %63 = vector.shape_cast %62 : vector<1x128x128xbf16> to vector<128x128xbf16>
    %cst_73 = arith.constant dense<0.000000e+00> : vector<64x128xf32>
    %64 = tpu.matmul %61, %63, %cst_73 {dimension_numbers = #tpu.dot_dimension_numbers<[1], [0], [0], [1], [0, 0, 1, 1], [], []>} : vector<64x128xbf16>, vector<128x128xbf16>, vector<64x128xf32> -> vector<64x128xf32>
    %65 = arith.addf %58, %64 : vector<64x128xf32>
    %c0_74 = arith.constant 0 : index
    %c2 = arith.constant 2 : index
    %c0_75 = arith.constant 0 : index
    %66 = vector.load %arg11[%c0_74, %c2, %c0_75] : memref<10x10x128xf32, #tpu.memory_space<vmem>>, vector<8x8x128xf32>
    %67 = vector.shape_cast %66 : vector<8x8x128xf32> to vector<64x128xf32>
    %68 = arith.truncf %67 : vector<64x128xf32> to vector<64x128xbf16>
    %c2_76 = arith.constant 2 : index
    %c0_77 = arith.constant 0 : index
    %c0_78 = arith.constant 0 : index
    %69 = vector.load %arg9[%c2_76, %c0_77, %c0_78] : memref<9x128x128xbf16, #tpu.memory_space<vmem>>, vector<1x128x128xbf16>
    %70 = vector.shape_cast %69 : vector<1x128x128xbf16> to vector<128x128xbf16>
    %cst_79 = arith.constant dense<0.000000e+00> : vector<64x128xf32>
    %71 = tpu.matmul %68, %70, %cst_79 {dimension_numbers = #tpu.dot_dimension_numbers<[1], [0], [0], [1], [0, 0, 1, 1], [], []>} : vector<64x128xbf16>, vector<128x128xbf16>, vector<64x128xf32> -> vector<64x128xf32>
    %72 = arith.addf %65, %71 : vector<64x128xf32>
    %c1_80 = arith.constant 1 : index
    %c0_81 = arith.constant 0 : index
    %c0_82 = arith.constant 0 : index
    %73 = vector.load %arg11[%c1_80, %c0_81, %c0_82] : memref<10x10x128xf32, #tpu.memory_space<vmem>>, vector<8x8x128xf32>
    %74 = vector.shape_cast %73 : vector<8x8x128xf32> to vector<64x128xf32>
    %75 = arith.truncf %74 : vector<64x128xf32> to vector<64x128xbf16>
    %c3 = arith.constant 3 : index
    %c0_83 = arith.constant 0 : index
    %c0_84 = arith.constant 0 : index
    %76 = vector.load %arg9[%c3, %c0_83, %c0_84] : memref<9x128x128xbf16, #tpu.memory_space<vmem>>, vector<1x128x128xbf16>
    %77 = vector.shape_cast %76 : vector<1x128x128xbf16> to vector<128x128xbf16>
    %cst_85 = arith.constant dense<0.000000e+00> : vector<64x128xf32>
    %78 = tpu.matmul %75, %77, %cst_85 {dimension_numbers = #tpu.dot_dimension_numbers<[1], [0], [0], [1], [0, 0, 1, 1], [], []>} : vector<64x128xbf16>, vector<128x128xbf16>, vector<64x128xf32> -> vector<64x128xf32>
    %79 = arith.addf %72, %78 : vector<64x128xf32>
    %c1_86 = arith.constant 1 : index
    %c1_87 = arith.constant 1 : index
    %c0_88 = arith.constant 0 : index
    %80 = vector.load %arg11[%c1_86, %c1_87, %c0_88] : memref<10x10x128xf32, #tpu.memory_space<vmem>>, vector<8x8x128xf32>
    %81 = vector.shape_cast %80 : vector<8x8x128xf32> to vector<64x128xf32>
    %82 = arith.truncf %81 : vector<64x128xf32> to vector<64x128xbf16>
    %c4 = arith.constant 4 : index
    %c0_89 = arith.constant 0 : index
    %c0_90 = arith.constant 0 : index
    %83 = vector.load %arg9[%c4, %c0_89, %c0_90] : memref<9x128x128xbf16, #tpu.memory_space<vmem>>, vector<1x128x128xbf16>
    %84 = vector.shape_cast %83 : vector<1x128x128xbf16> to vector<128x128xbf16>
    %cst_91 = arith.constant dense<0.000000e+00> : vector<64x128xf32>
    %85 = tpu.matmul %82, %84, %cst_91 {dimension_numbers = #tpu.dot_dimension_numbers<[1], [0], [0], [1], [0, 0, 1, 1], [], []>} : vector<64x128xbf16>, vector<128x128xbf16>, vector<64x128xf32> -> vector<64x128xf32>
    %86 = arith.addf %79, %85 : vector<64x128xf32>
    %c1_92 = arith.constant 1 : index
    %c2_93 = arith.constant 2 : index
    %c0_94 = arith.constant 0 : index
    %87 = vector.load %arg11[%c1_92, %c2_93, %c0_94] : memref<10x10x128xf32, #tpu.memory_space<vmem>>, vector<8x8x128xf32>
    %88 = vector.shape_cast %87 : vector<8x8x128xf32> to vector<64x128xf32>
    %89 = arith.truncf %88 : vector<64x128xf32> to vector<64x128xbf16>
    %c5 = arith.constant 5 : index
    %c0_95 = arith.constant 0 : index
    %c0_96 = arith.constant 0 : index
    %90 = vector.load %arg9[%c5, %c0_95, %c0_96] : memref<9x128x128xbf16, #tpu.memory_space<vmem>>, vector<1x128x128xbf16>
    %91 = vector.shape_cast %90 : vector<1x128x128xbf16> to vector<128x128xbf16>
    %cst_97 = arith.constant dense<0.000000e+00> : vector<64x128xf32>
    %92 = tpu.matmul %89, %91, %cst_97 {dimension_numbers = #tpu.dot_dimension_numbers<[1], [0], [0], [1], [0, 0, 1, 1], [], []>} : vector<64x128xbf16>, vector<128x128xbf16>, vector<64x128xf32> -> vector<64x128xf32>
    %93 = arith.addf %86, %92 : vector<64x128xf32>
    %c2_98 = arith.constant 2 : index
    %c0_99 = arith.constant 0 : index
    %c0_100 = arith.constant 0 : index
    %94 = vector.load %arg11[%c2_98, %c0_99, %c0_100] : memref<10x10x128xf32, #tpu.memory_space<vmem>>, vector<8x8x128xf32>
    %95 = vector.shape_cast %94 : vector<8x8x128xf32> to vector<64x128xf32>
    %96 = arith.truncf %95 : vector<64x128xf32> to vector<64x128xbf16>
    %c6 = arith.constant 6 : index
    %c0_101 = arith.constant 0 : index
    %c0_102 = arith.constant 0 : index
    %97 = vector.load %arg9[%c6, %c0_101, %c0_102] : memref<9x128x128xbf16, #tpu.memory_space<vmem>>, vector<1x128x128xbf16>
    %98 = vector.shape_cast %97 : vector<1x128x128xbf16> to vector<128x128xbf16>
    %cst_103 = arith.constant dense<0.000000e+00> : vector<64x128xf32>
    %99 = tpu.matmul %96, %98, %cst_103 {dimension_numbers = #tpu.dot_dimension_numbers<[1], [0], [0], [1], [0, 0, 1, 1], [], []>} : vector<64x128xbf16>, vector<128x128xbf16>, vector<64x128xf32> -> vector<64x128xf32>
    %100 = arith.addf %93, %99 : vector<64x128xf32>
    %c2_104 = arith.constant 2 : index
    %c1_105 = arith.constant 1 : index
    %c0_106 = arith.constant 0 : index
    %101 = vector.load %arg11[%c2_104, %c1_105, %c0_106] : memref<10x10x128xf32, #tpu.memory_space<vmem>>, vector<8x8x128xf32>
    %102 = vector.shape_cast %101 : vector<8x8x128xf32> to vector<64x128xf32>
    %103 = arith.truncf %102 : vector<64x128xf32> to vector<64x128xbf16>
    %c7 = arith.constant 7 : index
    %c0_107 = arith.constant 0 : index
    %c0_108 = arith.constant 0 : index
    %104 = vector.load %arg9[%c7, %c0_107, %c0_108] : memref<9x128x128xbf16, #tpu.memory_space<vmem>>, vector<1x128x128xbf16>
    %105 = vector.shape_cast %104 : vector<1x128x128xbf16> to vector<128x128xbf16>
    %cst_109 = arith.constant dense<0.000000e+00> : vector<64x128xf32>
    %106 = tpu.matmul %103, %105, %cst_109 {dimension_numbers = #tpu.dot_dimension_numbers<[1], [0], [0], [1], [0, 0, 1, 1], [], []>} : vector<64x128xbf16>, vector<128x128xbf16>, vector<64x128xf32> -> vector<64x128xf32>
    %107 = arith.addf %100, %106 : vector<64x128xf32>
    %c2_110 = arith.constant 2 : index
    %c2_111 = arith.constant 2 : index
    %c0_112 = arith.constant 0 : index
    %108 = vector.load %arg11[%c2_110, %c2_111, %c0_112] : memref<10x10x128xf32, #tpu.memory_space<vmem>>, vector<8x8x128xf32>
    %109 = vector.shape_cast %108 : vector<8x8x128xf32> to vector<64x128xf32>
    %110 = arith.truncf %109 : vector<64x128xf32> to vector<64x128xbf16>
    %c8 = arith.constant 8 : index
    %c0_113 = arith.constant 0 : index
    %c0_114 = arith.constant 0 : index
    %111 = vector.load %arg9[%c8, %c0_113, %c0_114] : memref<9x128x128xbf16, #tpu.memory_space<vmem>>, vector<1x128x128xbf16>
    %112 = vector.shape_cast %111 : vector<1x128x128xbf16> to vector<128x128xbf16>
    %cst_115 = arith.constant dense<0.000000e+00> : vector<64x128xf32>
    %113 = tpu.matmul %110, %112, %cst_115 {dimension_numbers = #tpu.dot_dimension_numbers<[1], [0], [0], [1], [0, 0, 1, 1], [], []>} : vector<64x128xbf16>, vector<128x128xbf16>, vector<64x128xf32> -> vector<64x128xf32>
    %114 = arith.addf %107, %113 : vector<64x128xf32>
    %cst_116 = arith.constant 0.000000e+00 : f32
    %115 = vector.broadcast %cst_116 : f32 to vector<64x128xf32>
    %116 = arith.maximumf %114, %115 : vector<64x128xf32>
    %117 = arith.truncf %116 : vector<64x128xf32> to vector<64x128xbf16>
    %c0_117 = arith.constant 0 : index
    %c0_118 = arith.constant 0 : index
    %c0_119 = arith.constant 0 : index
    %118 = vector.load %arg10[%c0_117, %c0_118, %c0_119] : memref<1x64x128xbf16, #tpu.memory_space<vmem>>, vector<1x64x128xbf16>
    %119 = vector.shape_cast %118 : vector<1x64x128xbf16> to vector<64x128xbf16>
    %120 = vector.shape_cast %117 : vector<64x128xbf16> to vector<1x64x128xbf16>
    tpu.vector_store %arg10[%c0_117, %c0_118, %c0_119], %120 {strides = array<i32>} : memref<1x64x128xbf16, #tpu.memory_space<vmem>>, vector<1x64x128xbf16>,
    return
  }
  func.func @transform_0(%arg0: i32) -> (i32, i32, i32, i32) {
    %c0_i32 = arith.constant 0 : i32
    %c0_i32_0 = arith.constant 0 : i32
    %c0_i32_1 = arith.constant 0 : i32
    %c0_i32_2 = arith.constant 0 : i32
    return %arg0, %c0_i32, %c0_i32_0, %c0_i32_1 : i32, i32, i32, i32
  }
  func.func @transform_1(%arg0: i32) -> (i32, i32) {
    %c0_i32 = arith.constant 0 : i32
    %c0_i32_0 = arith.constant 0 : i32
    %c0_i32_1 = arith.constant 0 : i32
    return %c0_i32, %c0_i32_0 : i32, i32
  }
  func.func @transform_2(%arg0: i32) -> (i32, i32) {
    %c0_i32 = arith.constant 0 : i32
    %c0_i32_0 = arith.constant 0 : i32
    %c0_i32_1 = arith.constant 0 : i32
    return %c0_i32, %c0_i32_0 : i32, i32
  }
  func.func @transform_3(%arg0: i32) -> (i32, i32) {
    %c0_i32 = arith.constant 0 : i32
    %c0_i32_0 = arith.constant 0 : i32
    %c0_i32_1 = arith.constant 0 : i32
    return %c0_i32, %c0_i32_0 : i32, i32
  }
  func.func @transform_4(%arg0: i32) -> (i32, i32, i32) {
    %c0_i32 = arith.constant 0 : i32
    %c0_i32_0 = arith.constant 0 : i32
    %c0_i32_1 = arith.constant 0 : i32
    %c0_i32_2 = arith.constant 0 : i32
    return %c0_i32, %c0_i32_0, %c0_i32_1 : i32, i32, i32
  }
  func.func @transform_5(%arg0: i32) -> (i32, i32) {
    %c0_i32 = arith.constant 0 : i32
    %c0_i32_0 = arith.constant 0 : i32
    %c0_i32_1 = arith.constant 0 : i32
    return %c0_i32, %c0_i32_0 : i32, i32
  }
  func.func @transform_6(%arg0: i32) -> (i32, i32) {
    %c0_i32 = arith.constant 0 : i32
    %c0_i32_0 = arith.constant 0 : i32
    %c0_i32_1 = arith.constant 0 : i32
    return %c0_i32, %c0_i32_0 : i32, i32
  }
  func.func @transform_7(%arg0: i32) -> (i32, i32) {
    %c0_i32 = arith.constant 0 : i32
    %c0_i32_0 = arith.constant 0 : i32
    %c0_i32_1 = arith.constant 0 : i32
    return %c0_i32, %c0_i32_0 : i32, i32
  }
  func.func @transform_8(%arg0: i32) -> (i32, i32, i32) {
    %c0_i32 = arith.constant 0 : i32
    %c0_i32_0 = arith.constant 0 : i32
    %c0_i32_1 = arith.constant 0 : i32
    %c0_i32_2 = arith.constant 0 : i32
    return %c0_i32, %c0_i32_0, %c0_i32_1 : i32, i32, i32
  }
  func.func @transform_9(%arg0: i32) -> (i32, i32, i32) {
    %c0_i32 = arith.constant 0 : i32
    %c0_i32_0 = arith.constant 0 : i32
    %c0_i32_1 = arith.constant 0 : i32
    return %arg0, %c0_i32, %c0_i32_0 : i32, i32, i32
  }
}

</mosaic_0001>

<llo_original>
// kernel: basic_block2_forward.1
$region0: #{basic_block2_forward.1}
  #allocation0 [shape = 'u32[]', space=smem, size = 0x4, offset = 0x4, fixed_abs, tag = 'smem constant byte address 0x4 - core index']
  #allocation1 [shape = 'u32[144,128]{1,0:T(1,128)}', space=vmem, size = 0x12000, scoped, tag = 'internal scratch']
  #allocation2 [shape = 'f32[10,10,128]{2,1,0:T(8,128)}', space=vmem, size = 0x14000, scoped, tag = 'scratch operand']
  %s0 = inlined_call_operand.vmem [shape: bf16[2,9,9,512], index: 0, kind: input, shape index: {}]
  %s1 = inlined_call_operand.vmem [shape: bf16[128,128], index: 1, kind: input, shape index: {}]
  %s2 = inlined_call_operand.vmem [shape: bf16[512,128], index: 2, kind: input, shape index: {}]
  %s3 = inlined_call_operand.vmem [shape: bf16[256,128], index: 3, kind: input, shape index: {}]
  %s4 = inlined_call_operand.vmem [shape: bf16[2,128,128], index: 4, kind: input, shape index: {}]
  %s5 = inlined_call_operand.vmem [shape: bf16[128,128], index: 5, kind: input, shape index: {}]
  %s6 = inlined_call_operand.vmem [shape: f32[1,128], index: 6, kind: input, shape index: {}]
  %s7 = inlined_call_operand.vmem [shape: f32[1,128], index: 7, kind: input, shape index: {}]
  %s8 = inlined_call_operand.vmem [shape: bf16[9,128,128], index: 8, kind: input, shape index: {}]
  %s9 = inlined_call_operand.vmem [shape: bf16[2,64,128], index: 9, kind: output, shape index: {}]
  %s10 = sld [smem:[#allocation0]]
  $region69: #{basic_block2_forward.1} parent=0
    _
  %s12 = ssub.s32 1, %s10
  %s13 = scalar_select 0, %s12, %s10
  loop: start=0, step=1, limit=4
  $region2: #{basic_block2_forward.1} parent=0 // loop_pre_header
    _
  $region3: #{basic_block2_forward.1} parent=0 // loop_header
    %s15 = sphi 0, %s19
    %p16 = scmp.ge.s32.totalorder %s15, 4
    %s25 = sphi 0, %s27
    %s28 = sphi 0, %s25
    %s29 = sphi 0, %s28
    %s45 = sphi 0, %s29
    %s49 = sphi 0, %s49
    %s51 = sphi 0, %s49
    %s52 = sphi 0, %s51
    %s66 = sphi 0, %s52
    %s70 = sphi 0, %s70
    %s72 = sphi 0, %s70
    %s73 = sphi 0, %s72
    %s87 = sphi 0, %s73
    %s91 = sphi 0, %s91
    %s93 = sphi 0, %s91
    %s94 = sphi 0, %s93
    %s108 = sphi 0, %s94
    %s112 = sphi 0, %s112
    %s114 = sphi 0, %s112
    %s115 = sphi 0, %s114
    %s129 = sphi 0, %s115
    %s133 = sphi 0, %s133
    %s135 = sphi 0, %s133
    %s136 = sphi 0, %s135
    %s150 = sphi 0, %s136
    %s154 = sphi 0, %s154
    %s156 = sphi 0, %s154
    %s157 = sphi 0, %s156
    %s171 = sphi 0, %s157
    %s175 = sphi 0, %s175
    %s177 = sphi 0, %s175
    %s178 = sphi 0, %s177
    %s192 = sphi 0, %s178
    %s196 = sphi 0, %s196
    %s198 = sphi 0, %s196
    %s199 = sphi 0, %s198
    %s213 = sphi 0, %s199
    %s219 = sphi 0, %s221
    %s222 = sphi 0, %s219
    %s223 = sphi 0, %s222
    %s239 = sphi 0, %s223
  $region4: #{basic_block2_forward.1} parent=0 // loop_header_branch
    %18 = sbr.rel (%p16) target = $region8
  $region5: #{basic_block2_forward.1} parent=0 // loop_body
    %s20 = ssub.s32 %s15, 1
    %s21 = ssub.s32 %s15, 2
    %s22 = sadd.s32 %s15, 1
    %s23 = ssub.s32 %s15, %s22
    %p24 = scmp.eq.s32.totalorder %s23, 0
    %s26 = sadd.s32 %s25, 1
    %s27 = scalar_select %p24, %s25, %s26
    %p30 = pneg %p24
    %p31 = scmp.eq.s32.totalorder %s15, 1
    %p32 = por %p30, %p31
    %p33 = scmp.ne.s32.totalorder %s25, %s28
    %p34 = scmp.eq.s32.totalorder %s15, 0
    %p35 = por %p33, %p34
    %p36 = scmp.ne.s32.totalorder %s25, %s28
    %p37 = scmp.eq.s32.totalorder %s20, 1
    %p38 = por %p36, %p37
    %p39 = scmp.ne.s32.totalorder %s28, %s29
    %p40 = scmp.eq.s32.totalorder %s20, 0
    %p41 = por %p39, %p40
    %p42 = scmp.ne.s32.totalorder %s28, %s29
    %p43 = scmp.eq.s32.totalorder %s21, 1
    %p44 = por %p42, %p43
    %p46 = scmp.ne.s32.totalorder %s29, %s45
    %p47 = scmp.eq.s32.totalorder %s21, 0
    %p48 = por %p46, %p47
    %s50 = sadd.s32 %s49, 1
    %p53 = scmp.eq.s32.totalorder %s15, 1
    %p54 = scmp.ne.s32.totalorder %s49, %s51
    %p55 = scmp.eq.s32.totalorder %s15, 0
    %p56 = por %p54, %p55
    %p57 = scmp.ne.s32.totalorder %s49, %s51
    %p58 = scmp.eq.s32.totalorder %s20, 1
    %p59 = por %p57, %p58
    %p60 = scmp.ne.s32.totalorder %s51, %s52
    %p61 = scmp.eq.s32.totalorder %s20, 0
    %p62 = por %p60, %p61
    %p63 = scmp.ne.s32.totalorder %s51, %s52
    %p64 = scmp.eq.s32.totalorder %s21, 1
    %p65 = por %p63, %p64
    %p67 = scmp.ne.s32.totalorder %s52, %s66
    %p68 = scmp.eq.s32.totalorder %s21, 0
    %p69 = por %p67, %p68
    %s71 = sadd.s32 %s70, 1
    %p74 = scmp.eq.s32.totalorder %s15, 1
    %p75 = scmp.ne.s32.totalorder %s70, %s72
    %p76 = scmp.eq.s32.totalorder %s15, 0
    %p77 = por %p75, %p76
    %p78 = scmp.ne.s32.totalorder %s70, %s72
    %p79 = scmp.eq.s32.totalorder %s20, 1
    %p80 = por %p78, %p79
    %p81 = scmp.ne.s32.totalorder %s72, %s73
    %p82 = scmp.eq.s32.totalorder %s20, 0
    %p83 = por %p81, %p82
    %p84 = scmp.ne.s32.totalorder %s72, %s73
    %p85 = scmp.eq.s32.totalorder %s21, 1
    %p86 = por %p84, %p85
    %p88 = scmp.ne.s32.totalorder %s73, %s87
    %p89 = scmp.eq.s32.totalorder %s21, 0
    %p90 = por %p88, %p89
    %s92 = sadd.s32 %s91, 1
    %p95 = scmp.eq.s32.totalorder %s15, 1
    %p96 = scmp.ne.s32.totalorder %s91, %s93
    %p97 = scmp.eq.s32.totalorder %s15, 0
    %p98 = por %p96, %p97
    %p99 = scmp.ne.s32.totalorder %s91, %s93
    %p100 = scmp.eq.s32.totalorder %s20, 1
    %p101 = por %p99, %p100
    %p102 = scmp.ne.s32.totalorder %s93, %s94
    %p103 = scmp.eq.s32.totalorder %s20, 0
    %p104 = por %p102, %p103
    %p105 = scmp.ne.s32.totalorder %s93, %s94
    %p106 = scmp.eq.s32.totalorder %s21, 1
    %p107 = por %p105, %p106
    %p109 = scmp.ne.s32.totalorder %s94, %s108
    %p110 = scmp.eq.s32.totalorder %s21, 0
    %p111 = por %p109, %p110
    %s113 = sadd.s32 %s112, 1
    %p116 = scmp.eq.s32.totalorder %s15, 1
    %p117 = scmp.ne.s32.totalorder %s112, %s114
    %p118 = scmp.eq.s32.totalorder %s15, 0
    %p119 = por %p117, %p118
    %p120 = scmp.ne.s32.totalorder %s112, %s114
    %p121 = scmp.eq.s32.totalorder %s20, 1
    %p122 = por %p120, %p121
    %p123 = scmp.ne.s32.totalorder %s114, %s115
    %p124 = scmp.eq.s32.totalorder %s20, 0
    %p125 = por %p123, %p124
    %p126 = scmp.ne.s32.totalorder %s114, %s115
    %p127 = scmp.eq.s32.totalorder %s21, 1
    %p128 = por %p126, %p127
    %p130 = scmp.ne.s32.totalorder %s115, %s129
    %p131 = scmp.eq.s32.totalorder %s21, 0
    %p132 = por %p130, %p131
    %s134 = sadd.s32 %s133, 1
    %p137 = scmp.eq.s32.totalorder %s15, 1
    %p138 = scmp.ne.s32.totalorder %s133, %s135
    %p139 = scmp.eq.s32.totalorder %s15, 0
    %p140 = por %p138, %p139
    %p141 = scmp.ne.s32.totalorder %s133, %s135
    %p142 = scmp.eq.s32.totalorder %s20, 1
    %p143 = por %p141, %p142
    %p144 = scmp.ne.s32.totalorder %s135, %s136
    %p145 = scmp.eq.s32.totalorder %s20, 0
    %p146 = por %p144, %p145
    %p147 = scmp.ne.s32.totalorder %s135, %s136
    %p148 = scmp.eq.s32.totalorder %s21, 1
    %p149 = por %p147, %p148
    %p151 = scmp.ne.s32.totalorder %s136, %s150
    %p152 = scmp.eq.s32.totalorder %s21, 0
    %p153 = por %p151, %p152
    %s155 = sadd.s32 %s154, 1
    %p158 = scmp.eq.s32.totalorder %s15, 1
    %p159 = scmp.ne.s32.totalorder %s154, %s156
    %p160 = scmp.eq.s32.totalorder %s15, 0
    %p161 = por %p159, %p160
    %p162 = scmp.ne.s32.totalorder %s154, %s156
    %p163 = scmp.eq.s32.totalorder %s20, 1
    %p164 = por %p162, %p163
    %p165 = scmp.ne.s32.totalorder %s156, %s157
    %p166 = scmp.eq.s32.totalorder %s20, 0
    %p167 = por %p165, %p166
    %p168 = scmp.ne.s32.totalorder %s156, %s157
    %p169 = scmp.eq.s32.totalorder %s21, 1
    %p170 = por %p168, %p169
    %p172 = scmp.ne.s32.totalorder %s157, %s171
    %p173 = scmp.eq.s32.totalorder %s21, 0
    %p174 = por %p172, %p173
    %s176 = sadd.s32 %s175, 1
    %p179 = scmp.eq.s32.totalorder %s15, 1
    %p180 = scmp.ne.s32.totalorder %s175, %s177
    %p181 = scmp.eq.s32.totalorder %s15, 0
    %p182 = por %p180, %p181
    %p183 = scmp.ne.s32.totalorder %s175, %s177
    %p184 = scmp.eq.s32.totalorder %s20, 1
    %p185 = por %p183, %p184
    %p186 = scmp.ne.s32.totalorder %s177, %s178
    %p187 = scmp.eq.s32.totalorder %s20, 0
    %p188 = por %p186, %p187
    %p189 = scmp.ne.s32.totalorder %s177, %s178
    %p190 = scmp.eq.s32.totalorder %s21, 1
    %p191 = por %p189, %p190
    %p193 = scmp.ne.s32.totalorder %s178, %s192
    %p194 = scmp.eq.s32.totalorder %s21, 0
    %p195 = por %p193, %p194
    %s197 = sadd.s32 %s196, 1
    %p200 = scmp.eq.s32.totalorder %s15, 1
    %p201 = scmp.ne.s32.totalorder %s196, %s198
    %p202 = scmp.eq.s32.totalorder %s15, 0
    %p203 = por %p201, %p202
    %p204 = scmp.ne.s32.totalorder %s196, %s198
    %p205 = scmp.eq.s32.totalorder %s20, 1
    %p206 = por %p204, %p205
    %p207 = scmp.ne.s32.totalorder %s198, %s199
    %p208 = scmp.eq.s32.totalorder %s20, 0
    %p209 = por %p207, %p208
    %p210 = scmp.ne.s32.totalorder %s198, %s199
    %p211 = scmp.eq.s32.totalorder %s21, 1
    %p212 = por %p210, %p211
    %p214 = scmp.ne.s32.totalorder %s199, %s213
    %p215 = scmp.eq.s32.totalorder %s21, 0
    %p216 = por %p214, %p215
    %s217 = ssub.s32 %s15, %s22
    %p218 = scmp.eq.s32.totalorder %s217, 0
    %s220 = sadd.s32 %s219, 1
    %s221 = scalar_select %p218, %s219, %s220
    %p224 = pneg %p218
    %p225 = scmp.eq.s32.totalorder %s15, 1
    %p226 = por %p224, %p225
    %p227 = scmp.ne.s32.totalorder %s219, %s222
    %p228 = scmp.eq.s32.totalorder %s15, 0
    %p229 = por %p227, %p228
    %p230 = scmp.ne.s32.totalorder %s219, %s222
    %p231 = scmp.eq.s32.totalorder %s20, 1
    %p232 = por %p230, %p231
    %p233 = scmp.ne.s32.totalorder %s222, %s223
    %p234 = scmp.eq.s32.totalorder %s20, 0
    %p235 = por %p233, %p234
    %p236 = scmp.ne.s32.totalorder %s222, %s223
    %p237 = scmp.eq.s32.totalorder %s21, 1
    %p238 = por %p236, %p237
    %p240 = scmp.ne.s32.totalorder %s223, %s239
    %p241 = scmp.eq.s32.totalorder %s21, 0
    %p242 = por %p240, %p241
    %p243 = scmp.le.s32.totalorder 1, %s15
    %p244 = scmp.lt.s32.totalorder %s15, 3
    %p245 = pnand %p243, %p244
    %p246 = pneg %p245
    // Predicated region
    $region9: #{basic_block2_forward.1} parent=5 // pred_check
      _
    $region10: #{basic_block2_forward.1} parent=5 // pred_check_branch
      %248 = sbr.rel (%p245) target = $region12
    $region11: #{basic_block2_forward.1} parent=5 // pred_region
      %s249 = ssub.s32 %s15, 1
      // Predicated region
      $region13: #{basic_block2_forward.1} parent=11 // pred_check
        %p250 = pneg %p62
      $region14: #{basic_block2_forward.1} parent=11 // pred_check_branch
        %252 = sbr.rel (%p250) target = $region16
      $region15: #{basic_block2_forward.1} parent=11 // pred_region
        _
      $region16: #{basic_block2_forward.1} parent=11 // pred_fallthru
        _
      // Predicated region
      $region17: #{basic_block2_forward.1} parent=11 // pred_check
        %p253 = pneg %p83
      $region18: #{basic_block2_forward.1} parent=11 // pred_check_branch
        %255 = sbr.rel (%p253) target = $region20
      $region19: #{basic_block2_forward.1} parent=11 // pred_region
        _
      $region20: #{basic_block2_forward.1} parent=11 // pred_fallthru
        _
      // Predicated region
      $region21: #{basic_block2_forward.1} parent=11 // pred_check
        %p256 = pneg %p104
      $region22: #{basic_block2_forward.1} parent=11 // pred_check_branch
        %258 = sbr.rel (%p256) target = $region24
      $region23: #{basic_block2_forward.1} parent=11 // pred_region
        _
      $region24: #{basic_block2_forward.1} parent=11 // pred_fallthru
        _
      // Predicated region
      $region25: #{basic_block2_forward.1} parent=11 // pred_check
        %p259 = pneg %p125
      $region26: #{basic_block2_forward.1} parent=11 // pred_check_branch
        %261 = sbr.rel (%p259) target = $region28
      $region27: #{basic_block2_forward.1} parent=11 // pred_region
        _
      $region28: #{basic_block2_forward.1} parent=11 // pred_fallthru
        _
      // Predicated region
      $region29: #{basic_block2_forward.1} parent=11 // pred_check
        %p262 = pneg %p146
      $region30: #{basic_block2_forward.1} parent=11 // pred_check_branch
        %264 = sbr.rel (%p262) target = $region32
      $region31: #{basic_block2_forward.1} parent=11 // pred_region
        _
      $region32: #{basic_block2_forward.1} parent=11 // pred_fallthru
        _
      // Predicated region
      $region33: #{basic_block2_forward.1} parent=11 // pred_check
        %p265 = pneg %p167
      $region34: #{basic_block2_forward.1} parent=11 // pred_check_branch
        %267 = sbr.rel (%p265) target = $region36
      $region35: #{basic_block2_forward.1} parent=11 // pred_region
        _
      $region36: #{basic_block2_forward.1} parent=11 // pred_fallthru
        _
      // Predicated region
      $region37: #{basic_block2_forward.1} parent=11 // pred_check
        %p268 = pneg %p188
      $region38: #{basic_block2_forward.1} parent=11 // pred_check_branch
        %270 = sbr.rel (%p268) target = $region40
      $region39: #{basic_block2_forward.1} parent=11 // pred_region
        _
      $region40: #{basic_block2_forward.1} parent=11 // pred_fallthru
        _
      // Predicated region
      $region41: #{basic_block2_forward.1} parent=11 // pred_check
        %p271 = pneg %p209
      $region42: #{basic_block2_forward.1} parent=11 // pred_check_branch
        %273 = sbr.rel (%p271) target = $region44
      $region43: #{basic_block2_forward.1} parent=11 // pred_region
        _
      $region44: #{basic_block2_forward.1} parent=11 // pred_fallthru
        _
    $region12: #{basic_block2_forward.1} parent=5 // pred_fallthru
      _
    %p274 = scmp.lt.s32.totalorder %s15, 2
    // Predicated region
    $region45: #{basic_block2_forward.1} parent=5 // pred_check
      %p275 = pneg %p274
    $region46: #{basic_block2_forward.1} parent=5 // pred_check_branch
      %277 = sbr.rel (%p275) target = $region48
    $region47: #{basic_block2_forward.1} parent=5 // pred_region
      // Predicated region
      $region49: #{basic_block2_forward.1} parent=47 // pred_check
        %p278 = pneg %p35
      $region50: #{basic_block2_forward.1} parent=47 // pred_check_branch
        %280 = sbr.rel (%p278) target = $region52
      $region51: #{basic_block2_forward.1} parent=47 // pred_region
        %p281 = scmp.lt.s32.totalorder %s15, 1
        %s282 = scalar_select %p281, %s15, 1
        %s283 = smul.addr %s282, 72
        %s284 = smul.addr %s283, 4
        %s285 = scalar_lea.vmem %s0, %s284
      $region52: #{basic_block2_forward.1} parent=47 // pred_fallthru
        _
    $region48: #{basic_block2_forward.1} parent=5 // pred_fallthru
      _
    %p286 = scmp.le.s32.totalorder 1, %s15
    %p287 = scmp.lt.s32.totalorder %s15, 3
    %p288 = pnand %p286, %p287
    %p289 = pneg %p288
    // Predicated region
    $region53: #{basic_block2_forward.1} parent=5 // pred_check
      _
    $region54: #{basic_block2_forward.1} parent=5 // pred_check_branch
      %291 = sbr.rel (%p288) target = $region56
    $region55: #{basic_block2_forward.1} parent=5 // pred_region
      %s292 = ssub.s32 %s15, 1
      %p293 = scmp.lt.s32.totalorder %s20, 1
      %s294 = scalar_select %p293, %s20, 1
      %s295 = smul.addr %s294, 72
      %s296 = smul.addr %s295, 4
      %s297 = scalar_lea.vmem %s0, %s296
      %p298 = pneg %p41
      %p299 = pneg %p38
      %p300 = pneg %p62
      %p301 = pneg %p59
      %p302 = pneg %p83
      %p303 = pneg %p80
      %p304 = pneg %p104
      %p305 = pneg %p101
      %p306 = pneg %p125
      %p307 = pneg %p122
      %p308 = pneg %p146
      %p309 = pneg %p143
      %p310 = pneg %p167
      %p311 = pneg %p164
      %p312 = pneg %p188
      %p313 = pneg %p185
      %p314 = pneg %p209
      %p315 = pneg %p206
      %p316 = pneg %p235
      %p317 = pneg %p232
      %p318 = scmp.lt.s32.totalorder %s20, 1
      %s319 = scalar_select %p318, %s20, 1
      %s320 = smul.addr %s319, 8
      %s321 = smul.addr %s320, 4
      %s322 = scalar_lea.vmem %s9, %s321
      %p323 = scmp.lt.s32.totalorder %s20, 1
      %s324 = scalar_select %p323, %s20, 1
      %s325 = smul.addr %s324, 72
      %s326 = smul.addr %s325, 4
      %s327 = scalar_lea.vmem %s0, %s326
      %p328 = scmp.lt.s32.totalorder %s20, 1
      %s329 = scalar_select %p328, %s20, 1
      %s330 = smul.addr %s329, 8
      %s331 = smul.addr %s330, 4
      %s332 = scalar_lea.vmem %s9, %s331
      %334 = vst [vmem:[#allocation2] sm:$0xff] 0.0
      %335 = vst [vmem:[#allocation2 + $0x8] sm:$0x3] 0.0
      %s336 = scalar_lea.vmem [#allocation2], 144
      %337 = vst [vmem:[%s336] sm:$0xff] 0.0
      %338 = vst [vmem:[%s336 + $0x8] sm:$0x3] 0.0
      %s339 = scalar_lea.vmem [#allocation2], 16
      %340 = vst [vmem:[%s339] sm:$0x1] 0.0
      %341 = vst [vmem:[%s339 + $0x10] sm:$0x1] 0.0
      %342 = vst [vmem:[%s339 + $0x20] sm:$0x1] 0.0
      %343 = vst [vmem:[%s339 + $0x30] sm:$0x1] 0.0
      %344 = vst [vmem:[%s339 + $0x40] sm:$0x1] 0.0
      %345 = vst [vmem:[%s339 + $0x50] sm:$0x1] 0.0
      %346 = vst [vmem:[%s339 + $0x60] sm:$0x1] 0.0
      %347 = vst [vmem:[%s339 + $0x70] sm:$0x1] 0.0
      %348 = vst [vmem:[%s339 + $0x9] sm:$0x1] 0.0
      %349 = vst [vmem:[%s339 + $0x19] sm:$0x1] 0.0
      %350 = vst [vmem:[%s339 + $0x29] sm:$0x1] 0.0
      %351 = vst [vmem:[%s339 + $0x39] sm:$0x1] 0.0
      %352 = vst [vmem:[%s339 + $0x49] sm:$0x1] 0.0
      %353 = vst [vmem:[%s339 + $0x59] sm:$0x1] 0.0
      %354 = vst [vmem:[%s339 + $0x69] sm:$0x1] 0.0
      %355 = vst [vmem:[%s339 + $0x79] sm:$0x1] 0.0
      %v356 = vld [vmem:[%s327] sm:$0xff]
      %v357 = vld [vmem:[%s327 + $0x8] sm:$0xff]
      %v358 = vld [vmem:[%s327 + $0x20] sm:$0xff]
      %v359 = vld [vmem:[%s327 + $0x28] sm:$0xff]
      %v360 = vld [vmem:[%s327 + $0x40] sm:$0xff]
      %v361 = vld [vmem:[%s327 + $0x48] sm:$0xff]
      %v362 = vld [vmem:[%s327 + $0x60] sm:$0xff]
      %v363 = vld [vmem:[%s327 + $0x68] sm:$0xff]
      %v364 = vld [vmem:[%s327 + $0x80] sm:$0xff]
      %v365 = vld [vmem:[%s327 + $0x88] sm:$0xff]
      %v366 = vld [vmem:[%s327 + $0xa0] sm:$0xff]
      %v367 = vld [vmem:[%s327 + $0xa8] sm:$0xff]
      %v368 = vld [vmem:[%s327 + $0xc0] sm:$0xff]
      %v369 = vld [vmem:[%s327 + $0xc8] sm:$0xff]
      %v370 = vld [vmem:[%s327 + $0xe0] sm:$0xff]
      %v371 = vld [vmem:[%s327 + $0xe8] sm:$0xff]
      %v372 = vld [vmem:[%s2] sm:$0xf]
      %v373 = vld [vmem:[%s2 + $0x4] sm:$0xf]
      %v374 = vld [vmem:[%s2 + $0x8] sm:$0xf]
      %v375 = vld [vmem:[%s2 + $0xc] sm:$0xf]
      %v376 = vld [vmem:[%s2 + $0x10] sm:$0xf]
      %v377 = vld [vmem:[%s2 + $0x14] sm:$0xf]
      %v378 = vld [vmem:[%s2 + $0x18] sm:$0xf]
      %v379 = vld [vmem:[%s2 + $0x1c] sm:$0xf]
      %v380 = vld [vmem:[%s2 + $0x20] sm:$0xf]
      %v381 = vld [vmem:[%s2 + $0x24] sm:$0xf]
      %v382 = vld [vmem:[%s2 + $0x28] sm:$0xf]
      %v383 = vld [vmem:[%s2 + $0x2c] sm:$0xf]
      %v384 = vld [vmem:[%s2 + $0x30] sm:$0xf]
      %v385 = vld [vmem:[%s2 + $0x34] sm:$0xf]
      %v386 = vld [vmem:[%s2 + $0x38] sm:$0xf]
      %v387 = vld [vmem:[%s2 + $0x3c] sm:$0xf]
      %v388 = vld [vmem:[%s2 + $0x40] sm:$0xf]
      %v389 = vld [vmem:[%s2 + $0x44] sm:$0xf]
      %v390 = vld [vmem:[%s2 + $0x48] sm:$0xf]
      %v391 = vld [vmem:[%s2 + $0x4c] sm:$0xf]
      %v392 = vld [vmem:[%s2 + $0x50] sm:$0xf]
      %v393 = vld [vmem:[%s2 + $0x54] sm:$0xf]
      %v394 = vld [vmem:[%s2 + $0x58] sm:$0xf]
      %v395 = vld [vmem:[%s2 + $0x5c] sm:$0xf]
      %v396 = vld [vmem:[%s2 + $0x60] sm:$0xf]
      %v397 = vld [vmem:[%s2 + $0x64] sm:$0xf]
      %v398 = vld [vmem:[%s2 + $0x68] sm:$0xf]
      %v399 = vld [vmem:[%s2 + $0x6c] sm:$0xf]
      %v400 = vld [vmem:[%s2 + $0x70] sm:$0xf]
      %v401 = vld [vmem:[%s2 + $0x74] sm:$0xf]
      %v402 = vld [vmem:[%s2 + $0x78] sm:$0xf]
      %v403 = vld [vmem:[%s2 + $0x7c] sm:$0xf]
      %v404 = vld [vmem:[%s2 + $0x80] sm:$0xf]
      %v405 = vld [vmem:[%s2 + $0x84] sm:$0xf]
      %v406 = vld [vmem:[%s2 + $0x88] sm:$0xf]
      %v407 = vld [vmem:[%s2 + $0x8c] sm:$0xf]
      %v408 = vld [vmem:[%s2 + $0x90] sm:$0xf]
      %v409 = vld [vmem:[%s2 + $0x94] sm:$0xf]
      %v410 = vld [vmem:[%s2 + $0x98] sm:$0xf]
      %v411 = vld [vmem:[%s2 + $0x9c] sm:$0xf]
      %v412 = vld [vmem:[%s2 + $0xa0] sm:$0xf]
      %v413 = vld [vmem:[%s2 + $0xa4] sm:$0xf]
      %v414 = vld [vmem:[%s2 + $0xa8] sm:$0xf]
      %v415 = vld [vmem:[%s2 + $0xac] sm:$0xf]
      %v416 = vld [vmem:[%s2 + $0xb0] sm:$0xf]
      %v417 = vld [vmem:[%s2 + $0xb4] sm:$0xf]
      %v418 = vld [vmem:[%s2 + $0xb8] sm:$0xf]
      %v419 = vld [vmem:[%s2 + $0xbc] sm:$0xf]
      %v420 = vld [vmem:[%s2 + $0xc0] sm:$0xf]
      %v421 = vld [vmem:[%s2 + $0xc4] sm:$0xf]
      %v422 = vld [vmem:[%s2 + $0xc8] sm:$0xf]
      %v423 = vld [vmem:[%s2 + $0xcc] sm:$0xf]
      %v424 = vld [vmem:[%s2 + $0xd0] sm:$0xf]
      %v425 = vld [vmem:[%s2 + $0xd4] sm:$0xf]
      %v426 = vld [vmem:[%s2 + $0xd8] sm:$0xf]
      %v427 = vld [vmem:[%s2 + $0xdc] sm:$0xf]
      %v428 = vld [vmem:[%s2 + $0xe0] sm:$0xf]
      %v429 = vld [vmem:[%s2 + $0xe4] sm:$0xf]
      %v430 = vld [vmem:[%s2 + $0xe8] sm:$0xf]
      %v431 = vld [vmem:[%s2 + $0xec] sm:$0xf]
      %v432 = vld [vmem:[%s2 + $0xf0] sm:$0xf]
      %v433 = vld [vmem:[%s2 + $0xf4] sm:$0xf]
      %v434 = vld [vmem:[%s2 + $0xf8] sm:$0xf]
      %v435 = vld [vmem:[%s2 + $0xfc] sm:$0xf]
      %s436 = scalar_lea.vmem %s327, 32
      %v437 = vld [vmem:[%s436] sm:$0xff]
      %v438 = vld [vmem:[%s436 + $0x20] sm:$0xff]
      %v439 = vld [vmem:[%s436 + $0x40] sm:$0xff]
      %v440 = vld [vmem:[%s436 + $0x60] sm:$0xff]
      %v441 = vld [vmem:[%s436 + $0x80] sm:$0xff]
      %v442 = vld [vmem:[%s436 + $0xa0] sm:$0xff]
      %v443 = vld [vmem:[%s436 + $0xc0] sm:$0xff]
      %v444 = vld [vmem:[%s436 + $0xe0] sm:$0xff]
      %v445 = vld [vmem:[%s3] sm:$0xf]
      %v446 = vld [vmem:[%s3 + $0x4] sm:$0xf]
      %v447 = vld [vmem:[%s3 + $0x8] sm:$0xf]
      %v448 = vld [vmem:[%s3 + $0xc] sm:$0xf]
      %v449 = vld [vmem:[%s3 + $0x10] sm:$0xf]
      %v450 = vld [vmem:[%s3 + $0x14] sm:$0xf]
      %v451 = vld [vmem:[%s3 + $0x18] sm:$0xf]
      %v452 = vld [vmem:[%s3 + $0x1c] sm:$0xf]
      %v453 = vld [vmem:[%s3 + $0x20] sm:$0xf]
      %v454 = vld [vmem:[%s3 + $0x24] sm:$0xf]
      %v455 = vld [vmem:[%s3 + $0x28] sm:$0xf]
      %v456 = vld [vmem:[%s3 + $0x2c] sm:$0xf]
      %v457 = vld [vmem:[%s3 + $0x30] sm:$0xf]
      %v458 = vld [vmem:[%s3 + $0x34] sm:$0xf]
      %v459 = vld [vmem:[%s3 + $0x38] sm:$0xf]
      %v460 = vld [vmem:[%s3 + $0x3c] sm:$0xf]
      %v461 = vld [vmem:[%s3 + $0x40] sm:$0xf]
      %v462 = vld [vmem:[%s3 + $0x44] sm:$0xf]
      %v463 = vld [vmem:[%s3 + $0x48] sm:$0xf]
      %v464 = vld [vmem:[%s3 + $0x4c] sm:$0xf]
      %v465 = vld [vmem:[%s3 + $0x50] sm:$0xf]
      %v466 = vld [vmem:[%s3 + $0x54] sm:$0xf]
      %v467 = vld [vmem:[%s3 + $0x58] sm:$0xf]
      %v468 = vld [vmem:[%s3 + $0x5c] sm:$0xf]
      %v469 = vld [vmem:[%s3 + $0x60] sm:$0xf]
      %v470 = vld [vmem:[%s3 + $0x64] sm:$0xf]
      %v471 = vld [vmem:[%s3 + $0x68] sm:$0xf]
      %v472 = vld [vmem:[%s3 + $0x6c] sm:$0xf]
      %v473 = vld [vmem:[%s3 + $0x70] sm:$0xf]
      %v474 = vld [vmem:[%s3 + $0x74] sm:$0xf]
      %v475 = vld [vmem:[%s3 + $0x78] sm:$0xf]
      %v476 = vld [vmem:[%s3 + $0x7c] sm:$0xf]
      %v485 = vunpack.c.l.b16 %v437
      %v486 = vunpack.c.h.b16 %v437
      %v487 = vunpack.c.l.b16 %v438
      %v488 = vunpack.c.h.b16 %v438
      %v489 = vunpack.c.l.b16 %v439
      %v490 = vunpack.c.h.b16 %v439
      %v491 = vunpack.c.l.b16 %v440
      %v492 = vunpack.c.h.b16 %v440
      %v493 = vunpack.c.l.b16 %v441
      %v494 = vunpack.c.h.b16 %v441
      %v495 = vunpack.c.l.b16 %v442
      %v496 = vunpack.c.h.b16 %v442
      %v497 = vunpack.c.l.b16 %v443
      %v498 = vunpack.c.h.b16 %v443
      %v499 = vunpack.c.l.b16 %v444
      %v500 = vunpack.c.h.b16 %v444
      %v501 = vpack.c.b16 %v487, %v485
      %v502 = vpack.c.b16 %v488, %v486
      %v503 = vpack.c.b16 %v491, %v489
      %v504 = vpack.c.b16 %v492, %v490
      %v505 = vpack.c.b16 %v495, %v493
      %v506 = vpack.c.b16 %v496, %v494
      %v507 = vpack.c.b16 %v499, %v497
      %v508 = vpack.c.b16 %v500, %v498
      %v549 = vunpack.c.l.b16 %v445
      %v550 = vunpack.c.l.b16 %v446
      %v551 = vunpack.c.l.b16 %v447
      %v552 = vunpack.c.l.b16 %v448
      %v553 = vunpack.c.l.b16 %v449
      %v554 = vunpack.c.l.b16 %v450
      %v555 = vunpack.c.l.b16 %v451
      %v556 = vunpack.c.l.b16 %v452
      %v557 = vunpack.c.l.b16 %v453
      %v558 = vunpack.c.l.b16 %v454
      %v559 = vunpack.c.l.b16 %v455
      %v560 = vunpack.c.l.b16 %v456
      %v561 = vunpack.c.l.b16 %v457
      %v562 = vunpack.c.l.b16 %v458
      %v563 = vunpack.c.l.b16 %v459
      %v564 = vunpack.c.l.b16 %v460
      %v565 = vunpack.c.l.b16 %v461
      %v566 = vunpack.c.l.b16 %v462
      %v567 = vunpack.c.l.b16 %v463
      %v568 = vunpack.c.l.b16 %v464
      %v569 = vunpack.c.l.b16 %v465
      %v570 = vunpack.c.l.b16 %v466
      %v571 = vunpack.c.l.b16 %v467
      %v572 = vunpack.c.l.b16 %v468
      %v573 = vunpack.c.l.b16 %v469
      %v574 = vunpack.c.l.b16 %v470
      %v575 = vunpack.c.l.b16 %v471
      %v576 = vunpack.c.l.b16 %v472
      %v577 = vunpack.c.l.b16 %v473
      %v578 = vunpack.c.l.b16 %v474
      %v579 = vunpack.c.l.b16 %v475
      %v580 = vunpack.c.l.b16 %v476
      %v581 = vpack.c.b16 %v550, %v549
      %v582 = vpack.c.b16 %v552, %v551
      %v583 = vpack.c.b16 %v554, %v553
      %v584 = vpack.c.b16 %v556, %v555
      %v585 = vpack.c.b16 %v558, %v557
      %v586 = vpack.c.b16 %v560, %v559
      %v587 = vpack.c.b16 %v562, %v561
      %v588 = vpack.c.b16 %v564, %v563
      %v589 = vpack.c.b16 %v566, %v565
      %v590 = vpack.c.b16 %v568, %v567
      %v591 = vpack.c.b16 %v570, %v569
      %v592 = vpack.c.b16 %v572, %v571
      %v593 = vpack.c.b16 %v574, %v573
      %v594 = vpack.c.b16 %v576, %v575
      %v595 = vpack.c.b16 %v578, %v577
      %v596 = vpack.c.b16 %v580, %v579
      %613 = vmatprep.subr.bf16.mxu0 0
      %614 = vmatpush1.bf16.msra.mxu0 %v581
      %615 = vmatprep.subr.bf16.mxu0 0
      %616 = vmatpush1.bf16.msra.mxu0 %v582
      %617 = vmatprep.subr.bf16.mxu0 0
      %618 = vmatpush1.bf16.msra.mxu0 %v583
      %619 = vmatprep.subr.bf16.mxu0 0
      %620 = vmatpush1.bf16.msra.mxu0 %v584
      %621 = vmatprep.subr.bf16.mxu0 0
      %622 = vmatpush1.bf16.msra.mxu0 %v585
      %623 = vmatprep.subr.bf16.mxu0 0
      %624 = vmatpush1.bf16.msra.mxu0 %v586
      %625 = vmatprep.subr.bf16.mxu0 0
      %626 = vmatpush1.bf16.msra.mxu0 %v587
      %627 = vmatprep.subr.bf16.mxu0 0
      %628 = vmatpush1.bf16.msra.mxu0 %v588
      %629 = vmatprep.subr.bf16.mxu0 0
      %630 = vmatpush1.bf16.msra.mxu0 %v589
      %631 = vmatprep.subr.bf16.mxu0 0
      %632 = vmatpush1.bf16.msra.mxu0 %v590
      %633 = vmatprep.subr.bf16.mxu0 0
      %634 = vmatpush1.bf16.msra.mxu0 %v591
      %635 = vmatprep.subr.bf16.mxu0 0
      %636 = vmatpush1.bf16.msra.mxu0 %v592
      %637 = vmatprep.subr.bf16.mxu0 0
      %638 = vmatpush1.bf16.msra.mxu0 %v593
      %639 = vmatprep.subr.bf16.mxu0 0
      %640 = vmatpush1.bf16.msra.mxu0 %v594
      %641 = vmatprep.subr.bf16.mxu0 0
      %642 = vmatpush1.bf16.msra.mxu0 %v595
      %643 = vmatprep.subr.bf16.mxu0 0
      %644 = vmatpush1.bf16.msra.mxu0 %v596
      %645 = vmatprep.mubr.bf16.mxu0 %v502
      %646 = vmatmul.mubr.bf16.gmra.mrb[0].mxu0 %v501
      %v647 = vpop.f32.mrb[0].mxu0
      %v648 = vadd.f32 0.0, %v647
      %v649 = vpop.f32.mrb[0].mxu0
      %v650 = vpop.f32.mrb[0].mxu0
      %v651 = vadd.f32 0.0, %v650
      %v652 = vpop.f32.mrb[0].mxu0
      %653 = vmatprep.mubr.bf16.mxu0 %v504
      %654 = vmatmul.mubr.bf16.gmra.mrb[0].mxu0 %v503
      %v655 = vpop.f32.mrb[0].mxu0
      %v656 = vadd.f32 0.0, %v655
      %v657 = vpop.f32.mrb[0].mxu0
      %v658 = vpop.f32.mrb[0].mxu0
      %v659 = vadd.f32 0.0, %v658
      %v660 = vpop.f32.mrb[0].mxu0
      %661 = vmatprep.mubr.bf16.mxu0 %v506
      %662 = vmatmul.mubr.bf16.gmra.mrb[0].mxu0 %v505
      %v663 = vpop.f32.mrb[0].mxu0
      %v664 = vadd.f32 0.0, %v663
      %v665 = vpop.f32.mrb[0].mxu0
      %v666 = vpop.f32.mrb[0].mxu0
      %v667 = vadd.f32 0.0, %v666
      %v668 = vpop.f32.mrb[0].mxu0
      %669 = vmatprep.mubr.bf16.mxu0 %v508
      %670 = vmatmul.mubr.bf16.gmra.mrb[0].mxu0 %v507
      %v671 = vpop.f32.mrb[0].mxu0
      %v672 = vadd.f32 0.0, %v671
      %v673 = vpop.f32.mrb[0].mxu0
      %v674 = vpop.f32.mrb[0].mxu0
      %v675 = vadd.f32 0.0, %v674
      %v676 = vpop.f32.mrb[0].mxu0
      %677 = vdwg.mxu0
      %v694 = vunpack.c.l.b16 %v356
      %v695 = vunpack.c.h.b16 %v356
      %v696 = vunpack.c.l.b16 %v357
      %v697 = vunpack.c.h.b16 %v357
      %v698 = vunpack.c.l.b16 %v358
      %v699 = vunpack.c.h.b16 %v358
      %v700 = vunpack.c.l.b16 %v359
      %v701 = vunpack.c.h.b16 %v359
      %v702 = vunpack.c.l.b16 %v360
      %v703 = vunpack.c.h.b16 %v360
      %v704 = vunpack.c.l.b16 %v361
      %v705 = vunpack.c.h.b16 %v361
      %v706 = vunpack.c.l.b16 %v362
      %v707 = vunpack.c.h.b16 %v362
      %v708 = vunpack.c.l.b16 %v363
      %v709 = vunpack.c.h.b16 %v363
      %v710 = vunpack.c.l.b16 %v364
      %v711 = vunpack.c.h.b16 %v364
      %v712 = vunpack.c.l.b16 %v365
      %v713 = vunpack.c.h.b16 %v365
      %v714 = vunpack.c.l.b16 %v366
      %v715 = vunpack.c.h.b16 %v366
      %v716 = vunpack.c.l.b16 %v367
      %v717 = vunpack.c.h.b16 %v367
      %v718 = vunpack.c.l.b16 %v368
      %v719 = vunpack.c.h.b16 %v368
      %v720 = vunpack.c.l.b16 %v369
      %v721 = vunpack.c.h.b16 %v369
      %v722 = vunpack.c.l.b16 %v370
      %v723 = vunpack.c.h.b16 %v370
      %v724 = vunpack.c.l.b16 %v371
      %v725 = vunpack.c.h.b16 %v371
      %v726 = vpack.c.b16 %v698, %v694
      %v727 = vpack.c.b16 %v699, %v695
      %v728 = vpack.c.b16 %v700, %v696
      %v729 = vpack.c.b16 %v701, %v697
      %v730 = vpack.c.b16 %v706, %v702
      %v731 = vpack.c.b16 %v707, %v703
      %v732 = vpack.c.b16 %v708, %v704
      %v733 = vpack.c.b16 %v709, %v705
      %v734 = vpack.c.b16 %v714, %v710
      %v735 = vpack.c.b16 %v715, %v711
      %v736 = vpack.c.b16 %v716, %v712
      %v737 = vpack.c.b16 %v717, %v713
      %v738 = vpack.c.b16 %v722, %v718
      %v739 = vpack.c.b16 %v723, %v719
      %v740 = vpack.c.b16 %v724, %v720
      %v741 = vpack.c.b16 %v725, %v721
      %v822 = vunpack.c.l.b16 %v372
      %v823 = vunpack.c.l.b16 %v373
      %v824 = vunpack.c.l.b16 %v374
      %v825 = vunpack.c.l.b16 %v375
      %v826 = vunpack.c.l.b16 %v376
      %v827 = vunpack.c.l.b16 %v377
      %v828 = vunpack.c.l.b16 %v378
      %v829 = vunpack.c.l.b16 %v379
      %v830 = vunpack.c.l.b16 %v380
      %v831 = vunpack.c.l.b16 %v381
      %v832 = vunpack.c.l.b16 %v382
      %v833 = vunpack.c.l.b16 %v383
      %v834 = vunpack.c.l.b16 %v384
      %v835 = vunpack.c.l.b16 %v385
      %v836 = vunpack.c.l.b16 %v386
      %v837 = vunpack.c.l.b16 %v387
      %v838 = vunpack.c.l.b16 %v388
      %v839 = vunpack.c.l.b16 %v389
      %v840 = vunpack.c.l.b16 %v390
      %v841 = vunpack.c.l.b16 %v391
      %v842 = vunpack.c.l.b16 %v392
      %v843 = vunpack.c.l.b16 %v393
      %v844 = vunpack.c.l.b16 %v394
      %v845 = vunpack.c.l.b16 %v395
      %v846 = vunpack.c.l.b16 %v396
      %v847 = vunpack.c.l.b16 %v397
      %v848 = vunpack.c.l.b16 %v398
      %v849 = vunpack.c.l.b16 %v399
      %v850 = vunpack.c.l.b16 %v400
      %v851 = vunpack.c.l.b16 %v401
      %v852 = vunpack.c.l.b16 %v402
      %v853 = vunpack.c.l.b16 %v403
      %v854 = vunpack.c.l.b16 %v404
      %v855 = vunpack.c.l.b16 %v405
      %v856 = vunpack.c.l.b16 %v406
      %v857 = vunpack.c.l.b16 %v407
      %v858 = vunpack.c.l.b16 %v408
      %v859 = vunpack.c.l.b16 %v409
      %v860 = vunpack.c.l.b16 %v410
      %v861 = vunpack.c.l.b16 %v411
      %v862 = vunpack.c.l.b16 %v412
      %v863 = vunpack.c.l.b16 %v413
      %v864 = vunpack.c.l.b16 %v414
      %v865 = vunpack.c.l.b16 %v415
      %v866 = vunpack.c.l.b16 %v416
      %v867 = vunpack.c.l.b16 %v417
      %v868 = vunpack.c.l.b16 %v418
      %v869 = vunpack.c.l.b16 %v419
      %v870 = vunpack.c.l.b16 %v420
      %v871 = vunpack.c.l.b16 %v421
      %v872 = vunpack.c.l.b16 %v422
      %v873 = vunpack.c.l.b16 %v423
      %v874 = vunpack.c.l.b16 %v424
      %v875 = vunpack.c.l.b16 %v425
      %v876 = vunpack.c.l.b16 %v426
      %v877 = vunpack.c.l.b16 %v427
      %v878 = vunpack.c.l.b16 %v428
      %v879 = vunpack.c.l.b16 %v429
      %v880 = vunpack.c.l.b16 %v430
      %v881 = vunpack.c.l.b16 %v431
      %v882 = vunpack.c.l.b16 %v432
      %v883 = vunpack.c.l.b16 %v433
      %v884 = vunpack.c.l.b16 %v434
      %v885 = vunpack.c.l.b16 %v435
      %v886 = vpack.c.b16 %v823, %v822
      %v887 = vpack.c.b16 %v825, %v824
      %v888 = vpack.c.b16 %v827, %v826
      %v889 = vpack.c.b16 %v829, %v828
      %v890 = vpack.c.b16 %v831, %v830
      %v891 = vpack.c.b16 %v833, %v832
      %v892 = vpack.c.b16 %v835, %v834
      %v893 = vpack.c.b16 %v837, %v836
      %v894 = vpack.c.b16 %v839, %v838
      %v895 = vpack.c.b16 %v841, %v840
      %v896 = vpack.c.b16 %v843, %v842
      %v897 = vpack.c.b16 %v845, %v844
      %v898 = vpack.c.b16 %v847, %v846
      %v899 = vpack.c.b16 %v849, %v848
      %v900 = vpack.c.b16 %v851, %v850
      %v901 = vpack.c.b16 %v853, %v852
      %v902 = vpack.c.b16 %v855, %v854
      %v903 = vpack.c.b16 %v857, %v856
      %v904 = vpack.c.b16 %v859, %v858
      %v905 = vpack.c.b16 %v861, %v860
      %v906 = vpack.c.b16 %v863, %v862
      %v907 = vpack.c.b16 %v865, %v864
      %v908 = vpack.c.b16 %v867, %v866
      %v909 = vpack.c.b16 %v869, %v868
      %v910 = vpack.c.b16 %v871, %v870
      %v911 = vpack.c.b16 %v873, %v872
      %v912 = vpack.c.b16 %v875, %v874
      %v913 = vpack.c.b16 %v877, %v876
      %v914 = vpack.c.b16 %v879, %v878
      %v915 = vpack.c.b16 %v881, %v880
      %v916 = vpack.c.b16 %v883, %v882
      %v917 = vpack.c.b16 %v885, %v884
      %950 = vmatprep.subr.bf16.mxu0 0
      %951 = vmatpush1.bf16.msra.mxu0 %v886
      %952 = vmatprep.subr.bf16.mxu0 0
      %953 = vmatpush1.bf16.msra.mxu0 %v887
      %954 = vmatprep.subr.bf16.mxu0 0
      %955 = vmatpush1.bf16.msra.mxu0 %v888
      %956 = vmatprep.subr.bf16.mxu0 0
      %957 = vmatpush1.bf16.msra.mxu0 %v889
      %958 = vmatprep.subr.bf16.mxu0 0
      %959 = vmatpush1.bf16.msra.mxu0 %v890
      %960 = vmatprep.subr.bf16.mxu0 0
      %961 = vmatpush1.bf16.msra.mxu0 %v891
      %962 = vmatprep.subr.bf16.mxu0 0
      %963 = vmatpush1.bf16.msra.mxu0 %v892
      %964 = vmatprep.subr.bf16.mxu0 0
      %965 = vmatpush1.bf16.msra.mxu0 %v893
      %966 = vmatprep.subr.bf16.mxu0 0
      %967 = vmatpush1.bf16.msra.mxu0 %v894
      %968 = vmatprep.subr.bf16.mxu0 0
      %969 = vmatpush1.bf16.msra.mxu0 %v895
      %970 = vmatprep.subr.bf16.mxu0 0
      %971 = vmatpush1.bf16.msra.mxu0 %v896
      %972 = vmatprep.subr.bf16.mxu0 0
      %973 = vmatpush1.bf16.msra.mxu0 %v897
      %974 = vmatprep.subr.bf16.mxu0 0
      %975 = vmatpush1.bf16.msra.mxu0 %v898
      %976 = vmatprep.subr.bf16.mxu0 0
      %977 = vmatpush1.bf16.msra.mxu0 %v899
      %978 = vmatprep.subr.bf16.mxu0 0
      %979 = vmatpush1.bf16.msra.mxu0 %v900
      %980 = vmatprep.subr.bf16.mxu0 0
      %981 = vmatpush1.bf16.msra.mxu0 %v901
      %982 = vmatprep.mubr.bf16.mxu0 %v727
      %983 = vmatmul.mubr.bf16.gmra.mrb[0].mxu0 %v726
      %v984 = vpop.f32.mrb[0].mxu0
      %v985 = vadd.f32 %v648, %v984
      %v986 = vpop.f32.mrb[0].mxu0
      %v987 = vpop.f32.mrb[0].mxu0
      %v988 = vadd.f32 %v651, %v987
      %v989 = vpop.f32.mrb[0].mxu0
      %990 = vmatprep.mubr.bf16.mxu0 %v731
      %991 = vmatmul.mubr.bf16.gmra.mrb[0].mxu0 %v730
      %v992 = vpop.f32.mrb[0].mxu0
      %v993 = vadd.f32 %v656, %v992
      %v994 = vpop.f32.mrb[0].mxu0
      %v995 = vpop.f32.mrb[0].mxu0
      %v996 = vadd.f32 %v659, %v995
      %v997 = vpop.f32.mrb[0].mxu0
      %998 = vmatprep.mubr.bf16.mxu0 %v735
      %999 = vmatmul.mubr.bf16.gmra.mrb[0].mxu0 %v734
      %v1000 = vpop.f32.mrb[0].mxu0
      %v1001 = vadd.f32 %v664, %v1000
      %v1002 = vpop.f32.mrb[0].mxu0
      %v1003 = vpop.f32.mrb[0].mxu0
      %v1004 = vadd.f32 %v667, %v1003
      %v1005 = vpop.f32.mrb[0].mxu0
      %1006 = vmatprep.mubr.bf16.mxu0 %v739
      %1007 = vmatmul.mubr.bf16.gmra.mrb[0].mxu0 %v738
      %v1008 = vpop.f32.mrb[0].mxu0
      %v1009 = vadd.f32 %v672, %v1008
      %v1010 = vpop.f32.mrb[0].mxu0
      %v1011 = vpop.f32.mrb[0].mxu0
      %v1012 = vadd.f32 %v675, %v1011
      %v1013 = vpop.f32.mrb[0].mxu0
      %1014 = vdwg.mxu0
      %1015 = vmatprep.subr.bf16.mxu0 0
      %1016 = vmatpush1.bf16.msra.mxu0 %v902
      %1017 = vmatprep.subr.bf16.mxu0 0
      %1018 = vmatpush1.bf16.msra.mxu0 %v903
      %1019 = vmatprep.subr.bf16.mxu0 0
      %1020 = vmatpush1.bf16.msra.mxu0 %v904
      %1021 = vmatprep.subr.bf16.mxu0 0
      %1022 = vmatpush1.bf16.msra.mxu0 %v905
      %1023 = vmatprep.subr.bf16.mxu0 0
      %1024 = vmatpush1.bf16.msra.mxu0 %v906
      %1025 = vmatprep.subr.bf16.mxu0 0
      %1026 = vmatpush1.bf16.msra.mxu0 %v907
      %1027 = vmatprep.subr.bf16.mxu0 0
      %1028 = vmatpush1.bf16.msra.mxu0 %v908
      %1029 = vmatprep.subr.bf16.mxu0 0
      %1030 = vmatpush1.bf16.msra.mxu0 %v909
      %1031 = vmatprep.subr.bf16.mxu0 0
      %1032 = vmatpush1.bf16.msra.mxu0 %v910
      %1033 = vmatprep.subr.bf16.mxu0 0
      %1034 = vmatpush1.bf16.msra.mxu0 %v911
      %1035 = vmatprep.subr.bf16.mxu0 0
      %1036 = vmatpush1.bf16.msra.mxu0 %v912
      %1037 = vmatprep.subr.bf16.mxu0 0
      %1038 = vmatpush1.bf16.msra.mxu0 %v913
      %1039 = vmatprep.subr.bf16.mxu0 0
      %1040 = vmatpush1.bf16.msra.mxu0 %v914
      %1041 = vmatprep.subr.bf16.mxu0 0
      %1042 = vmatpush1.bf16.msra.mxu0 %v915
      %1043 = vmatprep.subr.bf16.mxu0 0
      %1044 = vmatpush1.bf16.msra.mxu0 %v916
      %1045 = vmatprep.subr.bf16.mxu0 0
      %1046 = vmatpush1.bf16.msra.mxu0 %v917
      %1047 = vmatprep.mubr.bf16.mxu0 %v729
      %1048 = vmatmul.mubr.bf16.gmra.mrb[0].mxu0 %v728
      %v1049 = vpop.f32.mrb[0].mxu0
      %v1050 = vadd.f32 %v985, %v1049
      %v1051 = vpop.f32.mrb[0].mxu0
      %v1052 = vpop.f32.mrb[0].mxu0
      %v1053 = vadd.f32 %v988, %v1052
      %v1054 = vpop.f32.mrb[0].mxu0
      %1055 = vmatprep.mubr.bf16.mxu0 %v733
      %1056 = vmatmul.mubr.bf16.gmra.mrb[0].mxu0 %v732
      %v1057 = vpop.f32.mrb[0].mxu0
      %v1058 = vadd.f32 %v993, %v1057
      %v1059 = vpop.f32.mrb[0].mxu0
      %v1060 = vpop.f32.mrb[0].mxu0
      %v1061 = vadd.f32 %v996, %v1060
      %v1062 = vpop.f32.mrb[0].mxu0
      %1063 = vmatprep.mubr.bf16.mxu0 %v737
      %1064 = vmatmul.mubr.bf16.gmra.mrb[0].mxu0 %v736
      %v1065 = vpop.f32.mrb[0].mxu0
      %v1066 = vadd.f32 %v1001, %v1065
      %v1067 = vpop.f32.mrb[0].mxu0
      %v1068 = vpop.f32.mrb[0].mxu0
      %v1069 = vadd.f32 %v1004, %v1068
      %v1070 = vpop.f32.mrb[0].mxu0
      %1071 = vmatprep.mubr.bf16.mxu0 %v741
      %1072 = vmatmul.mubr.bf16.gmra.mrb[0].mxu0 %v740
      %v1073 = vpop.f32.mrb[0].mxu0
      %v1074 = vadd.f32 %v1009, %v1073
      %v1075 = vpop.f32.mrb[0].mxu0
      %v1076 = vpop.f32.mrb[0].mxu0
      %v1077 = vadd.f32 %v1012, %v1076
      %v1078 = vpop.f32.mrb[0].mxu0
      %1079 = vdwg.mxu0
      %v1080 = vld [vmem:[%s327] sm:$0xf]
      %v1081 = vld [vmem:[%s327 + $0x10] sm:$0x1]
      %v1082 = vld [vmem:[%s327 + $0x20] sm:$0xf]
      %v1083 = vld [vmem:[%s327 + $0x30] sm:$0x1]
      %v1084 = vld [vmem:[%s327 + $0x40] sm:$0xf]
      %v1085 = vld [vmem:[%s327 + $0x50] sm:$0x1]
      %v1086 = vld [vmem:[%s327 + $0x60] sm:$0xf]
      %v1087 = vld [vmem:[%s327 + $0x70] sm:$0x1]
      %v1088 = vld [vmem:[%s327 + $0x80] sm:$0xf]
      %v1089 = vld [vmem:[%s327 + $0x90] sm:$0x1]
      %v1090 = vld [vmem:[%s327 + $0xa0] sm:$0xf]
      %v1091 = vld [vmem:[%s327 + $0xb0] sm:$0x1]
      %v1092 = vld [vmem:[%s327 + $0xc0] sm:$0xf]
      %v1093 = vld [vmem:[%s327 + $0xd0] sm:$0x1]
      %v1094 = vld [vmem:[%s327 + $0xe0] sm:$0xf]
      %v1095 = vld [vmem:[%s327 + $0xf0] sm:$0x1]
      %vm1096 = vsmask.f32 3328
      %vm1097 = vsmask.f32 7440
      %vm1098 = vmor %vm1096, %vm1097
      %v1100 = vshrl.u32 %v1080, 16
      %v1102 = vrot.slane %v1100, 4
      %v1103 = vshll.u32 %v1080, 16
      %v1105 = vrot.slane %v1103, 5
      %v1106 = vor.u32 %v1102, %v1105
      %v1107 = vrot.slane %v1106, 4
      %v1109 = vshll.u32 %v1081, 16
      %v1111 = vrot.slane %v1109, 5
      %v1112 = vsel %vm1098, %v1107, %v1111
      %v1114 = vshrl.u32 %v1082, 16
      %v1116 = vrot.slane %v1114, 4
      %v1117 = vshll.u32 %v1082, 16
      %v1119 = vrot.slane %v1117, 5
      %v1120 = vor.u32 %v1116, %v1119
      %v1121 = vrot.slane %v1120, 4
      %v1123 = vshll.u32 %v1083, 16
      %v1125 = vrot.slane %v1123, 5
      %v1126 = vsel %vm1098, %v1121, %v1125
      %v1128 = vshrl.u32 %v1084, 16
      %v1130 = vrot.slane %v1128, 4
      %v1131 = vshll.u32 %v1084, 16
      %v1133 = vrot.slane %v1131, 5
      %v1134 = vor.u32 %v1130, %v1133
      %v1135 = vrot.slane %v1134, 4
      %v1137 = vshll.u32 %v1085, 16
      %v1139 = vrot.slane %v1137, 5
      %v1140 = vsel %vm1098, %v1135, %v1139
      %v1142 = vshrl.u32 %v1086, 16
      %v1144 = vrot.slane %v1142, 4
      %v1145 = vshll.u32 %v1086, 16
      %v1147 = vrot.slane %v1145, 5
      %v1148 = vor.u32 %v1144, %v1147
      %v1149 = vrot.slane %v1148, 4
      %v1151 = vshll.u32 %v1087, 16
      %v1153 = vrot.slane %v1151, 5
      %v1154 = vsel %vm1098, %v1149, %v1153
      %v1156 = vshrl.u32 %v1088, 16
      %v1158 = vrot.slane %v1156, 4
      %v1159 = vshll.u32 %v1088, 16
      %v1161 = vrot.slane %v1159, 5
      %v1162 = vor.u32 %v1158, %v1161
      %v1163 = vrot.slane %v1162, 4
      %v1165 = vshll.u32 %v1089, 16
      %v1167 = vrot.slane %v1165, 5
      %v1168 = vsel %vm1098, %v1163, %v1167
      %v1170 = vshrl.u32 %v1090, 16
      %v1172 = vrot.slane %v1170, 4
      %v1173 = vshll.u32 %v1090, 16
      %v1175 = vrot.slane %v1173, 5
      %v1176 = vor.u32 %v1172, %v1175
      %v1177 = vrot.slane %v1176, 4
      %v1179 = vshll.u32 %v1091, 16
      %v1181 = vrot.slane %v1179, 5
      %v1182 = vsel %vm1098, %v1177, %v1181
      %v1184 = vshrl.u32 %v1092, 16
      %v1186 = vrot.slane %v1184, 4
      %v1187 = vshll.u32 %v1092, 16
      %v1189 = vrot.slane %v1187, 5
      %v1190 = vor.u32 %v1186, %v1189
      %v1191 = vrot.slane %v1190, 4
      %v1193 = vshll.u32 %v1093, 16
      %v1195 = vrot.slane %v1193, 5
      %v1196 = vsel %vm1098, %v1191, %v1195
      %v1198 = vshrl.u32 %v1094, 16
      %v1200 = vrot.slane %v1198, 4
      %v1201 = vshll.u32 %v1094, 16
      %v1203 = vrot.slane %v1201, 5
      %v1204 = vor.u32 %v1200, %v1203
      %v1205 = vrot.slane %v1204, 4
      %v1207 = vshll.u32 %v1095, 16
      %v1209 = vrot.slane %v1207, 5
      %v1210 = vsel %vm1098, %v1205, %v1209
      %v1211 = vld [vmem:[%s4] sm:$0xf]
      %v1212 = vld [vmem:[%s4 + $0x4] sm:$0xf]
      %v1213 = vld [vmem:[%s4 + $0x8] sm:$0xf]
      %v1214 = vld [vmem:[%s4 + $0xc] sm:$0xf]
      %v1215 = vld [vmem:[%s4 + $0x10] sm:$0xf]
      %v1216 = vld [vmem:[%s4 + $0x14] sm:$0xf]
      %v1217 = vld [vmem:[%s4 + $0x18] sm:$0xf]
      %v1218 = vld [vmem:[%s4 + $0x1c] sm:$0xf]
      %v1219 = vld [vmem:[%s4 + $0x20] sm:$0xf]
      %v1220 = vld [vmem:[%s4 + $0x24] sm:$0xf]
      %v1221 = vld [vmem:[%s4 + $0x28] sm:$0xf]
      %v1222 = vld [vmem:[%s4 + $0x2c] sm:$0xf]
      %v1223 = vld [vmem:[%s4 + $0x30] sm:$0xf]
      %v1224 = vld [vmem:[%s4 + $0x34] sm:$0xf]
      %v1225 = vld [vmem:[%s4 + $0x38] sm:$0xf]
      %v1226 = vld [vmem:[%s4 + $0x3c] sm:$0xf]
      %v1227 = vunpack.c.l.b16 %v1112
      %v1228 = vunpack.c.l.b16 %v1126
      %v1229 = vunpack.c.l.b16 %v1140
      %v1230 = vunpack.c.l.b16 %v1154
      %v1231 = vunpack.c.l.b16 %v1168
      %v1232 = vunpack.c.l.b16 %v1182
      %v1233 = vunpack.c.l.b16 %v1196
      %v1234 = vunpack.c.l.b16 %v1210
      %v1235 = vpack.c.b16 %v1228, %v1227
      %v1236 = vpack.c.b16 %v1230, %v1229
      %v1237 = vpack.c.b16 %v1232, %v1231
      %v1238 = vpack.c.b16 %v1234, %v1233
      %v1259 = vunpack.c.l.b16 %v1211
      %v1260 = vunpack.c.l.b16 %v1212
      %v1261 = vunpack.c.l.b16 %v1213
      %v1262 = vunpack.c.l.b16 %v1214
      %v1263 = vunpack.c.l.b16 %v1215
      %v1264 = vunpack.c.l.b16 %v1216
      %v1265 = vunpack.c.l.b16 %v1217
      %v1266 = vunpack.c.l.b16 %v1218
      %v1267 = vunpack.c.l.b16 %v1219
      %v1268 = vunpack.c.l.b16 %v1220
      %v1269 = vunpack.c.l.b16 %v1221
      %v1270 = vunpack.c.l.b16 %v1222
      %v1271 = vunpack.c.l.b16 %v1223
      %v1272 = vunpack.c.l.b16 %v1224
      %v1273 = vunpack.c.l.b16 %v1225
      %v1274 = vunpack.c.l.b16 %v1226
      %v1275 = vpack.c.b16 %v1260, %v1259
      %v1276 = vpack.c.b16 %v1262, %v1261
      %v1277 = vpack.c.b16 %v1264, %v1263
      %v1278 = vpack.c.b16 %v1266, %v1265
      %v1279 = vpack.c.b16 %v1268, %v1267
      %v1280 = vpack.c.b16 %v1270, %v1269
      %v1281 = vpack.c.b16 %v1272, %v1271
      %v1282 = vpack.c.b16 %v1274, %v1273
      %1291 = vmatprep.subr.bf16.mxu0 0
      %1292 = vmatpush1.bf16.msra.mxu0 %v1275
      %1293 = vmatprep.subr.bf16.mxu0 0
      %1294 = vmatpush1.bf16.msra.mxu0 %v1276
      %1295 = vmatprep.subr.bf16.mxu0 0
      %1296 = vmatpush1.bf16.msra.mxu0 %v1277
      %1297 = vmatprep.subr.bf16.mxu0 0
      %1298 = vmatpush1.bf16.msra.mxu0 %v1278
      %1299 = vmatprep.subr.bf16.mxu0 0
      %1300 = vmatpush1.bf16.msra.mxu0 %v1279
      %1301 = vmatprep.subr.bf16.mxu0 0
      %1302 = vmatpush1.bf16.msra.mxu0 %v1280
      %1303 = vmatprep.subr.bf16.mxu0 0
      %1304 = vmatpush1.bf16.msra.mxu0 %v1281
      %1305 = vmatprep.subr.bf16.mxu0 0
      %1306 = vmatpush1.bf16.msra.mxu0 %v1282
      %1307 = vmatprep.subr.bf16.mxu0 0
      %1308 = vmatpush1.bf16.msra.mxu0 0
      %1309 = vmatprep.subr.bf16.mxu0 0
      %1310 = vmatpush1.bf16.msra.mxu0 0
      %1311 = vmatprep.subr.bf16.mxu0 0
      %1312 = vmatpush1.bf16.msra.mxu0 0
      %1313 = vmatprep.subr.bf16.mxu0 0
      %1314 = vmatpush1.bf16.msra.mxu0 0
      %1315 = vmatprep.subr.bf16.mxu0 0
      %1316 = vmatpush1.bf16.msra.mxu0 0
      %1317 = vmatprep.subr.bf16.mxu0 0
      %1318 = vmatpush1.bf16.msra.mxu0 0
      %1319 = vmatprep.subr.bf16.mxu0 0
      %1320 = vmatpush1.bf16.msra.mxu0 0
      %1321 = vmatprep.subr.bf16.mxu0 0
      %1322 = vmatpush1.bf16.msra.mxu0 0
      %1323 = vmatprep.mubr.bf16.mxu0 0
      %1324 = vmatmul.mubr.bf16.gmra.mrb[0].mxu0 %v1235
      %v1325 = vpop.f32.mrb[0].mxu0
      %v1326 = vadd.f32 0.0, %v1325
      %v1327 = vpop.f32.mrb[0].mxu0
      %v1328 = vpop.f32.mrb[0].mxu0
      %v1329 = vadd.f32 0.0, %v1328
      %v1330 = vpop.f32.mrb[0].mxu0
      %1331 = vmatprep.mubr.bf16.mxu0 0
      %1332 = vmatmul.mubr.bf16.gmra.mrb[0].mxu0 %v1236
      %v1333 = vpop.f32.mrb[0].mxu0
      %v1334 = vadd.f32 0.0, %v1333
      %v1335 = vpop.f32.mrb[0].mxu0
      %v1336 = vpop.f32.mrb[0].mxu0
      %v1337 = vadd.f32 0.0, %v1336
      %v1338 = vpop.f32.mrb[0].mxu0
      %1339 = vmatprep.mubr.bf16.mxu0 0
      %1340 = vmatmul.mubr.bf16.gmra.mrb[0].mxu0 %v1237
      %v1341 = vpop.f32.mrb[0].mxu0
      %v1342 = vadd.f32 0.0, %v1341
      %v1343 = vpop.f32.mrb[0].mxu0
      %v1344 = vpop.f32.mrb[0].mxu0
      %v1345 = vadd.f32 0.0, %v1344
      %v1346 = vpop.f32.mrb[0].mxu0
      %1347 = vmatprep.mubr.bf16.mxu0 0
      %1348 = vmatmul.mubr.bf16.gmra.mrb[0].mxu0 %v1238
      %v1349 = vpop.f32.mrb[0].mxu0
      %v1350 = vadd.f32 0.0, %v1349
      %v1351 = vpop.f32.mrb[0].mxu0
      %v1352 = vpop.f32.mrb[0].mxu0
      %v1353 = vadd.f32 0.0, %v1352
      %v1354 = vpop.f32.mrb[0].mxu0
      %1355 = vdwg.mxu0
      %v1356 = vadd.f32 %v1050, %v1326
      %v1357 = vadd.f32 %v1053, %v1329
      %v1358 = vadd.f32 %v1058, %v1334
      %v1359 = vadd.f32 %v1061, %v1337
      %v1360 = vadd.f32 %v1066, %v1342
      %v1361 = vadd.f32 %v1069, %v1345
      %v1362 = vadd.f32 %v1074, %v1350
      %v1363 = vadd.f32 %v1077, %v1353
      %v1364 = vld [vmem:[%s327 + $0x8] sm:$0xf]
      %v1365 = vld [vmem:[%s327 + $0x18] sm:$0x1]
      %v1366 = vld [vmem:[%s327 + $0x28] sm:$0xf]
      %v1367 = vld [vmem:[%s327 + $0x38] sm:$0x1]
      %v1368 = vld [vmem:[%s327 + $0x48] sm:$0xf]
      %v1369 = vld [vmem:[%s327 + $0x58] sm:$0x1]
      %v1370 = vld [vmem:[%s327 + $0x68] sm:$0xf]
      %v1371 = vld [vmem:[%s327 + $0x78] sm:$0x1]
      %v1372 = vld [vmem:[%s327 + $0x88] sm:$0xf]
      %v1373 = vld [vmem:[%s327 + $0x98] sm:$0x1]
      %v1374 = vld [vmem:[%s327 + $0xa8] sm:$0xf]
      %v1375 = vld [vmem:[%s327 + $0xb8] sm:$0x1]
      %v1376 = vld [vmem:[%s327 + $0xc8] sm:$0xf]
      %v1377 = vld [vmem:[%s327 + $0xd8] sm:$0x1]
      %v1378 = vld [vmem:[%s327 + $0xe8] sm:$0xf]
      %v1379 = vld [vmem:[%s327 + $0xf8] sm:$0x1]
      %v1381 = vshrl.u32 %v1364, 16
      %v1383 = vrot.slane %v1381, 4
      %v1384 = vshll.u32 %v1364, 16
      %v1386 = vrot.slane %v1384, 5
      %v1387 = vor.u32 %v1383, %v1386
      %v1388 = vrot.slane %v1387, 4
      %v1390 = vshll.u32 %v1365, 16
      %v1392 = vrot.slane %v1390, 5
      %v1393 = vsel %vm1098, %v1388, %v1392
      %v1395 = vshrl.u32 %v1366, 16
      %v1397 = vrot.slane %v1395, 4
      %v1398 = vshll.u32 %v1366, 16
      %v1400 = vrot.slane %v1398, 5
      %v1401 = vor.u32 %v1397, %v1400
      %v1402 = vrot.slane %v1401, 4
      %v1404 = vshll.u32 %v1367, 16
      %v1406 = vrot.slane %v1404, 5
      %v1407 = vsel %vm1098, %v1402, %v1406
      %v1409 = vshrl.u32 %v1368, 16
      %v1411 = vrot.slane %v1409, 4
      %v1412 = vshll.u32 %v1368, 16
      %v1414 = vrot.slane %v1412, 5
      %v1415 = vor.u32 %v1411, %v1414
      %v1416 = vrot.slane %v1415, 4
      %v1418 = vshll.u32 %v1369, 16
      %v1420 = vrot.slane %v1418, 5
      %v1421 = vsel %vm1098, %v1416, %v1420
      %v1423 = vshrl.u32 %v1370, 16
      %v1425 = vrot.slane %v1423, 4
      %v1426 = vshll.u32 %v1370, 16
      %v1428 = vrot.slane %v1426, 5
      %v1429 = vor.u32 %v1425, %v1428
      %v1430 = vrot.slane %v1429, 4
      %v1432 = vshll.u32 %v1371, 16
      %v1434 = vrot.slane %v1432, 5
      %v1435 = vsel %vm1098, %v1430, %v1434
      %v1437 = vshrl.u32 %v1372, 16
      %v1439 = vrot.slane %v1437, 4
      %v1440 = vshll.u32 %v1372, 16
      %v1442 = vrot.slane %v1440, 5
      %v1443 = vor.u32 %v1439, %v1442
      %v1444 = vrot.slane %v1443, 4
      %v1446 = vshll.u32 %v1373, 16
      %v1448 = vrot.slane %v1446, 5
      %v1449 = vsel %vm1098, %v1444, %v1448
      %v1451 = vshrl.u32 %v1374, 16
      %v1453 = vrot.slane %v1451, 4
      %v1454 = vshll.u32 %v1374, 16
      %v1456 = vrot.slane %v1454, 5
      %v1457 = vor.u32 %v1453, %v1456
      %v1458 = vrot.slane %v1457, 4
      %v1460 = vshll.u32 %v1375, 16
      %v1462 = vrot.slane %v1460, 5
      %v1463 = vsel %vm1098, %v1458, %v1462
      %v1465 = vshrl.u32 %v1376, 16
      %v1467 = vrot.slane %v1465, 4
      %v1468 = vshll.u32 %v1376, 16
      %v1470 = vrot.slane %v1468, 5
      %v1471 = vor.u32 %v1467, %v1470
      %v1472 = vrot.slane %v1471, 4
      %v1474 = vshll.u32 %v1377, 16
      %v1476 = vrot.slane %v1474, 5
      %v1477 = vsel %vm1098, %v1472, %v1476
      %v1479 = vshrl.u32 %v1378, 16
      %v1481 = vrot.slane %v1479, 4
      %v1482 = vshll.u32 %v1378, 16
      %v1484 = vrot.slane %v1482, 5
      %v1485 = vor.u32 %v1481, %v1484
      %v1486 = vrot.slane %v1485, 4
      %v1488 = vshll.u32 %v1379, 16
      %v1490 = vrot.slane %v1488, 5
      %v1491 = vsel %vm1098, %v1486, %v1490
      %s1492 = scalar_lea.vmem %s4, 64
      %v1493 = vld [vmem:[%s1492] sm:$0xf]
      %v1494 = vld [vmem:[%s1492 + $0x4] sm:$0xf]
      %v1495 = vld [vmem:[%s1492 + $0x8] sm:$0xf]
      %v1496 = vld [vmem:[%s1492 + $0xc] sm:$0xf]
      %v1497 = vld [vmem:[%s1492 + $0x10] sm:$0xf]
      %v1498 = vld [vmem:[%s1492 + $0x14] sm:$0xf]
      %v1499 = vld [vmem:[%s1492 + $0x18] sm:$0xf]
      %v1500 = vld [vmem:[%s1492 + $0x1c] sm:$0xf]
      %v1501 = vld [vmem:[%s1492 + $0x20] sm:$0xf]
      %v1502 = vld [vmem:[%s1492 + $0x24] sm:$0xf]
      %v1503 = vld [vmem:[%s1492 + $0x28] sm:$0xf]
      %v1504 = vld [vmem:[%s1492 + $0x2c] sm:$0xf]
      %v1505 = vld [vmem:[%s1492 + $0x30] sm:$0xf]
      %v1506 = vld [vmem:[%s1492 + $0x34] sm:$0xf]
      %v1507 = vld [vmem:[%s1492 + $0x38] sm:$0xf]
      %v1508 = vld [vmem:[%s1492 + $0x3c] sm:$0xf]
      %v1509 = vunpack.c.l.b16 %v1393
      %v1510 = vunpack.c.l.b16 %v1407
      %v1511 = vunpack.c.l.b16 %v1421
      %v1512 = vunpack.c.l.b16 %v1435
      %v1513 = vunpack.c.l.b16 %v1449
      %v1514 = vunpack.c.l.b16 %v1463
      %v1515 = vunpack.c.l.b16 %v1477
      %v1516 = vunpack.c.l.b16 %v1491
      %v1517 = vpack.c.b16 %v1510, %v1509
      %v1518 = vpack.c.b16 %v1512, %v1511
      %v1519 = vpack.c.b16 %v1514, %v1513
      %v1520 = vpack.c.b16 %v1516, %v1515
      %v1541 = vunpack.c.l.b16 %v1493
      %v1542 = vunpack.c.l.b16 %v1494
      %v1543 = vunpack.c.l.b16 %v1495
      %v1544 = vunpack.c.l.b16 %v1496
      %v1545 = vunpack.c.l.b16 %v1497
      %v1546 = vunpack.c.l.b16 %v1498
      %v1547 = vunpack.c.l.b16 %v1499
      %v1548 = vunpack.c.l.b16 %v1500
      %v1549 = vunpack.c.l.b16 %v1501
      %v1550 = vunpack.c.l.b16 %v1502
      %v1551 = vunpack.c.l.b16 %v1503
      %v1552 = vunpack.c.l.b16 %v1504
      %v1553 = vunpack.c.l.b16 %v1505
      %v1554 = vunpack.c.l.b16 %v1506
      %v1555 = vunpack.c.l.b16 %v1507
      %v1556 = vunpack.c.l.b16 %v1508
      %v1557 = vpack.c.b16 %v1542, %v1541
      %v1558 = vpack.c.b16 %v1544, %v1543
      %v1559 = vpack.c.b16 %v1546, %v1545
      %v1560 = vpack.c.b16 %v1548, %v1547
      %v1561 = vpack.c.b16 %v1550, %v1549
      %v1562 = vpack.c.b16 %v1552, %v1551
      %v1563 = vpack.c.b16 %v1554, %v1553
      %v1564 = vpack.c.b16 %v1556, %v1555
      %1573 = vmatprep.subr.bf16.mxu0 0
      %1574 = vmatpush1.bf16.msra.mxu0 %v1557
      %1575 = vmatprep.subr.bf16.mxu0 0
      %1576 = vmatpush1.bf16.msra.mxu0 %v1558
      %1577 = vmatprep.subr.bf16.mxu0 0
      %1578 = vmatpush1.bf16.msra.mxu0 %v1559
      %1579 = vmatprep.subr.bf16.mxu0 0
      %1580 = vmatpush1.bf16.msra.mxu0 %v1560
      %1581 = vmatprep.subr.bf16.mxu0 0
      %1582 = vmatpush1.bf16.msra.mxu0 %v1561
      %1583 = vmatprep.subr.bf16.mxu0 0
      %1584 = vmatpush1.bf16.msra.mxu0 %v1562
      %1585 = vmatprep.subr.bf16.mxu0 0
      %1586 = vmatpush1.bf16.msra.mxu0 %v1563
      %1587 = vmatprep.subr.bf16.mxu0 0
      %1588 = vmatpush1.bf16.msra.mxu0 %v1564
      %1589 = vmatprep.subr.bf16.mxu0 0
      %1590 = vmatpush1.bf16.msra.mxu0 0
      %1591 = vmatprep.subr.bf16.mxu0 0
      %1592 = vmatpush1.bf16.msra.mxu0 0
      %1593 = vmatprep.subr.bf16.mxu0 0
      %1594 = vmatpush1.bf16.msra.mxu0 0
      %1595 = vmatprep.subr.bf16.mxu0 0
      %1596 = vmatpush1.bf16.msra.mxu0 0
      %1597 = vmatprep.subr.bf16.mxu0 0
      %1598 = vmatpush1.bf16.msra.mxu0 0
      %1599 = vmatprep.subr.bf16.mxu0 0
      %1600 = vmatpush1.bf16.msra.mxu0 0
      %1601 = vmatprep.subr.bf16.mxu0 0
      %1602 = vmatpush1.bf16.msra.mxu0 0
      %1603 = vmatprep.subr.bf16.mxu0 0
      %1604 = vmatpush1.bf16.msra.mxu0 0
      %1605 = vmatprep.mubr.bf16.mxu0 0
      %1606 = vmatmul.mubr.bf16.gmra.mrb[0].mxu0 %v1517
      %v1607 = vpop.f32.mrb[0].mxu0
      %v1608 = vadd.f32 0.0, %v1607
      %v1609 = vpop.f32.mrb[0].mxu0
      %v1610 = vpop.f32.mrb[0].mxu0
      %v1611 = vadd.f32 0.0, %v1610
      %v1612 = vpop.f32.mrb[0].mxu0
      %1613 = vmatprep.mubr.bf16.mxu0 0
      %1614 = vmatmul.mubr.bf16.gmra.mrb[0].mxu0 %v1518
      %v1615 = vpop.f32.mrb[0].mxu0
      %v1616 = vadd.f32 0.0, %v1615
      %v1617 = vpop.f32.mrb[0].mxu0
      %v1618 = vpop.f32.mrb[0].mxu0
      %v1619 = vadd.f32 0.0, %v1618
      %v1620 = vpop.f32.mrb[0].mxu0
      %1621 = vmatprep.mubr.bf16.mxu0 0
      %1622 = vmatmul.mubr.bf16.gmra.mrb[0].mxu0 %v1519
      %v1623 = vpop.f32.mrb[0].mxu0
      %v1624 = vadd.f32 0.0, %v1623
      %v1625 = vpop.f32.mrb[0].mxu0
      %v1626 = vpop.f32.mrb[0].mxu0
      %v1627 = vadd.f32 0.0, %v1626
      %v1628 = vpop.f32.mrb[0].mxu0
      %1629 = vmatprep.mubr.bf16.mxu0 0
      %1630 = vmatmul.mubr.bf16.gmra.mrb[0].mxu0 %v1520
      %v1631 = vpop.f32.mrb[0].mxu0
      %v1632 = vadd.f32 0.0, %v1631
      %v1633 = vpop.f32.mrb[0].mxu0
      %v1634 = vpop.f32.mrb[0].mxu0
      %v1635 = vadd.f32 0.0, %v1634
      %v1636 = vpop.f32.mrb[0].mxu0
      %1637 = vdwg.mxu0
      %v1638 = vadd.f32 %v1356, %v1608
      %v1639 = vadd.f32 %v1357, %v1611
      %v1640 = vadd.f32 %v1358, %v1616
      %v1641 = vadd.f32 %v1359, %v1619
      %v1642 = vadd.f32 %v1360, %v1624
      %v1643 = vadd.f32 %v1361, %v1627
      %v1644 = vadd.f32 %v1362, %v1632
      %v1645 = vadd.f32 %v1363, %v1635
      %v1646 = vld [vmem:[%s436] sm:$0xf]
      %v1647 = vld [vmem:[%s436 + $0x10] sm:$0x1]
      %v1648 = vld [vmem:[%s436 + $0x20] sm:$0xf]
      %v1649 = vld [vmem:[%s436 + $0x30] sm:$0x1]
      %v1650 = vld [vmem:[%s436 + $0x40] sm:$0xf]
      %v1651 = vld [vmem:[%s436 + $0x50] sm:$0x1]
      %v1652 = vld [vmem:[%s436 + $0x60] sm:$0xf]
      %v1653 = vld [vmem:[%s436 + $0x70] sm:$0x1]
      %v1654 = vld [vmem:[%s436 + $0x80] sm:$0xf]
      %v1655 = vld [vmem:[%s436 + $0x90] sm:$0x1]
      %v1656 = vld [vmem:[%s436 + $0xa0] sm:$0xf]
      %v1657 = vld [vmem:[%s436 + $0xb0] sm:$0x1]
      %v1658 = vld [vmem:[%s436 + $0xc0] sm:$0xf]
      %v1659 = vld [vmem:[%s436 + $0xd0] sm:$0x1]
      %v1660 = vld [vmem:[%s436 + $0xe0] sm:$0xf]
      %v1661 = vld [vmem:[%s436 + $0xf0] sm:$0x1]
      %v1663 = vshrl.u32 %v1646, 16
      %v1665 = vrot.slane %v1663, 4
      %v1666 = vshll.u32 %v1646, 16
      %v1668 = vrot.slane %v1666, 5
      %v1669 = vor.u32 %v1665, %v1668
      %v1670 = vrot.slane %v1669, 4
      %v1672 = vshll.u32 %v1647, 16
      %v1674 = vrot.slane %v1672, 5
      %v1675 = vsel %vm1098, %v1670, %v1674
      %v1677 = vshrl.u32 %v1648, 16
      %v1679 = vrot.slane %v1677, 4
      %v1680 = vshll.u32 %v1648, 16
      %v1682 = vrot.slane %v1680, 5
      %v1683 = vor.u32 %v1679, %v1682
      %v1684 = vrot.slane %v1683, 4
      %v1686 = vshll.u32 %v1649, 16
      %v1688 = vrot.slane %v1686, 5
      %v1689 = vsel %vm1098, %v1684, %v1688
      %v1691 = vshrl.u32 %v1650, 16
      %v1693 = vrot.slane %v1691, 4
      %v1694 = vshll.u32 %v1650, 16
      %v1696 = vrot.slane %v1694, 5
      %v1697 = vor.u32 %v1693, %v1696
      %v1698 = vrot.slane %v1697, 4
      %v1700 = vshll.u32 %v1651, 16
      %v1702 = vrot.slane %v1700, 5
      %v1703 = vsel %vm1098, %v1698, %v1702
      %v1705 = vshrl.u32 %v1652, 16
      %v1707 = vrot.slane %v1705, 4
      %v1708 = vshll.u32 %v1652, 16
      %v1710 = vrot.slane %v1708, 5
      %v1711 = vor.u32 %v1707, %v1710
      %v1712 = vrot.slane %v1711, 4
      %v1714 = vshll.u32 %v1653, 16
      %v1716 = vrot.slane %v1714, 5
      %v1717 = vsel %vm1098, %v1712, %v1716
      %v1719 = vshrl.u32 %v1654, 16
      %v1721 = vrot.slane %v1719, 4
      %v1722 = vshll.u32 %v1654, 16
      %v1724 = vrot.slane %v1722, 5
      %v1725 = vor.u32 %v1721, %v1724
      %v1726 = vrot.slane %v1725, 4
      %v1728 = vshll.u32 %v1655, 16
      %v1730 = vrot.slane %v1728, 5
      %v1731 = vsel %vm1098, %v1726, %v1730
      %v1733 = vshrl.u32 %v1656, 16
      %v1735 = vrot.slane %v1733, 4
      %v1736 = vshll.u32 %v1656, 16
      %v1738 = vrot.slane %v1736, 5
      %v1739 = vor.u32 %v1735, %v1738
      %v1740 = vrot.slane %v1739, 4
      %v1742 = vshll.u32 %v1657, 16
      %v1744 = vrot.slane %v1742, 5
      %v1745 = vsel %vm1098, %v1740, %v1744
      %v1747 = vshrl.u32 %v1658, 16
      %v1749 = vrot.slane %v1747, 4
      %v1750 = vshll.u32 %v1658, 16
      %v1752 = vrot.slane %v1750, 5
      %v1753 = vor.u32 %v1749, %v1752
      %v1754 = vrot.slane %v1753, 4
      %v1756 = vshll.u32 %v1659, 16
      %v1758 = vrot.slane %v1756, 5
      %v1759 = vsel %vm1098, %v1754, %v1758
      %v1761 = vshrl.u32 %v1660, 16
      %v1763 = vrot.slane %v1761, 4
      %v1764 = vshll.u32 %v1660, 16
      %v1766 = vrot.slane %v1764, 5
      %v1767 = vor.u32 %v1763, %v1766
      %v1768 = vrot.slane %v1767, 4
      %v1770 = vshll.u32 %v1661, 16
      %v1772 = vrot.slane %v1770, 5
      %v1773 = vsel %vm1098, %v1768, %v1772
      %v1774 = vld [vmem:[%s5] sm:$0xf]
      %v1775 = vld [vmem:[%s5 + $0x4] sm:$0xf]
      %v1776 = vld [vmem:[%s5 + $0x8] sm:$0xf]
      %v1777 = vld [vmem:[%s5 + $0xc] sm:$0xf]
      %v1778 = vld [vmem:[%s5 + $0x10] sm:$0xf]
      %v1779 = vld [vmem:[%s5 + $0x14] sm:$0xf]
      %v1780 = vld [vmem:[%s5 + $0x18] sm:$0xf]
      %v1781 = vld [vmem:[%s5 + $0x1c] sm:$0xf]
      %v1782 = vld [vmem:[%s5 + $0x20] sm:$0xf]
      %v1783 = vld [vmem:[%s5 + $0x24] sm:$0xf]
      %v1784 = vld [vmem:[%s5 + $0x28] sm:$0xf]
      %v1785 = vld [vmem:[%s5 + $0x2c] sm:$0xf]
      %v1786 = vld [vmem:[%s5 + $0x30] sm:$0xf]
      %v1787 = vld [vmem:[%s5 + $0x34] sm:$0xf]
      %v1788 = vld [vmem:[%s5 + $0x38] sm:$0xf]
      %v1789 = vld [vmem:[%s5 + $0x3c] sm:$0xf]
      %v1790 = vunpack.c.l.b16 %v1675
      %v1791 = vunpack.c.l.b16 %v1689
      %v1792 = vunpack.c.l.b16 %v1703
      %v1793 = vunpack.c.l.b16 %v1717
      %v1794 = vunpack.c.l.b16 %v1731
      %v1795 = vunpack.c.l.b16 %v1745
      %v1796 = vunpack.c.l.b16 %v1759
      %v1797 = vunpack.c.l.b16 %v1773
      %v1798 = vpack.c.b16 %v1791, %v1790
      %v1799 = vpack.c.b16 %v1793, %v1792
      %v1800 = vpack.c.b16 %v1795, %v1794
      %v1801 = vpack.c.b16 %v1797, %v1796
      %v1822 = vunpack.c.l.b16 %v1774
      %v1823 = vunpack.c.l.b16 %v1775
      %v1824 = vunpack.c.l.b16 %v1776
      %v1825 = vunpack.c.l.b16 %v1777
      %v1826 = vunpack.c.l.b16 %v1778
      %v1827 = vunpack.c.l.b16 %v1779
      %v1828 = vunpack.c.l.b16 %v1780
      %v1829 = vunpack.c.l.b16 %v1781
      %v1830 = vunpack.c.l.b16 %v1782
      %v1831 = vunpack.c.l.b16 %v1783
      %v1832 = vunpack.c.l.b16 %v1784
      %v1833 = vunpack.c.l.b16 %v1785
      %v1834 = vunpack.c.l.b16 %v1786
      %v1835 = vunpack.c.l.b16 %v1787
      %v1836 = vunpack.c.l.b16 %v1788
      %v1837 = vunpack.c.l.b16 %v1789
      %v1838 = vpack.c.b16 %v1823, %v1822
      %v1839 = vpack.c.b16 %v1825, %v1824
      %v1840 = vpack.c.b16 %v1827, %v1826
      %v1841 = vpack.c.b16 %v1829, %v1828
      %v1842 = vpack.c.b16 %v1831, %v1830
      %v1843 = vpack.c.b16 %v1833, %v1832
      %v1844 = vpack.c.b16 %v1835, %v1834
      %v1845 = vpack.c.b16 %v1837, %v1836
      %1854 = vmatprep.subr.bf16.mxu0 0
      %1855 = vmatpush1.bf16.msra.mxu0 %v1838
      %1856 = vmatprep.subr.bf16.mxu0 0
      %1857 = vmatpush1.bf16.msra.mxu0 %v1839
      %1858 = vmatprep.subr.bf16.mxu0 0
      %1859 = vmatpush1.bf16.msra.mxu0 %v1840
      %1860 = vmatprep.subr.bf16.mxu0 0
      %1861 = vmatpush1.bf16.msra.mxu0 %v1841
      %1862 = vmatprep.subr.bf16.mxu0 0
      %1863 = vmatpush1.bf16.msra.mxu0 %v1842
      %1864 = vmatprep.subr.bf16.mxu0 0
      %1865 = vmatpush1.bf16.msra.mxu0 %v1843
      %1866 = vmatprep.subr.bf16.mxu0 0
      %1867 = vmatpush1.bf16.msra.mxu0 %v1844
      %1868 = vmatprep.subr.bf16.mxu0 0
      %1869 = vmatpush1.bf16.msra.mxu0 %v1845
      %1870 = vmatprep.subr.bf16.mxu0 0
      %1871 = vmatpush1.bf16.msra.mxu0 0
      %1872 = vmatprep.subr.bf16.mxu0 0
      %1873 = vmatpush1.bf16.msra.mxu0 0
      %1874 = vmatprep.subr.bf16.mxu0 0
      %1875 = vmatpush1.bf16.msra.mxu0 0
      %1876 = vmatprep.subr.bf16.mxu0 0
      %1877 = vmatpush1.bf16.msra.mxu0 0
      %1878 = vmatprep.subr.bf16.mxu0 0
      %1879 = vmatpush1.bf16.msra.mxu0 0
      %1880 = vmatprep.subr.bf16.mxu0 0
      %1881 = vmatpush1.bf16.msra.mxu0 0
      %1882 = vmatprep.subr.bf16.mxu0 0
      %1883 = vmatpush1.bf16.msra.mxu0 0
      %1884 = vmatprep.subr.bf16.mxu0 0
      %1885 = vmatpush1.bf16.msra.mxu0 0
      %1886 = vmatprep.mubr.bf16.mxu0 0
      %1887 = vmatmul.mubr.bf16.gmra.mrb[0].mxu0 %v1798
      %v1888 = vpop.f32.mrb[0].mxu0
      %v1889 = vadd.f32 0.0, %v1888
      %v1890 = vpop.f32.mrb[0].mxu0
      %v1891 = vpop.f32.mrb[0].mxu0
      %v1892 = vadd.f32 0.0, %v1891
      %v1893 = vpop.f32.mrb[0].mxu0
      %1894 = vmatprep.mubr.bf16.mxu0 0
      %1895 = vmatmul.mubr.bf16.gmra.mrb[0].mxu0 %v1799
      %v1896 = vpop.f32.mrb[0].mxu0
      %v1897 = vadd.f32 0.0, %v1896
      %v1898 = vpop.f32.mrb[0].mxu0
      %v1899 = vpop.f32.mrb[0].mxu0
      %v1900 = vadd.f32 0.0, %v1899
      %v1901 = vpop.f32.mrb[0].mxu0
      %1902 = vmatprep.mubr.bf16.mxu0 0
      %1903 = vmatmul.mubr.bf16.gmra.mrb[0].mxu0 %v1800
      %v1904 = vpop.f32.mrb[0].mxu0
      %v1905 = vadd.f32 0.0, %v1904
      %v1906 = vpop.f32.mrb[0].mxu0
      %v1907 = vpop.f32.mrb[0].mxu0
      %v1908 = vadd.f32 0.0, %v1907
      %v1909 = vpop.f32.mrb[0].mxu0
      %1910 = vmatprep.mubr.bf16.mxu0 0
      %1911 = vmatmul.mubr.bf16.gmra.mrb[0].mxu0 %v1801
      %v1912 = vpop.f32.mrb[0].mxu0
      %v1913 = vadd.f32 0.0, %v1912
      %v1914 = vpop.f32.mrb[0].mxu0
      %v1915 = vpop.f32.mrb[0].mxu0
      %v1916 = vadd.f32 0.0, %v1915
      %v1917 = vpop.f32.mrb[0].mxu0
      %1918 = vdwg.mxu0
      %v1919 = vadd.f32 %v1638, %v1889
      %v1920 = vadd.f32 %v1639, %v1892
      %v1921 = vadd.f32 %v1640, %v1897
      %v1922 = vadd.f32 %v1641, %v1900
      %v1923 = vadd.f32 %v1642, %v1905
      %v1924 = vadd.f32 %v1643, %v1908
      %v1925 = vadd.f32 %v1644, %v1913
      %v1926 = vadd.f32 %v1645, %v1916
      %v1927 = vld [vmem:[%s6] sm:$0x1]
      %v1929 = vlaneseq
      %v1930 = vshrl.u32 %v1929, 7
      %v1931 = vsub.s32 0, %v1930
      %v1932 = vrot.slane %v1927, %v1931
      %v1934 = vadd.f32 %v1919, %v1932
      %v1935 = vadd.f32 %v1920, %v1932
      %v1936 = vadd.f32 %v1921, %v1932
      %v1937 = vadd.f32 %v1922, %v1932
      %v1938 = vadd.f32 %v1923, %v1932
      %v1939 = vadd.f32 %v1924, %v1932
      %v1940 = vadd.f32 %v1925, %v1932
      %v1941 = vadd.f32 %v1926, %v1932
      %v1942 = vmax.f32 %v1934, 0.0
      %v1943 = vmax.f32 %v1935, 0.0
      %v1944 = vmax.f32 %v1936, 0.0
      %v1945 = vmax.f32 %v1937, 0.0
      %v1946 = vmax.f32 %v1938, 0.0
      %v1947 = vmax.f32 %v1939, 0.0
      %v1948 = vmax.f32 %v1940, 0.0
      %v1949 = vmax.f32 %v1941, 0.0
      %1950 = vst [vmem:[%s339 + $0x1] sm:$0xff] %v1942
      %1951 = vst [vmem:[%s339 + $0x11] sm:$0xff] %v1943
      %1952 = vst [vmem:[%s339 + $0x21] sm:$0xff] %v1944
      %1953 = vst [vmem:[%s339 + $0x31] sm:$0xff] %v1945
      %1954 = vst [vmem:[%s339 + $0x41] sm:$0xff] %v1946
      %1955 = vst [vmem:[%s339 + $0x51] sm:$0xff] %v1947
      %1956 = vst [vmem:[%s339 + $0x61] sm:$0xff] %v1948
      %1957 = vst [vmem:[%s339 + $0x71] sm:$0xff] %v1949
      %v1958 = vld [vmem:[%s327 + $0xc] sm:$0xf]
      %v1959 = vld [vmem:[%s327 + $0x2c] sm:$0xf]
      %v1960 = vld [vmem:[%s327 + $0x4c] sm:$0xf]
      %v1961 = vld [vmem:[%s327 + $0x6c] sm:$0xf]
      %v1962 = vld [vmem:[%s327 + $0x8c] sm:$0xf]
      %v1963 = vld [vmem:[%s327 + $0xac] sm:$0xf]
      %v1964 = vld [vmem:[%s327 + $0xcc] sm:$0xf]
      %v1965 = vld [vmem:[%s327 + $0xec] sm:$0xf]
      %v1966 = vld [vmem:[%s1] sm:$0xf]
      %v1967 = vld [vmem:[%s1 + $0x4] sm:$0xf]
      %v1968 = vld [vmem:[%s1 + $0x8] sm:$0xf]
      %v1969 = vld [vmem:[%s1 + $0xc] sm:$0xf]
      %v1970 = vld [vmem:[%s1 + $0x10] sm:$0xf]
      %v1971 = vld [vmem:[%s1 + $0x14] sm:$0xf]
      %v1972 = vld [vmem:[%s1 + $0x18] sm:$0xf]
      %v1973 = vld [vmem:[%s1 + $0x1c] sm:$0xf]
      %v1974 = vld [vmem:[%s1 + $0x20] sm:$0xf]
      %v1975 = vld [vmem:[%s1 + $0x24] sm:$0xf]
      %v1976 = vld [vmem:[%s1 + $0x28] sm:$0xf]
      %v1977 = vld [vmem:[%s1 + $0x2c] sm:$0xf]
      %v1978 = vld [vmem:[%s1 + $0x30] sm:$0xf]
      %v1979 = vld [vmem:[%s1 + $0x34] sm:$0xf]
      %v1980 = vld [vmem:[%s1 + $0x38] sm:$0xf]
      %v1981 = vld [vmem:[%s1 + $0x3c] sm:$0xf]
      %v1982 = vld [vmem:[%s7] sm:$0x1]
      %v1984 = vlaneseq
      %v1985 = vshrl.u32 %v1984, 7
      %v1986 = vsub.s32 0, %v1985
      %v1987 = vrot.slane %v1982, %v1986
      %v1997 = vunpack.c.l.b16 %v1958
      %v1998 = vunpack.c.l.b16 %v1959
      %v1999 = vunpack.c.l.b16 %v1960
      %v2000 = vunpack.c.l.b16 %v1961
      %v2001 = vunpack.c.l.b16 %v1962
      %v2002 = vunpack.c.l.b16 %v1963
      %v2003 = vunpack.c.l.b16 %v1964
      %v2004 = vunpack.c.l.b16 %v1965
      %v2005 = vpack.c.b16 %v1998, %v1997
      %v2006 = vpack.c.b16 %v2000, %v1999
      %v2007 = vpack.c.b16 %v2002, %v2001
      %v2008 = vpack.c.b16 %v2004, %v2003
      %v2029 = vunpack.c.l.b16 %v1966
      %v2030 = vunpack.c.l.b16 %v1967
      %v2031 = vunpack.c.l.b16 %v1968
      %v2032 = vunpack.c.l.b16 %v1969
      %v2033 = vunpack.c.l.b16 %v1970
      %v2034 = vunpack.c.l.b16 %v1971
      %v2035 = vunpack.c.l.b16 %v1972
      %v2036 = vunpack.c.l.b16 %v1973
      %v2037 = vunpack.c.l.b16 %v1974
      %v2038 = vunpack.c.l.b16 %v1975
      %v2039 = vunpack.c.l.b16 %v1976
      %v2040 = vunpack.c.l.b16 %v1977
      %v2041 = vunpack.c.l.b16 %v1978
      %v2042 = vunpack.c.l.b16 %v1979
      %v2043 = vunpack.c.l.b16 %v1980
      %v2044 = vunpack.c.l.b16 %v1981
      %v2045 = vpack.c.b16 %v2030, %v2029
      %v2046 = vpack.c.b16 %v2032, %v2031
      %v2047 = vpack.c.b16 %v2034, %v2033
      %v2048 = vpack.c.b16 %v2036, %v2035
      %v2049 = vpack.c.b16 %v2038, %v2037
      %v2050 = vpack.c.b16 %v2040, %v2039
      %v2051 = vpack.c.b16 %v2042, %v2041
      %v2052 = vpack.c.b16 %v2044, %v2043
      %2061 = vmatprep.subr.bf16.mxu0 0
      %2062 = vmatpush1.bf16.msra.mxu0 %v2045
      %2063 = vmatprep.subr.bf16.mxu0 0
      %2064 = vmatpush1.bf16.msra.mxu0 %v2046
      %2065 = vmatprep.subr.bf16.mxu0 0
      %2066 = vmatpush1.bf16.msra.mxu0 %v2047
      %2067 = vmatprep.subr.bf16.mxu0 0
      %2068 = vmatpush1.bf16.msra.mxu0 %v2048
      %2069 = vmatprep.subr.bf16.mxu0 0
      %2070 = vmatpush1.bf16.msra.mxu0 %v2049
      %2071 = vmatprep.subr.bf16.mxu0 0
      %2072 = vmatpush1.bf16.msra.mxu0 %v2050
      %2073 = vmatprep.subr.bf16.mxu0 0
      %2074 = vmatpush1.bf16.msra.mxu0 %v2051
      %2075 = vmatprep.subr.bf16.mxu0 0
      %2076 = vmatpush1.bf16.msra.mxu0 %v2052
      %2077 = vmatprep.subr.bf16.mxu0 0
      %2078 = vmatpush1.bf16.msra.mxu0 0
      %2079 = vmatprep.subr.bf16.mxu0 0
      %2080 = vmatpush1.bf16.msra.mxu0 0
      %2081 = vmatprep.subr.bf16.mxu0 0
      %2082 = vmatpush1.bf16.msra.mxu0 0
      %2083 = vmatprep.subr.bf16.mxu0 0
      %2084 = vmatpush1.bf16.msra.mxu0 0
      %2085 = vmatprep.subr.bf16.mxu0 0
      %2086 = vmatpush1.bf16.msra.mxu0 0
      %2087 = vmatprep.subr.bf16.mxu0 0
      %2088 = vmatpush1.bf16.msra.mxu0 0
      %2089 = vmatprep.subr.bf16.mxu0 0
      %2090 = vmatpush1.bf16.msra.mxu0 0
      %2091 = vmatprep.subr.bf16.mxu0 0
      %2092 = vmatpush1.bf16.msra.mxu0 0
      %2093 = vmatprep.mubr.bf16.mxu0 0
      %2094 = vmatmul.mubr.bf16.gmra.mrb[0].mxu0 %v2005
      %v2095 = vpop.f32.mrb[0].mxu0
      %v2096 = vadd.f32 %v1987, %v2095
      %v2097 = vpop.f32.mrb[0].mxu0
      %v2098 = vpop.f32.mrb[0].mxu0
      %v2099 = vadd.f32 %v1987, %v2098
      %v2100 = vpop.f32.mrb[0].mxu0
      %2101 = vmatprep.mubr.bf16.mxu0 0
      %2102 = vmatmul.mubr.bf16.gmra.mrb[0].mxu0 %v2006
      %v2103 = vpop.f32.mrb[0].mxu0
      %v2104 = vadd.f32 %v1987, %v2103
      %v2105 = vpop.f32.mrb[0].mxu0
      %v2106 = vpop.f32.mrb[0].mxu0
      %v2107 = vadd.f32 %v1987, %v2106
      %v2108 = vpop.f32.mrb[0].mxu0
      %2109 = vmatprep.mubr.bf16.mxu0 0
      %2110 = vmatmul.mubr.bf16.gmra.mrb[0].mxu0 %v2007
      %v2111 = vpop.f32.mrb[0].mxu0
      %v2112 = vadd.f32 %v1987, %v2111
      %v2113 = vpop.f32.mrb[0].mxu0
      %v2114 = vpop.f32.mrb[0].mxu0
      %v2115 = vadd.f32 %v1987, %v2114
      %v2116 = vpop.f32.mrb[0].mxu0
      %2117 = vmatprep.mubr.bf16.mxu0 0
      %2118 = vmatmul.mubr.bf16.gmra.mrb[0].mxu0 %v2008
      %v2119 = vpop.f32.mrb[0].mxu0
      %v2120 = vadd.f32 %v1987, %v2119
      %v2121 = vpop.f32.mrb[0].mxu0
      %v2122 = vpop.f32.mrb[0].mxu0
      %v2123 = vadd.f32 %v1987, %v2122
      %v2124 = vpop.f32.mrb[0].mxu0
      %2125 = vdwg.mxu0
      %v2126 = vld [vmem:[#allocation2] sm:$0xff]
      %v2127 = vld [vmem:[#allocation2 + $0x10] sm:$0xff]
      %v2128 = vld [vmem:[#allocation2 + $0x20] sm:$0xff]
      %v2129 = vld [vmem:[#allocation2 + $0x30] sm:$0xff]
      %v2130 = vld [vmem:[#allocation2 + $0x40] sm:$0xff]
      %v2131 = vld [vmem:[#allocation2 + $0x50] sm:$0xff]
      %v2132 = vld [vmem:[#allocation2 + $0x60] sm:$0xff]
      %v2133 = vld [vmem:[#allocation2 + $0x70] sm:$0xff]
      %v2134 = vpack.c.bf16 %v2127, %v2126
      %v2135 = vpack.c.bf16 %v2129, %v2128
      %v2136 = vpack.c.bf16 %v2131, %v2130
      %v2137 = vpack.c.bf16 %v2133, %v2132
      %v2138 = vld [vmem:[%s8] sm:$0xf]
      %v2139 = vld [vmem:[%s8 + $0x4] sm:$0xf]
      %v2140 = vld [vmem:[%s8 + $0x8] sm:$0xf]
      %v2141 = vld [vmem:[%s8 + $0xc] sm:$0xf]
      %v2142 = vld [vmem:[%s8 + $0x10] sm:$0xf]
      %v2143 = vld [vmem:[%s8 + $0x14] sm:$0xf]
      %v2144 = vld [vmem:[%s8 + $0x18] sm:$0xf]
      %v2145 = vld [vmem:[%s8 + $0x1c] sm:$0xf]
      %v2146 = vld [vmem:[%s8 + $0x20] sm:$0xf]
      %v2147 = vld [vmem:[%s8 + $0x24] sm:$0xf]
      %v2148 = vld [vmem:[%s8 + $0x28] sm:$0xf]
      %v2149 = vld [vmem:[%s8 + $0x2c] sm:$0xf]
      %v2150 = vld [vmem:[%s8 + $0x30] sm:$0xf]
      %v2151 = vld [vmem:[%s8 + $0x34] sm:$0xf]
      %v2152 = vld [vmem:[%s8 + $0x38] sm:$0xf]
      %v2153 = vld [vmem:[%s8 + $0x3c] sm:$0xf]
      %v2170 = vunpack.c.l.b16 %v2138
      %v2171 = vunpack.c.l.b16 %v2139
      %v2172 = vunpack.c.l.b16 %v2140
      %v2173 = vunpack.c.l.b16 %v2141
      %v2174 = vunpack.c.l.b16 %v2142
      %v2175 = vunpack.c.l.b16 %v2143
      %v2176 = vunpack.c.l.b16 %v2144
      %v2177 = vunpack.c.l.b16 %v2145
      %v2178 = vunpack.c.l.b16 %v2146
      %v2179 = vunpack.c.l.b16 %v2147
      %v2180 = vunpack.c.l.b16 %v2148
      %v2181 = vunpack.c.l.b16 %v2149
      %v2182 = vunpack.c.l.b16 %v2150
      %v2183 = vunpack.c.l.b16 %v2151
      %v2184 = vunpack.c.l.b16 %v2152
      %v2185 = vunpack.c.l.b16 %v2153
      %v2186 = vpack.c.b16 %v2171, %v2170
      %v2187 = vpack.c.b16 %v2173, %v2172
      %v2188 = vpack.c.b16 %v2175, %v2174
      %v2189 = vpack.c.b16 %v2177, %v2176
      %v2190 = vpack.c.b16 %v2179, %v2178
      %v2191 = vpack.c.b16 %v2181, %v2180
      %v2192 = vpack.c.b16 %v2183, %v2182
      %v2193 = vpack.c.b16 %v2185, %v2184
      %2202 = vmatprep.subr.bf16.mxu0 0
      %2203 = vmatpush1.bf16.msra.mxu0 %v2186
      %2204 = vmatprep.subr.bf16.mxu0 0
      %2205 = vmatpush1.bf16.msra.mxu0 %v2187
      %2206 = vmatprep.subr.bf16.mxu0 0
      %2207 = vmatpush1.bf16.msra.mxu0 %v2188
      %2208 = vmatprep.subr.bf16.mxu0 0
      %2209 = vmatpush1.bf16.msra.mxu0 %v2189
      %2210 = vmatprep.subr.bf16.mxu0 0
      %2211 = vmatpush1.bf16.msra.mxu0 %v2190
      %2212 = vmatprep.subr.bf16.mxu0 0
      %2213 = vmatpush1.bf16.msra.mxu0 %v2191
      %2214 = vmatprep.subr.bf16.mxu0 0
      %2215 = vmatpush1.bf16.msra.mxu0 %v2192
      %2216 = vmatprep.subr.bf16.mxu0 0
      %2217 = vmatpush1.bf16.msra.mxu0 %v2193
      %2218 = vmatprep.subr.bf16.mxu0 0
      %2219 = vmatpush1.bf16.msra.mxu0 0
      %2220 = vmatprep.subr.bf16.mxu0 0
      %2221 = vmatpush1.bf16.msra.mxu0 0
      %2222 = vmatprep.subr.bf16.mxu0 0
      %2223 = vmatpush1.bf16.msra.mxu0 0
      %2224 = vmatprep.subr.bf16.mxu0 0
      %2225 = vmatpush1.bf16.msra.mxu0 0
      %2226 = vmatprep.subr.bf16.mxu0 0
      %2227 = vmatpush1.bf16.msra.mxu0 0
      %2228 = vmatprep.subr.bf16.mxu0 0
      %2229 = vmatpush1.bf16.msra.mxu0 0
      %2230 = vmatprep.subr.bf16.mxu0 0
      %2231 = vmatpush1.bf16.msra.mxu0 0
      %2232 = vmatprep.subr.bf16.mxu0 0
      %2233 = vmatpush1.bf16.msra.mxu0 0
      %2234 = vmatprep.mubr.bf16.mxu0 0
      %2235 = vmatmul.mubr.bf16.gmra.mrb[0].mxu0 %v2134
      %v2236 = vpop.f32.mrb[0].mxu0
      %v2237 = vadd.f32 0.0, %v2236
      %v2238 = vpop.f32.mrb[0].mxu0
      %v2239 = vpop.f32.mrb[0].mxu0
      %v2240 = vadd.f32 0.0, %v2239
      %v2241 = vpop.f32.mrb[0].mxu0
      %2242 = vmatprep.mubr.bf16.mxu0 0
      %2243 = vmatmul.mubr.bf16.gmra.mrb[0].mxu0 %v2135
      %v2244 = vpop.f32.mrb[0].mxu0
      %v2245 = vadd.f32 0.0, %v2244
      %v2246 = vpop.f32.mrb[0].mxu0
      %v2247 = vpop.f32.mrb[0].mxu0
      %v2248 = vadd.f32 0.0, %v2247
      %v2249 = vpop.f32.mrb[0].mxu0
      %2250 = vmatprep.mubr.bf16.mxu0 0
      %2251 = vmatmul.mubr.bf16.gmra.mrb[0].mxu0 %v2136
      %v2252 = vpop.f32.mrb[0].mxu0
      %v2253 = vadd.f32 0.0, %v2252
      %v2254 = vpop.f32.mrb[0].mxu0
      %v2255 = vpop.f32.mrb[0].mxu0
      %v2256 = vadd.f32 0.0, %v2255
      %v2257 = vpop.f32.mrb[0].mxu0
      %2258 = vmatprep.mubr.bf16.mxu0 0
      %2259 = vmatmul.mubr.bf16.gmra.mrb[0].mxu0 %v2137
      %v2260 = vpop.f32.mrb[0].mxu0
      %v2261 = vadd.f32 0.0, %v2260
      %v2262 = vpop.f32.mrb[0].mxu0
      %v2263 = vpop.f32.mrb[0].mxu0
      %v2264 = vadd.f32 0.0, %v2263
      %v2265 = vpop.f32.mrb[0].mxu0
      %2266 = vdwg.mxu0
      %v2267 = vadd.f32 %v2096, %v2237
      %v2268 = vadd.f32 %v2099, %v2240
      %v2269 = vadd.f32 %v2104, %v2245
      %v2270 = vadd.f32 %v2107, %v2248
      %v2271 = vadd.f32 %v2112, %v2253
      %v2272 = vadd.f32 %v2115, %v2256
      %v2273 = vadd.f32 %v2120, %v2261
      %v2274 = vadd.f32 %v2123, %v2264
      %v2275 = vld [vmem:[#allocation2 + $0x1] sm:$0xff]
      %v2276 = vld [vmem:[#allocation2 + $0x11] sm:$0xff]
      %v2277 = vld [vmem:[#allocation2 + $0x21] sm:$0xff]
      %v2278 = vld [vmem:[#allocation2 + $0x31] sm:$0xff]
      %v2279 = vld [vmem:[#allocation2 + $0x41] sm:$0xff]
      %v2280 = vld [vmem:[#allocation2 + $0x51] sm:$0xff]
      %v2281 = vld [vmem:[#allocation2 + $0x61] sm:$0xff]
      %v2282 = vld [vmem:[#allocation2 + $0x71] sm:$0xff]
      %v2283 = vpack.c.bf16 %v2276, %v2275
      %v2284 = vpack.c.bf16 %v2278, %v2277
      %v2285 = vpack.c.bf16 %v2280, %v2279
      %v2286 = vpack.c.bf16 %v2282, %v2281
      %s2287 = scalar_lea.vmem %s8, 64
      %v2288 = vld [vmem:[%s2287] sm:$0xf]
      %v2289 = vld [vmem:[%s2287 + $0x4] sm:$0xf]
      %v2290 = vld [vmem:[%s2287 + $0x8] sm:$0xf]
      %v2291 = vld [vmem:[%s2287 + $0xc] sm:$0xf]
      %v2292 = vld [vmem:[%s2287 + $0x10] sm:$0xf]
      %v2293 = vld [vmem:[%s2287 + $0x14] sm:$0xf]
      %v2294 = vld [vmem:[%s2287 + $0x18] sm:$0xf]
      %v2295 = vld [vmem:[%s2287 + $0x1c] sm:$0xf]
      %v2296 = vld [vmem:[%s2287 + $0x20] sm:$0xf]
      %v2297 = vld [vmem:[%s2287 + $0x24] sm:$0xf]
      %v2298 = vld [vmem:[%s2287 + $0x28] sm:$0xf]
      %v2299 = vld [vmem:[%s2287 + $0x2c] sm:$0xf]
      %v2300 = vld [vmem:[%s2287 + $0x30] sm:$0xf]
      %v2301 = vld [vmem:[%s2287 + $0x34] sm:$0xf]
      %v2302 = vld [vmem:[%s2287 + $0x38] sm:$0xf]
      %v2303 = vld [vmem:[%s2287 + $0x3c] sm:$0xf]
      %v2320 = vunpack.c.l.b16 %v2288
      %v2321 = vunpack.c.l.b16 %v2289
      %v2322 = vunpack.c.l.b16 %v2290
      %v2323 = vunpack.c.l.b16 %v2291
      %v2324 = vunpack.c.l.b16 %v2292
      %v2325 = vunpack.c.l.b16 %v2293
      %v2326 = vunpack.c.l.b16 %v2294
      %v2327 = vunpack.c.l.b16 %v2295
      %v2328 = vunpack.c.l.b16 %v2296
      %v2329 = vunpack.c.l.b16 %v2297
      %v2330 = vunpack.c.l.b16 %v2298
      %v2331 = vunpack.c.l.b16 %v2299
      %v2332 = vunpack.c.l.b16 %v2300
      %v2333 = vunpack.c.l.b16 %v2301
      %v2334 = vunpack.c.l.b16 %v2302
      %v2335 = vunpack.c.l.b16 %v2303
      %v2336 = vpack.c.b16 %v2321, %v2320
      %v2337 = vpack.c.b16 %v2323, %v2322
      %v2338 = vpack.c.b16 %v2325, %v2324
      %v2339 = vpack.c.b16 %v2327, %v2326
      %v2340 = vpack.c.b16 %v2329, %v2328
      %v2341 = vpack.c.b16 %v2331, %v2330
      %v2342 = vpack.c.b16 %v2333, %v2332
      %v2343 = vpack.c.b16 %v2335, %v2334
      %2352 = vmatprep.subr.bf16.mxu0 0
      %2353 = vmatpush1.bf16.msra.mxu0 %v2336
      %2354 = vmatprep.subr.bf16.mxu0 0
      %2355 = vmatpush1.bf16.msra.mxu0 %v2337
      %2356 = vmatprep.subr.bf16.mxu0 0
      %2357 = vmatpush1.bf16.msra.mxu0 %v2338
      %2358 = vmatprep.subr.bf16.mxu0 0
      %2359 = vmatpush1.bf16.msra.mxu0 %v2339
      %2360 = vmatprep.subr.bf16.mxu0 0
      %2361 = vmatpush1.bf16.msra.mxu0 %v2340
      %2362 = vmatprep.subr.bf16.mxu0 0
      %2363 = vmatpush1.bf16.msra.mxu0 %v2341
      %2364 = vmatprep.subr.bf16.mxu0 0
      %2365 = vmatpush1.bf16.msra.mxu0 %v2342
      %2366 = vmatprep.subr.bf16.mxu0 0
      %2367 = vmatpush1.bf16.msra.mxu0 %v2343
      %2368 = vmatprep.subr.bf16.mxu0 0
      %2369 = vmatpush1.bf16.msra.mxu0 0
      %2370 = vmatprep.subr.bf16.mxu0 0
      %2371 = vmatpush1.bf16.msra.mxu0 0
      %2372 = vmatprep.subr.bf16.mxu0 0
      %2373 = vmatpush1.bf16.msra.mxu0 0
      %2374 = vmatprep.subr.bf16.mxu0 0
      %2375 = vmatpush1.bf16.msra.mxu0 0
      %2376 = vmatprep.subr.bf16.mxu0 0
      %2377 = vmatpush1.bf16.msra.mxu0 0
      %2378 = vmatprep.subr.bf16.mxu0 0
      %2379 = vmatpush1.bf16.msra.mxu0 0
      %2380 = vmatprep.subr.bf16.mxu0 0
      %2381 = vmatpush1.bf16.msra.mxu0 0
      %2382 = vmatprep.subr.bf16.mxu0 0
      %2383 = vmatpush1.bf16.msra.mxu0 0
      %2384 = vmatprep.mubr.bf16.mxu0 0
      %2385 = vmatmul.mubr.bf16.gmra.mrb[0].mxu0 %v2283
      %v2386 = vpop.f32.mrb[0].mxu0
      %v2387 = vadd.f32 0.0, %v2386
      %v2388 = vpop.f32.mrb[0].mxu0
      %v2389 = vpop.f32.mrb[0].mxu0
      %v2390 = vadd.f32 0.0, %v2389
      %v2391 = vpop.f32.mrb[0].mxu0
      %2392 = vmatprep.mubr.bf16.mxu0 0
      %2393 = vmatmul.mubr.bf16.gmra.mrb[0].mxu0 %v2284
      %v2394 = vpop.f32.mrb[0].mxu0
      %v2395 = vadd.f32 0.0, %v2394
      %v2396 = vpop.f32.mrb[0].mxu0
      %v2397 = vpop.f32.mrb[0].mxu0
      %v2398 = vadd.f32 0.0, %v2397
      %v2399 = vpop.f32.mrb[0].mxu0
      %2400 = vmatprep.mubr.bf16.mxu0 0
      %2401 = vmatmul.mubr.bf16.gmra.mrb[0].mxu0 %v2285
      %v2402 = vpop.f32.mrb[0].mxu0
      %v2403 = vadd.f32 0.0, %v2402
      %v2404 = vpop.f32.mrb[0].mxu0
      %v2405 = vpop.f32.mrb[0].mxu0
      %v2406 = vadd.f32 0.0, %v2405
      %v2407 = vpop.f32.mrb[0].mxu0
      %2408 = vmatprep.mubr.bf16.mxu0 0
      %2409 = vmatmul.mubr.bf16.gmra.mrb[0].mxu0 %v2286
      %v2410 = vpop.f32.mrb[0].mxu0
      %v2411 = vadd.f32 0.0, %v2410
      %v2412 = vpop.f32.mrb[0].mxu0
      %v2413 = vpop.f32.mrb[0].mxu0
      %v2414 = vadd.f32 0.0, %v2413
      %v2415 = vpop.f32.mrb[0].mxu0
      %2416 = vdwg.mxu0
      %v2417 = vadd.f32 %v2267, %v2387
      %v2418 = vadd.f32 %v2268, %v2390
      %v2419 = vadd.f32 %v2269, %v2395
      %v2420 = vadd.f32 %v2270, %v2398
      %v2421 = vadd.f32 %v2271, %v2403
      %v2422 = vadd.f32 %v2272, %v2406
      %v2423 = vadd.f32 %v2273, %v2411
      %v2424 = vadd.f32 %v2274, %v2414
      %v2425 = vld [vmem:[#allocation2 + $0x2] sm:$0xff]
      %v2426 = vld [vmem:[#allocation2 + $0x12] sm:$0xff]
      %v2427 = vld [vmem:[#allocation2 + $0x22] sm:$0xff]
      %v2428 = vld [vmem:[#allocation2 + $0x32] sm:$0xff]
      %v2429 = vld [vmem:[#allocation2 + $0x42] sm:$0xff]
      %v2430 = vld [vmem:[#allocation2 + $0x52] sm:$0xff]
      %v2431 = vld [vmem:[#allocation2 + $0x62] sm:$0xff]
      %v2432 = vld [vmem:[#allocation2 + $0x72] sm:$0xff]
      %v2433 = vpack.c.bf16 %v2426, %v2425
      %v2434 = vpack.c.bf16 %v2428, %v2427
      %v2435 = vpack.c.bf16 %v2430, %v2429
      %v2436 = vpack.c.bf16 %v2432, %v2431
      %s2437 = scalar_lea.vmem %s8, 128
      %v2438 = vld [vmem:[%s2437] sm:$0xf]
      %v2439 = vld [vmem:[%s2437 + $0x4] sm:$0xf]
      %v2440 = vld [vmem:[%s2437 + $0x8] sm:$0xf]
      %v2441 = vld [vmem:[%s2437 + $0xc] sm:$0xf]
      %v2442 = vld [vmem:[%s2437 + $0x10] sm:$0xf]
      %v2443 = vld [vmem:[%s2437 + $0x14] sm:$0xf]
      %v2444 = vld [vmem:[%s2437 + $0x18] sm:$0xf]
      %v2445 = vld [vmem:[%s2437 + $0x1c] sm:$0xf]
      %v2446 = vld [vmem:[%s2437 + $0x20] sm:$0xf]
      %v2447 = vld [vmem:[%s2437 + $0x24] sm:$0xf]
      %v2448 = vld [vmem:[%s2437 + $0x28] sm:$0xf]
      %v2449 = vld [vmem:[%s2437 + $0x2c] sm:$0xf]
      %v2450 = vld [vmem:[%s2437 + $0x30] sm:$0xf]
      %v2451 = vld [vmem:[%s2437 + $0x34] sm:$0xf]
      %v2452 = vld [vmem:[%s2437 + $0x38] sm:$0xf]
      %v2453 = vld [vmem:[%s2437 + $0x3c] sm:$0xf]
      %v2470 = vunpack.c.l.b16 %v2438
      %v2471 = vunpack.c.l.b16 %v2439
      %v2472 = vunpack.c.l.b16 %v2440
      %v2473 = vunpack.c.l.b16 %v2441
      %v2474 = vunpack.c.l.b16 %v2442
      %v2475 = vunpack.c.l.b16 %v2443
      %v2476 = vunpack.c.l.b16 %v2444
      %v2477 = vunpack.c.l.b16 %v2445
      %v2478 = vunpack.c.l.b16 %v2446
      %v2479 = vunpack.c.l.b16 %v2447
      %v2480 = vunpack.c.l.b16 %v2448
      %v2481 = vunpack.c.l.b16 %v2449
      %v2482 = vunpack.c.l.b16 %v2450
      %v2483 = vunpack.c.l.b16 %v2451
      %v2484 = vunpack.c.l.b16 %v2452
      %v2485 = vunpack.c.l.b16 %v2453
      %v2486 = vpack.c.b16 %v2471, %v2470
      %v2487 = vpack.c.b16 %v2473, %v2472
      %v2488 = vpack.c.b16 %v2475, %v2474
      %v2489 = vpack.c.b16 %v2477, %v2476
      %v2490 = vpack.c.b16 %v2479, %v2478
      %v2491 = vpack.c.b16 %v2481, %v2480
      %v2492 = vpack.c.b16 %v2483, %v2482
      %v2493 = vpack.c.b16 %v2485, %v2484
      %2502 = vmatprep.subr.bf16.mxu0 0
      %2503 = vmatpush1.bf16.msra.mxu0 %v2486
      %2504 = vmatprep.subr.bf16.mxu0 0
      %2505 = vmatpush1.bf16.msra.mxu0 %v2487
      %2506 = vmatprep.subr.bf16.mxu0 0
      %2507 = vmatpush1.bf16.msra.mxu0 %v2488
      %2508 = vmatprep.subr.bf16.mxu0 0
      %2509 = vmatpush1.bf16.msra.mxu0 %v2489
      %2510 = vmatprep.subr.bf16.mxu0 0
      %2511 = vmatpush1.bf16.msra.mxu0 %v2490
      %2512 = vmatprep.subr.bf16.mxu0 0
      %2513 = vmatpush1.bf16.msra.mxu0 %v2491
      %2514 = vmatprep.subr.bf16.mxu0 0
      %2515 = vmatpush1.bf16.msra.mxu0 %v2492
      %2516 = vmatprep.subr.bf16.mxu0 0
      %2517 = vmatpush1.bf16.msra.mxu0 %v2493
      %2518 = vmatprep.subr.bf16.mxu0 0
      %2519 = vmatpush1.bf16.msra.mxu0 0
      %2520 = vmatprep.subr.bf16.mxu0 0
      %2521 = vmatpush1.bf16.msra.mxu0 0
      %2522 = vmatprep.subr.bf16.mxu0 0
      %2523 = vmatpush1.bf16.msra.mxu0 0
      %2524 = vmatprep.subr.bf16.mxu0 0
      %2525 = vmatpush1.bf16.msra.mxu0 0
      %2526 = vmatprep.subr.bf16.mxu0 0
      %2527 = vmatpush1.bf16.msra.mxu0 0
      %2528 = vmatprep.subr.bf16.mxu0 0
      %2529 = vmatpush1.bf16.msra.mxu0 0
      %2530 = vmatprep.subr.bf16.mxu0 0
      %2531 = vmatpush1.bf16.msra.mxu0 0
      %2532 = vmatprep.subr.bf16.mxu0 0
      %2533 = vmatpush1.bf16.msra.mxu0 0
      %2534 = vmatprep.mubr.bf16.mxu0 0
      %2535 = vmatmul.mubr.bf16.gmra.mrb[0].mxu0 %v2433
      %v2536 = vpop.f32.mrb[0].mxu0
      %v2537 = vadd.f32 0.0, %v2536
      %v2538 = vpop.f32.mrb[0].mxu0
      %v2539 = vpop.f32.mrb[0].mxu0
      %v2540 = vadd.f32 0.0, %v2539
      %v2541 = vpop.f32.mrb[0].mxu0
      %2542 = vmatprep.mubr.bf16.mxu0 0
      %2543 = vmatmul.mubr.bf16.gmra.mrb[0].mxu0 %v2434
      %v2544 = vpop.f32.mrb[0].mxu0
      %v2545 = vadd.f32 0.0, %v2544
      %v2546 = vpop.f32.mrb[0].mxu0
      %v2547 = vpop.f32.mrb[0].mxu0
      %v2548 = vadd.f32 0.0, %v2547
      %v2549 = vpop.f32.mrb[0].mxu0
      %2550 = vmatprep.mubr.bf16.mxu0 0
      %2551 = vmatmul.mubr.bf16.gmra.mrb[0].mxu0 %v2435
      %v2552 = vpop.f32.mrb[0].mxu0
      %v2553 = vadd.f32 0.0, %v2552
      %v2554 = vpop.f32.mrb[0].mxu0
      %v2555 = vpop.f32.mrb[0].mxu0
      %v2556 = vadd.f32 0.0, %v2555
      %v2557 = vpop.f32.mrb[0].mxu0
      %2558 = vmatprep.mubr.bf16.mxu0 0
      %2559 = vmatmul.mubr.bf16.gmra.mrb[0].mxu0 %v2436
      %v2560 = vpop.f32.mrb[0].mxu0
      %v2561 = vadd.f32 0.0, %v2560
      %v2562 = vpop.f32.mrb[0].mxu0
      %v2563 = vpop.f32.mrb[0].mxu0
      %v2564 = vadd.f32 0.0, %v2563
      %v2565 = vpop.f32.mrb[0].mxu0
      %2566 = vdwg.mxu0
      %v2567 = vadd.f32 %v2417, %v2537
      %v2568 = vadd.f32 %v2418, %v2540
      %v2569 = vadd.f32 %v2419, %v2545
      %v2570 = vadd.f32 %v2420, %v2548
      %v2571 = vadd.f32 %v2421, %v2553
      %v2572 = vadd.f32 %v2422, %v2556
      %v2573 = vadd.f32 %v2423, %v2561
      %v2574 = vadd.f32 %v2424, %v2564
      %v2575 = vld [vmem:[%s339] sm:$0xff]
      %v2576 = vld [vmem:[%s339 + $0x10] sm:$0xff]
      %v2577 = vld [vmem:[%s339 + $0x20] sm:$0xff]
      %v2578 = vld [vmem:[%s339 + $0x30] sm:$0xff]
      %v2579 = vld [vmem:[%s339 + $0x40] sm:$0xff]
      %v2580 = vld [vmem:[%s339 + $0x50] sm:$0xff]
      %v2581 = vld [vmem:[%s339 + $0x60] sm:$0xff]
      %v2582 = vld [vmem:[%s339 + $0x70] sm:$0xff]
      %v2583 = vpack.c.bf16 %v2576, %v2575
      %v2584 = vpack.c.bf16 %v2578, %v2577
      %v2585 = vpack.c.bf16 %v2580, %v2579
      %v2586 = vpack.c.bf16 %v2582, %v2581
      %s2587 = scalar_lea.vmem %s8, 192
      %v2588 = vld [vmem:[%s2587] sm:$0xf]
      %v2589 = vld [vmem:[%s2587 + $0x4] sm:$0xf]
      %v2590 = vld [vmem:[%s2587 + $0x8] sm:$0xf]
      %v2591 = vld [vmem:[%s2587 + $0xc] sm:$0xf]
      %v2592 = vld [vmem:[%s2587 + $0x10] sm:$0xf]
      %v2593 = vld [vmem:[%s2587 + $0x14] sm:$0xf]
      %v2594 = vld [vmem:[%s2587 + $0x18] sm:$0xf]
      %v2595 = vld [vmem:[%s2587 + $0x1c] sm:$0xf]
      %v2596 = vld [vmem:[%s2587 + $0x20] sm:$0xf]
      %v2597 = vld [vmem:[%s2587 + $0x24] sm:$0xf]
      %v2598 = vld [vmem:[%s2587 + $0x28] sm:$0xf]
      %v2599 = vld [vmem:[%s2587 + $0x2c] sm:$0xf]
      %v2600 = vld [vmem:[%s2587 + $0x30] sm:$0xf]
      %v2601 = vld [vmem:[%s2587 + $0x34] sm:$0xf]
      %v2602 = vld [vmem:[%s2587 + $0x38] sm:$0xf]
      %v2603 = vld [vmem:[%s2587 + $0x3c] sm:$0xf]
      %v2620 = vunpack.c.l.b16 %v2588
      %v2621 = vunpack.c.l.b16 %v2589
      %v2622 = vunpack.c.l.b16 %v2590
      %v2623 = vunpack.c.l.b16 %v2591
      %v2624 = vunpack.c.l.b16 %v2592
      %v2625 = vunpack.c.l.b16 %v2593
      %v2626 = vunpack.c.l.b16 %v2594
      %v2627 = vunpack.c.l.b16 %v2595
      %v2628 = vunpack.c.l.b16 %v2596
      %v2629 = vunpack.c.l.b16 %v2597
      %v2630 = vunpack.c.l.b16 %v2598
      %v2631 = vunpack.c.l.b16 %v2599
      %v2632 = vunpack.c.l.b16 %v2600
      %v2633 = vunpack.c.l.b16 %v2601
      %v2634 = vunpack.c.l.b16 %v2602
      %v2635 = vunpack.c.l.b16 %v2603
      %v2636 = vpack.c.b16 %v2621, %v2620
      %v2637 = vpack.c.b16 %v2623, %v2622
      %v2638 = vpack.c.b16 %v2625, %v2624
      %v2639 = vpack.c.b16 %v2627, %v2626
      %v2640 = vpack.c.b16 %v2629, %v2628
      %v2641 = vpack.c.b16 %v2631, %v2630
      %v2642 = vpack.c.b16 %v2633, %v2632
      %v2643 = vpack.c.b16 %v2635, %v2634
      %2652 = vmatprep.subr.bf16.mxu0 0
      %2653 = vmatpush1.bf16.msra.mxu0 %v2636
      %2654 = vmatprep.subr.bf16.mxu0 0
      %2655 = vmatpush1.bf16.msra.mxu0 %v2637
      %2656 = vmatprep.subr.bf16.mxu0 0
      %2657 = vmatpush1.bf16.msra.mxu0 %v2638
      %2658 = vmatprep.subr.bf16.mxu0 0
      %2659 = vmatpush1.bf16.msra.mxu0 %v2639
      %2660 = vmatprep.subr.bf16.mxu0 0
      %2661 = vmatpush1.bf16.msra.mxu0 %v2640
      %2662 = vmatprep.subr.bf16.mxu0 0
      %2663 = vmatpush1.bf16.msra.mxu0 %v2641
      %2664 = vmatprep.subr.bf16.mxu0 0
      %2665 = vmatpush1.bf16.msra.mxu0 %v2642
      %2666 = vmatprep.subr.bf16.mxu0 0
      %2667 = vmatpush1.bf16.msra.mxu0 %v2643
      %2668 = vmatprep.subr.bf16.mxu0 0
      %2669 = vmatpush1.bf16.msra.mxu0 0
      %2670 = vmatprep.subr.bf16.mxu0 0
      %2671 = vmatpush1.bf16.msra.mxu0 0
      %2672 = vmatprep.subr.bf16.mxu0 0
      %2673 = vmatpush1.bf16.msra.mxu0 0
      %2674 = vmatprep.subr.bf16.mxu0 0
      %2675 = vmatpush1.bf16.msra.mxu0 0
      %2676 = vmatprep.subr.bf16.mxu0 0
      %2677 = vmatpush1.bf16.msra.mxu0 0
      %2678 = vmatprep.subr.bf16.mxu0 0
      %2679 = vmatpush1.bf16.msra.mxu0 0
      %2680 = vmatprep.subr.bf16.mxu0 0
      %2681 = vmatpush1.bf16.msra.mxu0 0
      %2682 = vmatprep.subr.bf16.mxu0 0
      %2683 = vmatpush1.bf16.msra.mxu0 0
      %2684 = vmatprep.mubr.bf16.mxu0 0
      %2685 = vmatmul.mubr.bf16.gmra.mrb[0].mxu0 %v2583
      %v2686 = vpop.f32.mrb[0].mxu0
      %v2687 = vadd.f32 0.0, %v2686
      %v2688 = vpop.f32.mrb[0].mxu0
      %v2689 = vpop.f32.mrb[0].mxu0
      %v2690 = vadd.f32 0.0, %v2689
      %v2691 = vpop.f32.mrb[0].mxu0
      %2692 = vmatprep.mubr.bf16.mxu0 0
      %2693 = vmatmul.mubr.bf16.gmra.mrb[0].mxu0 %v2584
      %v2694 = vpop.f32.mrb[0].mxu0
      %v2695 = vadd.f32 0.0, %v2694
      %v2696 = vpop.f32.mrb[0].mxu0
      %v2697 = vpop.f32.mrb[0].mxu0
      %v2698 = vadd.f32 0.0, %v2697
      %v2699 = vpop.f32.mrb[0].mxu0
      %2700 = vmatprep.mubr.bf16.mxu0 0
      %2701 = vmatmul.mubr.bf16.gmra.mrb[0].mxu0 %v2585
      %v2702 = vpop.f32.mrb[0].mxu0
      %v2703 = vadd.f32 0.0, %v2702
      %v2704 = vpop.f32.mrb[0].mxu0
      %v2705 = vpop.f32.mrb[0].mxu0
      %v2706 = vadd.f32 0.0, %v2705
      %v2707 = vpop.f32.mrb[0].mxu0
      %2708 = vmatprep.mubr.bf16.mxu0 0
      %2709 = vmatmul.mubr.bf16.gmra.mrb[0].mxu0 %v2586
      %v2710 = vpop.f32.mrb[0].mxu0
      %v2711 = vadd.f32 0.0, %v2710
      %v2712 = vpop.f32.mrb[0].mxu0
      %v2713 = vpop.f32.mrb[0].mxu0
      %v2714 = vadd.f32 0.0, %v2713
      %v2715 = vpop.f32.mrb[0].mxu0
      %2716 = vdwg.mxu0
      %v2717 = vadd.f32 %v2567, %v2687
      %v2718 = vadd.f32 %v2568, %v2690
      %v2719 = vadd.f32 %v2569, %v2695
      %v2720 = vadd.f32 %v2570, %v2698
      %v2721 = vadd.f32 %v2571, %v2703
      %v2722 = vadd.f32 %v2572, %v2706
      %v2723 = vadd.f32 %v2573, %v2711
      %v2724 = vadd.f32 %v2574, %v2714
      %v2725 = vld [vmem:[%s339 + $0x1] sm:$0xff]
      %v2726 = vld [vmem:[%s339 + $0x11] sm:$0xff]
      %v2727 = vld [vmem:[%s339 + $0x21] sm:$0xff]
      %v2728 = vld [vmem:[%s339 + $0x31] sm:$0xff]
      %v2729 = vld [vmem:[%s339 + $0x41] sm:$0xff]
      %v2730 = vld [vmem:[%s339 + $0x51] sm:$0xff]
      %v2731 = vld [vmem:[%s339 + $0x61] sm:$0xff]
      %v2732 = vld [vmem:[%s339 + $0x71] sm:$0xff]
      %v2733 = vpack.c.bf16 %v2726, %v2725
      %v2734 = vpack.c.bf16 %v2728, %v2727
      %v2735 = vpack.c.bf16 %v2730, %v2729
      %v2736 = vpack.c.bf16 %v2732, %v2731
      %s2737 = scalar_lea.vmem %s8, 256
      %v2738 = vld [vmem:[%s2737] sm:$0xf]
      %v2739 = vld [vmem:[%s2737 + $0x4] sm:$0xf]
      %v2740 = vld [vmem:[%s2737 + $0x8] sm:$0xf]
      %v2741 = vld [vmem:[%s2737 + $0xc] sm:$0xf]
      %v2742 = vld [vmem:[%s2737 + $0x10] sm:$0xf]
      %v2743 = vld [vmem:[%s2737 + $0x14] sm:$0xf]
      %v2744 = vld [vmem:[%s2737 + $0x18] sm:$0xf]
      %v2745 = vld [vmem:[%s2737 + $0x1c] sm:$0xf]
      %v2746 = vld [vmem:[%s2737 + $0x20] sm:$0xf]
      %v2747 = vld [vmem:[%s2737 + $0x24] sm:$0xf]
      %v2748 = vld [vmem:[%s2737 + $0x28] sm:$0xf]
      %v2749 = vld [vmem:[%s2737 + $0x2c] sm:$0xf]
      %v2750 = vld [vmem:[%s2737 + $0x30] sm:$0xf]
      %v2751 = vld [vmem:[%s2737 + $0x34] sm:$0xf]
      %v2752 = vld [vmem:[%s2737 + $0x38] sm:$0xf]
      %v2753 = vld [vmem:[%s2737 + $0x3c] sm:$0xf]
      %v2770 = vunpack.c.l.b16 %v2738
      %v2771 = vunpack.c.l.b16 %v2739
      %v2772 = vunpack.c.l.b16 %v2740
      %v2773 = vunpack.c.l.b16 %v2741
      %v2774 = vunpack.c.l.b16 %v2742
      %v2775 = vunpack.c.l.b16 %v2743
      %v2776 = vunpack.c.l.b16 %v2744
      %v2777 = vunpack.c.l.b16 %v2745
      %v2778 = vunpack.c.l.b16 %v2746
      %v2779 = vunpack.c.l.b16 %v2747
      %v2780 = vunpack.c.l.b16 %v2748
      %v2781 = vunpack.c.l.b16 %v2749
      %v2782 = vunpack.c.l.b16 %v2750
      %v2783 = vunpack.c.l.b16 %v2751
      %v2784 = vunpack.c.l.b16 %v2752
      %v2785 = vunpack.c.l.b16 %v2753
      %v2786 = vpack.c.b16 %v2771, %v2770
      %v2787 = vpack.c.b16 %v2773, %v2772
      %v2788 = vpack.c.b16 %v2775, %v2774
      %v2789 = vpack.c.b16 %v2777, %v2776
      %v2790 = vpack.c.b16 %v2779, %v2778
      %v2791 = vpack.c.b16 %v2781, %v2780
      %v2792 = vpack.c.b16 %v2783, %v2782
      %v2793 = vpack.c.b16 %v2785, %v2784
      %2802 = vmatprep.subr.bf16.mxu0 0
      %2803 = vmatpush1.bf16.msra.mxu0 %v2786
      %2804 = vmatprep.subr.bf16.mxu0 0
      %2805 = vmatpush1.bf16.msra.mxu0 %v2787
      %2806 = vmatprep.subr.bf16.mxu0 0
      %2807 = vmatpush1.bf16.msra.mxu0 %v2788
      %2808 = vmatprep.subr.bf16.mxu0 0
      %2809 = vmatpush1.bf16.msra.mxu0 %v2789
      %2810 = vmatprep.subr.bf16.mxu0 0
      %2811 = vmatpush1.bf16.msra.mxu0 %v2790
      %2812 = vmatprep.subr.bf16.mxu0 0
      %2813 = vmatpush1.bf16.msra.mxu0 %v2791
      %2814 = vmatprep.subr.bf16.mxu0 0
      %2815 = vmatpush1.bf16.msra.mxu0 %v2792
      %2816 = vmatprep.subr.bf16.mxu0 0
      %2817 = vmatpush1.bf16.msra.mxu0 %v2793
      %2818 = vmatprep.subr.bf16.mxu0 0
      %2819 = vmatpush1.bf16.msra.mxu0 0
      %2820 = vmatprep.subr.bf16.mxu0 0
      %2821 = vmatpush1.bf16.msra.mxu0 0
      %2822 = vmatprep.subr.bf16.mxu0 0
      %2823 = vmatpush1.bf16.msra.mxu0 0
      %2824 = vmatprep.subr.bf16.mxu0 0
      %2825 = vmatpush1.bf16.msra.mxu0 0
      %2826 = vmatprep.subr.bf16.mxu0 0
      %2827 = vmatpush1.bf16.msra.mxu0 0
      %2828 = vmatprep.subr.bf16.mxu0 0
      %2829 = vmatpush1.bf16.msra.mxu0 0
      %2830 = vmatprep.subr.bf16.mxu0 0
      %2831 = vmatpush1.bf16.msra.mxu0 0
      %2832 = vmatprep.subr.bf16.mxu0 0
      %2833 = vmatpush1.bf16.msra.mxu0 0
      %2834 = vmatprep.mubr.bf16.mxu0 0
      %2835 = vmatmul.mubr.bf16.gmra.mrb[0].mxu0 %v2733
      %v2836 = vpop.f32.mrb[0].mxu0
      %v2837 = vadd.f32 0.0, %v2836
      %v2838 = vpop.f32.mrb[0].mxu0
      %v2839 = vpop.f32.mrb[0].mxu0
      %v2840 = vadd.f32 0.0, %v2839
      %v2841 = vpop.f32.mrb[0].mxu0
      %2842 = vmatprep.mubr.bf16.mxu0 0
      %2843 = vmatmul.mubr.bf16.gmra.mrb[0].mxu0 %v2734
      %v2844 = vpop.f32.mrb[0].mxu0
      %v2845 = vadd.f32 0.0, %v2844
      %v2846 = vpop.f32.mrb[0].mxu0
      %v2847 = vpop.f32.mrb[0].mxu0
      %v2848 = vadd.f32 0.0, %v2847
      %v2849 = vpop.f32.mrb[0].mxu0
      %2850 = vmatprep.mubr.bf16.mxu0 0
      %2851 = vmatmul.mubr.bf16.gmra.mrb[0].mxu0 %v2735
      %v2852 = vpop.f32.mrb[0].mxu0
      %v2853 = vadd.f32 0.0, %v2852
      %v2854 = vpop.f32.mrb[0].mxu0
      %v2855 = vpop.f32.mrb[0].mxu0
      %v2856 = vadd.f32 0.0, %v2855
      %v2857 = vpop.f32.mrb[0].mxu0
      %2858 = vmatprep.mubr.bf16.mxu0 0
      %2859 = vmatmul.mubr.bf16.gmra.mrb[0].mxu0 %v2736
      %v2860 = vpop.f32.mrb[0].mxu0
      %v2861 = vadd.f32 0.0, %v2860
      %v2862 = vpop.f32.mrb[0].mxu0
      %v2863 = vpop.f32.mrb[0].mxu0
      %v2864 = vadd.f32 0.0, %v2863
      %v2865 = vpop.f32.mrb[0].mxu0
      %2866 = vdwg.mxu0
      %v2867 = vadd.f32 %v2717, %v2837
      %v2868 = vadd.f32 %v2718, %v2840
      %v2869 = vadd.f32 %v2719, %v2845
      %v2870 = vadd.f32 %v2720, %v2848
      %v2871 = vadd.f32 %v2721, %v2853
      %v2872 = vadd.f32 %v2722, %v2856
      %v2873 = vadd.f32 %v2723, %v2861
      %v2874 = vadd.f32 %v2724, %v2864
      %v2875 = vld [vmem:[%s339 + $0x2] sm:$0xff]
      %v2876 = vld [vmem:[%s339 + $0x12] sm:$0xff]
      %v2877 = vld [vmem:[%s339 + $0x22] sm:$0xff]
      %v2878 = vld [vmem:[%s339 + $0x32] sm:$0xff]
      %v2879 = vld [vmem:[%s339 + $0x42] sm:$0xff]
      %v2880 = vld [vmem:[%s339 + $0x52] sm:$0xff]
      %v2881 = vld [vmem:[%s339 + $0x62] sm:$0xff]
      %v2882 = vld [vmem:[%s339 + $0x72] sm:$0xff]
      %v2883 = vpack.c.bf16 %v2876, %v2875
      %v2884 = vpack.c.bf16 %v2878, %v2877
      %v2885 = vpack.c.bf16 %v2880, %v2879
      %v2886 = vpack.c.bf16 %v2882, %v2881
      %s2887 = scalar_lea.vmem %s8, 320
      %v2888 = vld [vmem:[%s2887] sm:$0xf]
      %v2889 = vld [vmem:[%s2887 + $0x4] sm:$0xf]
      %v2890 = vld [vmem:[%s2887 + $0x8] sm:$0xf]
      %v2891 = vld [vmem:[%s2887 + $0xc] sm:$0xf]
      %v2892 = vld [vmem:[%s2887 + $0x10] sm:$0xf]
      %v2893 = vld [vmem:[%s2887 + $0x14] sm:$0xf]
      %v2894 = vld [vmem:[%s2887 + $0x18] sm:$0xf]
      %v2895 = vld [vmem:[%s2887 + $0x1c] sm:$0xf]
      %v2896 = vld [vmem:[%s2887 + $0x20] sm:$0xf]
      %v2897 = vld [vmem:[%s2887 + $0x24] sm:$0xf]
      %v2898 = vld [vmem:[%s2887 + $0x28] sm:$0xf]
      %v2899 = vld [vmem:[%s2887 + $0x2c] sm:$0xf]
      %v2900 = vld [vmem:[%s2887 + $0x30] sm:$0xf]
      %v2901 = vld [vmem:[%s2887 + $0x34] sm:$0xf]
      %v2902 = vld [vmem:[%s2887 + $0x38] sm:$0xf]
      %v2903 = vld [vmem:[%s2887 + $0x3c] sm:$0xf]
      %v2920 = vunpack.c.l.b16 %v2888
      %v2921 = vunpack.c.l.b16 %v2889
      %v2922 = vunpack.c.l.b16 %v2890
      %v2923 = vunpack.c.l.b16 %v2891
      %v2924 = vunpack.c.l.b16 %v2892
      %v2925 = vunpack.c.l.b16 %v2893
      %v2926 = vunpack.c.l.b16 %v2894
      %v2927 = vunpack.c.l.b16 %v2895
      %v2928 = vunpack.c.l.b16 %v2896
      %v2929 = vunpack.c.l.b16 %v2897
      %v2930 = vunpack.c.l.b16 %v2898
      %v2931 = vunpack.c.l.b16 %v2899
      %v2932 = vunpack.c.l.b16 %v2900
      %v2933 = vunpack.c.l.b16 %v2901
      %v2934 = vunpack.c.l.b16 %v2902
      %v2935 = vunpack.c.l.b16 %v2903
      %v2936 = vpack.c.b16 %v2921, %v2920
      %v2937 = vpack.c.b16 %v2923, %v2922
      %v2938 = vpack.c.b16 %v2925, %v2924
      %v2939 = vpack.c.b16 %v2927, %v2926
      %v2940 = vpack.c.b16 %v2929, %v2928
      %v2941 = vpack.c.b16 %v2931, %v2930
      %v2942 = vpack.c.b16 %v2933, %v2932
      %v2943 = vpack.c.b16 %v2935, %v2934
      %2952 = vmatprep.subr.bf16.mxu0 0
      %2953 = vmatpush1.bf16.msra.mxu0 %v2936
      %2954 = vmatprep.subr.bf16.mxu0 0
      %2955 = vmatpush1.bf16.msra.mxu0 %v2937
      %2956 = vmatprep.subr.bf16.mxu0 0
      %2957 = vmatpush1.bf16.msra.mxu0 %v2938
      %2958 = vmatprep.subr.bf16.mxu0 0
      %2959 = vmatpush1.bf16.msra.mxu0 %v2939
      %2960 = vmatprep.subr.bf16.mxu0 0
      %2961 = vmatpush1.bf16.msra.mxu0 %v2940
      %2962 = vmatprep.subr.bf16.mxu0 0
      %2963 = vmatpush1.bf16.msra.mxu0 %v2941
      %2964 = vmatprep.subr.bf16.mxu0 0
      %2965 = vmatpush1.bf16.msra.mxu0 %v2942
      %2966 = vmatprep.subr.bf16.mxu0 0
      %2967 = vmatpush1.bf16.msra.mxu0 %v2943
      %2968 = vmatprep.subr.bf16.mxu0 0
      %2969 = vmatpush1.bf16.msra.mxu0 0
      %2970 = vmatprep.subr.bf16.mxu0 0
      %2971 = vmatpush1.bf16.msra.mxu0 0
      %2972 = vmatprep.subr.bf16.mxu0 0
      %2973 = vmatpush1.bf16.msra.mxu0 0
      %2974 = vmatprep.subr.bf16.mxu0 0
      %2975 = vmatpush1.bf16.msra.mxu0 0
      %2976 = vmatprep.subr.bf16.mxu0 0
      %2977 = vmatpush1.bf16.msra.mxu0 0
      %2978 = vmatprep.subr.bf16.mxu0 0
      %2979 = vmatpush1.bf16.msra.mxu0 0
      %2980 = vmatprep.subr.bf16.mxu0 0
      %2981 = vmatpush1.bf16.msra.mxu0 0
      %2982 = vmatprep.subr.bf16.mxu0 0
      %2983 = vmatpush1.bf16.msra.mxu0 0
      %2984 = vmatprep.mubr.bf16.mxu0 0
      %2985 = vmatmul.mubr.bf16.gmra.mrb[0].mxu0 %v2883
      %v2986 = vpop.f32.mrb[0].mxu0
      %v2987 = vadd.f32 0.0, %v2986
      %v2988 = vpop.f32.mrb[0].mxu0
      %v2989 = vpop.f32.mrb[0].mxu0
      %v2990 = vadd.f32 0.0, %v2989
      %v2991 = vpop.f32.mrb[0].mxu0
      %2992 = vmatprep.mubr.bf16.mxu0 0
      %2993 = vmatmul.mubr.bf16.gmra.mrb[0].mxu0 %v2884
      %v2994 = vpop.f32.mrb[0].mxu0
      %v2995 = vadd.f32 0.0, %v2994
      %v2996 = vpop.f32.mrb[0].mxu0
      %v2997 = vpop.f32.mrb[0].mxu0
      %v2998 = vadd.f32 0.0, %v2997
      %v2999 = vpop.f32.mrb[0].mxu0
      %3000 = vmatprep.mubr.bf16.mxu0 0
      %3001 = vmatmul.mubr.bf16.gmra.mrb[0].mxu0 %v2885
      %v3002 = vpop.f32.mrb[0].mxu0
      %v3003 = vadd.f32 0.0, %v3002
      %v3004 = vpop.f32.mrb[0].mxu0
      %v3005 = vpop.f32.mrb[0].mxu0
      %v3006 = vadd.f32 0.0, %v3005
      %v3007 = vpop.f32.mrb[0].mxu0
      %3008 = vmatprep.mubr.bf16.mxu0 0
      %3009 = vmatmul.mubr.bf16.gmra.mrb[0].mxu0 %v2886
      %v3010 = vpop.f32.mrb[0].mxu0
      %v3011 = vadd.f32 0.0, %v3010
      %v3012 = vpop.f32.mrb[0].mxu0
      %v3013 = vpop.f32.mrb[0].mxu0
      %v3014 = vadd.f32 0.0, %v3013
      %v3015 = vpop.f32.mrb[0].mxu0
      %3016 = vdwg.mxu0
      %v3017 = vadd.f32 %v2867, %v2987
      %v3018 = vadd.f32 %v2868, %v2990
      %v3019 = vadd.f32 %v2869, %v2995
      %v3020 = vadd.f32 %v2870, %v2998
      %v3021 = vadd.f32 %v2871, %v3003
      %v3022 = vadd.f32 %v2872, %v3006
      %v3023 = vadd.f32 %v2873, %v3011
      %v3024 = vadd.f32 %v2874, %v3014
      %s3025 = scalar_lea.vmem [#allocation2], 32
      %v3026 = vld [vmem:[%s3025] sm:$0xff]
      %v3027 = vld [vmem:[%s3025 + $0x10] sm:$0xff]
      %v3028 = vld [vmem:[%s3025 + $0x20] sm:$0xff]
      %v3029 = vld [vmem:[%s3025 + $0x30] sm:$0xff]
      %v3030 = vld [vmem:[%s3025 + $0x40] sm:$0xff]
      %v3031 = vld [vmem:[%s3025 + $0x50] sm:$0xff]
      %v3032 = vld [vmem:[%s3025 + $0x60] sm:$0xff]
      %v3033 = vld [vmem:[%s3025 + $0x70] sm:$0xff]
      %v3034 = vpack.c.bf16 %v3027, %v3026
      %v3035 = vpack.c.bf16 %v3029, %v3028
      %v3036 = vpack.c.bf16 %v3031, %v3030
      %v3037 = vpack.c.bf16 %v3033, %v3032
      %s3038 = scalar_lea.vmem %s8, 384
      %v3039 = vld [vmem:[%s3038] sm:$0xf]
      %v3040 = vld [vmem:[%s3038 + $0x4] sm:$0xf]
      %v3041 = vld [vmem:[%s3038 + $0x8] sm:$0xf]
      %v3042 = vld [vmem:[%s3038 + $0xc] sm:$0xf]
      %v3043 = vld [vmem:[%s3038 + $0x10] sm:$0xf]
      %v3044 = vld [vmem:[%s3038 + $0x14] sm:$0xf]
      %v3045 = vld [vmem:[%s3038 + $0x18] sm:$0xf]
      %v3046 = vld [vmem:[%s3038 + $0x1c] sm:$0xf]
      %v3047 = vld [vmem:[%s3038 + $0x20] sm:$0xf]
      %v3048 = vld [vmem:[%s3038 + $0x24] sm:$0xf]
      %v3049 = vld [vmem:[%s3038 + $0x28] sm:$0xf]
      %v3050 = vld [vmem:[%s3038 + $0x2c] sm:$0xf]
      %v3051 = vld [vmem:[%s3038 + $0x30] sm:$0xf]
      %v3052 = vld [vmem:[%s3038 + $0x34] sm:$0xf]
      %v3053 = vld [vmem:[%s3038 + $0x38] sm:$0xf]
      %v3054 = vld [vmem:[%s3038 + $0x3c] sm:$0xf]
      %v3071 = vunpack.c.l.b16 %v3039
      %v3072 = vunpack.c.l.b16 %v3040
      %v3073 = vunpack.c.l.b16 %v3041
      %v3074 = vunpack.c.l.b16 %v3042
      %v3075 = vunpack.c.l.b16 %v3043
      %v3076 = vunpack.c.l.b16 %v3044
      %v3077 = vunpack.c.l.b16 %v3045
      %v3078 = vunpack.c.l.b16 %v3046
      %v3079 = vunpack.c.l.b16 %v3047
      %v3080 = vunpack.c.l.b16 %v3048
      %v3081 = vunpack.c.l.b16 %v3049
      %v3082 = vunpack.c.l.b16 %v3050
      %v3083 = vunpack.c.l.b16 %v3051
      %v3084 = vunpack.c.l.b16 %v3052
      %v3085 = vunpack.c.l.b16 %v3053
      %v3086 = vunpack.c.l.b16 %v3054
      %v3087 = vpack.c.b16 %v3072, %v3071
      %v3088 = vpack.c.b16 %v3074, %v3073
      %v3089 = vpack.c.b16 %v3076, %v3075
      %v3090 = vpack.c.b16 %v3078, %v3077
      %v3091 = vpack.c.b16 %v3080, %v3079
      %v3092 = vpack.c.b16 %v3082, %v3081
      %v3093 = vpack.c.b16 %v3084, %v3083
      %v3094 = vpack.c.b16 %v3086, %v3085
      %3103 = vmatprep.subr.bf16.mxu0 0
      %3104 = vmatpush1.bf16.msra.mxu0 %v3087
      %3105 = vmatprep.subr.bf16.mxu0 0
      %3106 = vmatpush1.bf16.msra.mxu0 %v3088
      %3107 = vmatprep.subr.bf16.mxu0 0
      %3108 = vmatpush1.bf16.msra.mxu0 %v3089
      %3109 = vmatprep.subr.bf16.mxu0 0
      %3110 = vmatpush1.bf16.msra.mxu0 %v3090
      %3111 = vmatprep.subr.bf16.mxu0 0
      %3112 = vmatpush1.bf16.msra.mxu0 %v3091
      %3113 = vmatprep.subr.bf16.mxu0 0
      %3114 = vmatpush1.bf16.msra.mxu0 %v3092
      %3115 = vmatprep.subr.bf16.mxu0 0
      %3116 = vmatpush1.bf16.msra.mxu0 %v3093
      %3117 = vmatprep.subr.bf16.mxu0 0
      %3118 = vmatpush1.bf16.msra.mxu0 %v3094
      %3119 = vmatprep.subr.bf16.mxu0 0
      %3120 = vmatpush1.bf16.msra.mxu0 0
      %3121 = vmatprep.subr.bf16.mxu0 0
      %3122 = vmatpush1.bf16.msra.mxu0 0
      %3123 = vmatprep.subr.bf16.mxu0 0
      %3124 = vmatpush1.bf16.msra.mxu0 0
      %3125 = vmatprep.subr.bf16.mxu0 0
      %3126 = vmatpush1.bf16.msra.mxu0 0
      %3127 = vmatprep.subr.bf16.mxu0 0
      %3128 = vmatpush1.bf16.msra.mxu0 0
      %3129 = vmatprep.subr.bf16.mxu0 0
      %3130 = vmatpush1.bf16.msra.mxu0 0
      %3131 = vmatprep.subr.bf16.mxu0 0
      %3132 = vmatpush1.bf16.msra.mxu0 0
      %3133 = vmatprep.subr.bf16.mxu0 0
      %3134 = vmatpush1.bf16.msra.mxu0 0
      %3135 = vmatprep.mubr.bf16.mxu0 0
      %3136 = vmatmul.mubr.bf16.gmra.mrb[0].mxu0 %v3034
      %v3137 = vpop.f32.mrb[0].mxu0
      %v3138 = vadd.f32 0.0, %v3137
      %v3139 = vpop.f32.mrb[0].mxu0
      %v3140 = vpop.f32.mrb[0].mxu0
      %v3141 = vadd.f32 0.0, %v3140
      %v3142 = vpop.f32.mrb[0].mxu0
      %3143 = vmatprep.mubr.bf16.mxu0 0
      %3144 = vmatmul.mubr.bf16.gmra.mrb[0].mxu0 %v3035
      %v3145 = vpop.f32.mrb[0].mxu0
      %v3146 = vadd.f32 0.0, %v3145
      %v3147 = vpop.f32.mrb[0].mxu0
      %v3148 = vpop.f32.mrb[0].mxu0
      %v3149 = vadd.f32 0.0, %v3148
      %v3150 = vpop.f32.mrb[0].mxu0
      %3151 = vmatprep.mubr.bf16.mxu0 0
      %3152 = vmatmul.mubr.bf16.gmra.mrb[0].mxu0 %v3036
      %v3153 = vpop.f32.mrb[0].mxu0
      %v3154 = vadd.f32 0.0, %v3153
      %v3155 = vpop.f32.mrb[0].mxu0
      %v3156 = vpop.f32.mrb[0].mxu0
      %v3157 = vadd.f32 0.0, %v3156
      %v3158 = vpop.f32.mrb[0].mxu0
      %3159 = vmatprep.mubr.bf16.mxu0 0
      %3160 = vmatmul.mubr.bf16.gmra.mrb[0].mxu0 %v3037
      %v3161 = vpop.f32.mrb[0].mxu0
      %v3162 = vadd.f32 0.0, %v3161
      %v3163 = vpop.f32.mrb[0].mxu0
      %v3164 = vpop.f32.mrb[0].mxu0
      %v3165 = vadd.f32 0.0, %v3164
      %v3166 = vpop.f32.mrb[0].mxu0
      %3167 = vdwg.mxu0
      %v3168 = vadd.f32 %v3017, %v3138
      %v3169 = vadd.f32 %v3018, %v3141
      %v3170 = vadd.f32 %v3019, %v3146
      %v3171 = vadd.f32 %v3020, %v3149
      %v3172 = vadd.f32 %v3021, %v3154
      %v3173 = vadd.f32 %v3022, %v3157
      %v3174 = vadd.f32 %v3023, %v3162
      %v3175 = vadd.f32 %v3024, %v3165
      %v3176 = vld [vmem:[%s3025 + $0x1] sm:$0xff]
      %v3177 = vld [vmem:[%s3025 + $0x11] sm:$0xff]
      %v3178 = vld [vmem:[%s3025 + $0x21] sm:$0xff]
      %v3179 = vld [vmem:[%s3025 + $0x31] sm:$0xff]
      %v3180 = vld [vmem:[%s3025 + $0x41] sm:$0xff]
      %v3181 = vld [vmem:[%s3025 + $0x51] sm:$0xff]
      %v3182 = vld [vmem:[%s3025 + $0x61] sm:$0xff]
      %v3183 = vld [vmem:[%s3025 + $0x71] sm:$0xff]
      %v3184 = vpack.c.bf16 %v3177, %v3176
      %v3185 = vpack.c.bf16 %v3179, %v3178
      %v3186 = vpack.c.bf16 %v3181, %v3180
      %v3187 = vpack.c.bf16 %v3183, %v3182
      %s3188 = scalar_lea.vmem %s8, 448
      %v3189 = vld [vmem:[%s3188] sm:$0xf]
      %v3190 = vld [vmem:[%s3188 + $0x4] sm:$0xf]
      %v3191 = vld [vmem:[%s3188 + $0x8] sm:$0xf]
      %v3192 = vld [vmem:[%s3188 + $0xc] sm:$0xf]
      %v3193 = vld [vmem:[%s3188 + $0x10] sm:$0xf]
      %v3194 = vld [vmem:[%s3188 + $0x14] sm:$0xf]
      %v3195 = vld [vmem:[%s3188 + $0x18] sm:$0xf]
      %v3196 = vld [vmem:[%s3188 + $0x1c] sm:$0xf]
      %v3197 = vld [vmem:[%s3188 + $0x20] sm:$0xf]
      %v3198 = vld [vmem:[%s3188 + $0x24] sm:$0xf]
      %v3199 = vld [vmem:[%s3188 + $0x28] sm:$0xf]
      %v3200 = vld [vmem:[%s3188 + $0x2c] sm:$0xf]
      %v3201 = vld [vmem:[%s3188 + $0x30] sm:$0xf]
      %v3202 = vld [vmem:[%s3188 + $0x34] sm:$0xf]
      %v3203 = vld [vmem:[%s3188 + $0x38] sm:$0xf]
      %v3204 = vld [vmem:[%s3188 + $0x3c] sm:$0xf]
      %v3221 = vunpack.c.l.b16 %v3189
      %v3222 = vunpack.c.l.b16 %v3190
      %v3223 = vunpack.c.l.b16 %v3191
      %v3224 = vunpack.c.l.b16 %v3192
      %v3225 = vunpack.c.l.b16 %v3193
      %v3226 = vunpack.c.l.b16 %v3194
      %v3227 = vunpack.c.l.b16 %v3195
      %v3228 = vunpack.c.l.b16 %v3196
      %v3229 = vunpack.c.l.b16 %v3197
      %v3230 = vunpack.c.l.b16 %v3198
      %v3231 = vunpack.c.l.b16 %v3199
      %v3232 = vunpack.c.l.b16 %v3200
      %v3233 = vunpack.c.l.b16 %v3201
      %v3234 = vunpack.c.l.b16 %v3202
      %v3235 = vunpack.c.l.b16 %v3203
      %v3236 = vunpack.c.l.b16 %v3204
      %v3237 = vpack.c.b16 %v3222, %v3221
      %v3238 = vpack.c.b16 %v3224, %v3223
      %v3239 = vpack.c.b16 %v3226, %v3225
      %v3240 = vpack.c.b16 %v3228, %v3227
      %v3241 = vpack.c.b16 %v3230, %v3229
      %v3242 = vpack.c.b16 %v3232, %v3231
      %v3243 = vpack.c.b16 %v3234, %v3233
      %v3244 = vpack.c.b16 %v3236, %v3235
      %3253 = vmatprep.subr.bf16.mxu0 0
      %3254 = vmatpush1.bf16.msra.mxu0 %v3237
      %3255 = vmatprep.subr.bf16.mxu0 0
      %3256 = vmatpush1.bf16.msra.mxu0 %v3238
      %3257 = vmatprep.subr.bf16.mxu0 0
      %3258 = vmatpush1.bf16.msra.mxu0 %v3239
      %3259 = vmatprep.subr.bf16.mxu0 0
      %3260 = vmatpush1.bf16.msra.mxu0 %v3240
      %3261 = vmatprep.subr.bf16.mxu0 0
      %3262 = vmatpush1.bf16.msra.mxu0 %v3241
      %3263 = vmatprep.subr.bf16.mxu0 0
      %3264 = vmatpush1.bf16.msra.mxu0 %v3242
      %3265 = vmatprep.subr.bf16.mxu0 0
      %3266 = vmatpush1.bf16.msra.mxu0 %v3243
      %3267 = vmatprep.subr.bf16.mxu0 0
      %3268 = vmatpush1.bf16.msra.mxu0 %v3244
      %3269 = vmatprep.subr.bf16.mxu0 0
      %3270 = vmatpush1.bf16.msra.mxu0 0
      %3271 = vmatprep.subr.bf16.mxu0 0
      %3272 = vmatpush1.bf16.msra.mxu0 0
      %3273 = vmatprep.subr.bf16.mxu0 0
      %3274 = vmatpush1.bf16.msra.mxu0 0
      %3275 = vmatprep.subr.bf16.mxu0 0
      %3276 = vmatpush1.bf16.msra.mxu0 0
      %3277 = vmatprep.subr.bf16.mxu0 0
      %3278 = vmatpush1.bf16.msra.mxu0 0
      %3279 = vmatprep.subr.bf16.mxu0 0
      %3280 = vmatpush1.bf16.msra.mxu0 0
      %3281 = vmatprep.subr.bf16.mxu0 0
      %3282 = vmatpush1.bf16.msra.mxu0 0
      %3283 = vmatprep.subr.bf16.mxu0 0
      %3284 = vmatpush1.bf16.msra.mxu0 0
      %3285 = vmatprep.mubr.bf16.mxu0 0
      %3286 = vmatmul.mubr.bf16.gmra.mrb[0].mxu0 %v3184
      %v3287 = vpop.f32.mrb[0].mxu0
      %v3288 = vadd.f32 0.0, %v3287
      %v3289 = vpop.f32.mrb[0].mxu0
      %v3290 = vpop.f32.mrb[0].mxu0
      %v3291 = vadd.f32 0.0, %v3290
      %v3292 = vpop.f32.mrb[0].mxu0
      %3293 = vmatprep.mubr.bf16.mxu0 0
      %3294 = vmatmul.mubr.bf16.gmra.mrb[0].mxu0 %v3185
      %v3295 = vpop.f32.mrb[0].mxu0
      %v3296 = vadd.f32 0.0, %v3295
      %v3297 = vpop.f32.mrb[0].mxu0
      %v3298 = vpop.f32.mrb[0].mxu0
      %v3299 = vadd.f32 0.0, %v3298
      %v3300 = vpop.f32.mrb[0].mxu0
      %3301 = vmatprep.mubr.bf16.mxu0 0
      %3302 = vmatmul.mubr.bf16.gmra.mrb[0].mxu0 %v3186
      %v3303 = vpop.f32.mrb[0].mxu0
      %v3304 = vadd.f32 0.0, %v3303
      %v3305 = vpop.f32.mrb[0].mxu0
      %v3306 = vpop.f32.mrb[0].mxu0
      %v3307 = vadd.f32 0.0, %v3306
      %v3308 = vpop.f32.mrb[0].mxu0
      %3309 = vmatprep.mubr.bf16.mxu0 0
      %3310 = vmatmul.mubr.bf16.gmra.mrb[0].mxu0 %v3187
      %v3311 = vpop.f32.mrb[0].mxu0
      %v3312 = vadd.f32 0.0, %v3311
      %v3313 = vpop.f32.mrb[0].mxu0
      %v3314 = vpop.f32.mrb[0].mxu0
      %v3315 = vadd.f32 0.0, %v3314
      %v3316 = vpop.f32.mrb[0].mxu0
      %3317 = vdwg.mxu0
      %v3318 = vadd.f32 %v3168, %v3288
      %v3319 = vadd.f32 %v3169, %v3291
      %v3320 = vadd.f32 %v3170, %v3296
      %v3321 = vadd.f32 %v3171, %v3299
      %v3322 = vadd.f32 %v3172, %v3304
      %v3323 = vadd.f32 %v3173, %v3307
      %v3324 = vadd.f32 %v3174, %v3312
      %v3325 = vadd.f32 %v3175, %v3315
      %v3326 = vld [vmem:[%s3025 + $0x2] sm:$0xff]
      %v3327 = vld [vmem:[%s3025 + $0x12] sm:$0xff]
      %v3328 = vld [vmem:[%s3025 + $0x22] sm:$0xff]
      %v3329 = vld [vmem:[%s3025 + $0x32] sm:$0xff]
      %v3330 = vld [vmem:[%s3025 + $0x42] sm:$0xff]
      %v3331 = vld [vmem:[%s3025 + $0x52] sm:$0xff]
      %v3332 = vld [vmem:[%s3025 + $0x62] sm:$0xff]
      %v3333 = vld [vmem:[%s3025 + $0x72] sm:$0xff]
      %v3334 = vpack.c.bf16 %v3327, %v3326
      %v3335 = vpack.c.bf16 %v3329, %v3328
      %v3336 = vpack.c.bf16 %v3331, %v3330
      %v3337 = vpack.c.bf16 %v3333, %v3332
      %s3338 = scalar_lea.vmem %s8, 512
      %v3339 = vld [vmem:[%s3338] sm:$0xf]
      %v3340 = vld [vmem:[%s3338 + $0x4] sm:$0xf]
      %v3341 = vld [vmem:[%s3338 + $0x8] sm:$0xf]
      %v3342 = vld [vmem:[%s3338 + $0xc] sm:$0xf]
      %v3343 = vld [vmem:[%s3338 + $0x10] sm:$0xf]
      %v3344 = vld [vmem:[%s3338 + $0x14] sm:$0xf]
      %v3345 = vld [vmem:[%s3338 + $0x18] sm:$0xf]
      %v3346 = vld [vmem:[%s3338 + $0x1c] sm:$0xf]
      %v3347 = vld [vmem:[%s3338 + $0x20] sm:$0xf]
      %v3348 = vld [vmem:[%s3338 + $0x24] sm:$0xf]
      %v3349 = vld [vmem:[%s3338 + $0x28] sm:$0xf]
      %v3350 = vld [vmem:[%s3338 + $0x2c] sm:$0xf]
      %v3351 = vld [vmem:[%s3338 + $0x30] sm:$0xf]
      %v3352 = vld [vmem:[%s3338 + $0x34] sm:$0xf]
      %v3353 = vld [vmem:[%s3338 + $0x38] sm:$0xf]
      %v3354 = vld [vmem:[%s3338 + $0x3c] sm:$0xf]
      %v3371 = vunpack.c.l.b16 %v3339
      %v3372 = vunpack.c.l.b16 %v3340
      %v3373 = vunpack.c.l.b16 %v3341
      %v3374 = vunpack.c.l.b16 %v3342
      %v3375 = vunpack.c.l.b16 %v3343
      %v3376 = vunpack.c.l.b16 %v3344
      %v3377 = vunpack.c.l.b16 %v3345
      %v3378 = vunpack.c.l.b16 %v3346
      %v3379 = vunpack.c.l.b16 %v3347
      %v3380 = vunpack.c.l.b16 %v3348
      %v3381 = vunpack.c.l.b16 %v3349
      %v3382 = vunpack.c.l.b16 %v3350
      %v3383 = vunpack.c.l.b16 %v3351
      %v3384 = vunpack.c.l.b16 %v3352
      %v3385 = vunpack.c.l.b16 %v3353
      %v3386 = vunpack.c.l.b16 %v3354
      %v3387 = vpack.c.b16 %v3372, %v3371
      %v3388 = vpack.c.b16 %v3374, %v3373
      %v3389 = vpack.c.b16 %v3376, %v3375
      %v3390 = vpack.c.b16 %v3378, %v3377
      %v3391 = vpack.c.b16 %v3380, %v3379
      %v3392 = vpack.c.b16 %v3382, %v3381
      %v3393 = vpack.c.b16 %v3384, %v3383
      %v3394 = vpack.c.b16 %v3386, %v3385
      %3403 = vmatprep.subr.bf16.mxu0 0
      %3404 = vmatpush1.bf16.msra.mxu0 %v3387
      %3405 = vmatprep.subr.bf16.mxu0 0
      %3406 = vmatpush1.bf16.msra.mxu0 %v3388
      %3407 = vmatprep.subr.bf16.mxu0 0
      %3408 = vmatpush1.bf16.msra.mxu0 %v3389
      %3409 = vmatprep.subr.bf16.mxu0 0
      %3410 = vmatpush1.bf16.msra.mxu0 %v3390
      %3411 = vmatprep.subr.bf16.mxu0 0
      %3412 = vmatpush1.bf16.msra.mxu0 %v3391
      %3413 = vmatprep.subr.bf16.mxu0 0
      %3414 = vmatpush1.bf16.msra.mxu0 %v3392
      %3415 = vmatprep.subr.bf16.mxu0 0
      %3416 = vmatpush1.bf16.msra.mxu0 %v3393
      %3417 = vmatprep.subr.bf16.mxu0 0
      %3418 = vmatpush1.bf16.msra.mxu0 %v3394
      %3419 = vmatprep.subr.bf16.mxu0 0
      %3420 = vmatpush1.bf16.msra.mxu0 0
      %3421 = vmatprep.subr.bf16.mxu0 0
      %3422 = vmatpush1.bf16.msra.mxu0 0
      %3423 = vmatprep.subr.bf16.mxu0 0
      %3424 = vmatpush1.bf16.msra.mxu0 0
      %3425 = vmatprep.subr.bf16.mxu0 0
      %3426 = vmatpush1.bf16.msra.mxu0 0
      %3427 = vmatprep.subr.bf16.mxu0 0
      %3428 = vmatpush1.bf16.msra.mxu0 0
      %3429 = vmatprep.subr.bf16.mxu0 0
      %3430 = vmatpush1.bf16.msra.mxu0 0
      %3431 = vmatprep.subr.bf16.mxu0 0
      %3432 = vmatpush1.bf16.msra.mxu0 0
      %3433 = vmatprep.subr.bf16.mxu0 0
      %3434 = vmatpush1.bf16.msra.mxu0 0
      %3435 = vmatprep.mubr.bf16.mxu0 0
      %3436 = vmatmul.mubr.bf16.gmra.mrb[0].mxu0 %v3334
      %v3437 = vpop.f32.mrb[0].mxu0
      %v3438 = vadd.f32 0.0, %v3437
      %v3439 = vpop.f32.mrb[0].mxu0
      %v3440 = vpop.f32.mrb[0].mxu0
      %v3441 = vadd.f32 0.0, %v3440
      %v3442 = vpop.f32.mrb[0].mxu0
      %3443 = vmatprep.mubr.bf16.mxu0 0
      %3444 = vmatmul.mubr.bf16.gmra.mrb[0].mxu0 %v3335
      %v3445 = vpop.f32.mrb[0].mxu0
      %v3446 = vadd.f32 0.0, %v3445
      %v3447 = vpop.f32.mrb[0].mxu0
      %v3448 = vpop.f32.mrb[0].mxu0
      %v3449 = vadd.f32 0.0, %v3448
      %v3450 = vpop.f32.mrb[0].mxu0
      %3451 = vmatprep.mubr.bf16.mxu0 0
      %3452 = vmatmul.mubr.bf16.gmra.mrb[0].mxu0 %v3336
      %v3453 = vpop.f32.mrb[0].mxu0
      %v3454 = vadd.f32 0.0, %v3453
      %v3455 = vpop.f32.mrb[0].mxu0
      %v3456 = vpop.f32.mrb[0].mxu0
      %v3457 = vadd.f32 0.0, %v3456
      %v3458 = vpop.f32.mrb[0].mxu0
      %3459 = vmatprep.mubr.bf16.mxu0 0
      %3460 = vmatmul.mubr.bf16.gmra.mrb[0].mxu0 %v3337
      %v3461 = vpop.f32.mrb[0].mxu0
      %v3462 = vadd.f32 0.0, %v3461
      %v3463 = vpop.f32.mrb[0].mxu0
      %v3464 = vpop.f32.mrb[0].mxu0
      %v3465 = vadd.f32 0.0, %v3464
      %v3466 = vpop.f32.mrb[0].mxu0
      %3467 = vdwg.mxu0
      %v3468 = vadd.f32 %v3318, %v3438
      %v3469 = vadd.f32 %v3319, %v3441
      %v3470 = vadd.f32 %v3320, %v3446
      %v3471 = vadd.f32 %v3321, %v3449
      %v3472 = vadd.f32 %v3322, %v3454
      %v3473 = vadd.f32 %v3323, %v3457
      %v3474 = vadd.f32 %v3324, %v3462
      %v3475 = vadd.f32 %v3325, %v3465
      %v3476 = vmax.f32 %v3468, 0.0
      %v3477 = vmax.f32 %v3469, 0.0
      %v3478 = vmax.f32 %v3470, 0.0
      %v3479 = vmax.f32 %v3471, 0.0
      %v3480 = vmax.f32 %v3472, 0.0
      %v3481 = vmax.f32 %v3473, 0.0
      %v3482 = vmax.f32 %v3474, 0.0
      %v3483 = vmax.f32 %v3475, 0.0
      %v3484 = vpack.c.bf16 %v3477, %v3476
      %v3485 = vpack.c.bf16 %v3479, %v3478
      %v3486 = vpack.c.bf16 %v3481, %v3480
      %v3487 = vpack.c.bf16 %v3483, %v3482
      %v3492 = vunpack.c.l.b16 %v3484
      %v3493 = vunpack.c.h.b16 %v3484
      %v3494 = vunpack.c.l.b16 %v3485
      %v3495 = vunpack.c.h.b16 %v3485
      %v3496 = vunpack.c.l.b16 %v3486
      %v3497 = vunpack.c.h.b16 %v3486
      %v3498 = vunpack.c.l.b16 %v3487
      %v3499 = vunpack.c.h.b16 %v3487
      %v3500 = vpack.c.b16 %v3492, %v3492
      %v3501 = vpack.c.b16 %v3493, %v3493
      %v3502 = vpack.c.b16 %v3494, %v3494
      %v3503 = vpack.c.b16 %v3495, %v3495
      %v3504 = vpack.c.b16 %v3496, %v3496
      %v3505 = vpack.c.b16 %v3497, %v3497
      %v3506 = vpack.c.b16 %v3498, %v3498
      %v3507 = vpack.c.b16 %v3499, %v3499
      %3516 = vst [vmem:[%s332] sm:$0xf] %v3500
      %3517 = vst [vmem:[%s332 + $0x4] sm:$0xf] %v3501
      %3518 = vst [vmem:[%s332 + $0x8] sm:$0xf] %v3502
      %3519 = vst [vmem:[%s332 + $0xc] sm:$0xf] %v3503
      %3520 = vst [vmem:[%s332 + $0x10] sm:$0xf] %v3504
      %3521 = vst [vmem:[%s332 + $0x14] sm:$0xf] %v3505
      %3522 = vst [vmem:[%s332 + $0x18] sm:$0xf] %v3506
      %3523 = vst [vmem:[%s332 + $0x1c] sm:$0xf] %v3507
      %p3524 = scmp.lt.s32.totalorder %s20, 1
      %s3525 = scalar_select %p3524, %s20, 1
      %s3526 = smul.addr %s3525, 8
      %s3527 = smul.addr %s3526, 4
      %s3528 = scalar_lea.vmem %s9, %s3527
      // Predicated region
      $region57: #{basic_block2_forward.1} parent=55 // pred_check
        %p3529 = pneg %p232
      $region58: #{basic_block2_forward.1} parent=55 // pred_check_branch
        %3531 = sbr.rel (%p3529) target = $region60
      $region59: #{basic_block2_forward.1} parent=55 // pred_region
        _
      $region60: #{basic_block2_forward.1} parent=55 // pred_fallthru
        _
    $region56: #{basic_block2_forward.1} parent=5 // pred_fallthru
      _
    %p3532 = scmp.le.s32.totalorder 2, %s15
    // Predicated region
    $region61: #{basic_block2_forward.1} parent=5 // pred_check
      %p3533 = pneg %p3532
    $region62: #{basic_block2_forward.1} parent=5 // pred_check_branch
      %3535 = sbr.rel (%p3533) target = $region64
    $region63: #{basic_block2_forward.1} parent=5 // pred_region
      %s3536 = ssub.s32 %s15, 2
      // Predicated region
      $region65: #{basic_block2_forward.1} parent=63 // pred_check
        %p3537 = pneg %p238
      $region66: #{basic_block2_forward.1} parent=63 // pred_check_branch
        %3539 = sbr.rel (%p3537) target = $region68
      $region67: #{basic_block2_forward.1} parent=63 // pred_region
        %p3540 = scmp.lt.s32.totalorder %s21, 1
        %s3541 = scalar_select %p3540, %s21, 1
        %s3542 = smul.addr %s3541, 8
        %s3543 = smul.addr %s3542, 4
        %s3544 = scalar_lea.vmem %s9, %s3543
      $region68: #{basic_block2_forward.1} parent=63 // pred_fallthru
        _
    $region64: #{basic_block2_forward.1} parent=5 // pred_fallthru
      _
  $region6: #{basic_block2_forward.1} parent=0 // loop_footer
    %s19 = sadd.s32 1, %s15
  $region7: #{basic_block2_forward.1} parent=0 // loop_footer_branch
    %14 = sbr.rel target = $region3
  $region8: #{basic_block2_forward.1} parent=0 // loop_exit
    _

</llo_original>
